<compile_context>
chip_gen: v7x
topology: tpu7x:2x2x1
jax: 0.10.0
libtpu: 0.0.40
codegen_flags: <defaults>
</compile_context>

<pallas_src>
import functools

import jax
import jax.numpy as jnp
from jax import lax
from jax.experimental import pallas as pl
from jax.experimental.pallas import tpu as pltpu  # noqa: F401  (TPU backend assumed)

# --------------------------- config (small, lane-dense) ----------------------
B = 2                 # batch
S = 8                 # seq len
M = B * S             # rows of the [rows, features] activation slab
H = 128               # hidden size (lane-dense)
NH = 2                # attention heads
DH = H // NH          # head dim
FF = 256              # feed-forward dim (lane-dense)
V = 128               # vocab size (lane-dense)
NUM_LABELS_DC = 22    # real number of classes for DC/TC (from the module spec)
C_PAD = 128           # lane-padded class dim for DC/TC heads
N_LAYERS = 2
LN_EPS = 1e-12
IGNORE_INDEX = -100   # torch.nn.CrossEntropyLoss default
NEG_INF = -1e30


# --------------------------- in-kernel helpers (traced) -----------------------
def _linear(x_f32, w_bf16, b_f32):
    """y = x @ W^T + b (torch.nn.Linear): bf16 MXU inputs, f32 accumulate."""
    y = lax.dot_general(
        x_f32.astype(jnp.bfloat16), w_bf16,
        dimension_numbers=(((1,), (1,)), ((), ())),
        preferred_element_type=jnp.float32)
    return y + b_f32


def _layernorm(x, g, b):
    mu = jnp.mean(x, axis=-1, keepdims=True)
    xc = x - mu
    var = jnp.mean(xc * xc, axis=-1, keepdims=True)
    return xc * lax.rsqrt(var + LN_EPS) * g + b


def _softmax_lastdim(s):
    s = s - jnp.max(s, axis=-1, keepdims=True)
    e = jnp.exp(s)
    return e * pl.reciprocal(jnp.sum(e, axis=-1, keepdims=True), approx=True)


def _attention(x, qkv_w, qkv_b, o_w, o_b, mask_add):
    """Multi-head self-attention on the [M, H] slab, all in VMEM/vregs."""
    qkv = _linear(x, qkv_w, qkv_b)             # [M, 3H] f32
    qkv3 = qkv.reshape(B, S, 3 * H)            # sublane split only (tile-aligned)
    q = qkv3[:, :, 0:H]
    k = qkv3[:, :, H:2 * H]
    v = qkv3[:, :, 2 * H:3 * H]
    scale = 1.0 / float(DH) ** 0.5
    m3 = mask_add.reshape(B, 1, S)             # [B, 1, S] additive mask

    head_ctx = []
    for h in range(NH):                        # static unroll over heads only
        c0 = h * DH
        qh = q[:, :, c0:c0 + DH].astype(jnp.bfloat16)
        kh = k[:, :, c0:c0 + DH].astype(jnp.bfloat16)
        vh = v[:, :, c0:c0 + DH].astype(jnp.bfloat16)
        s = jnp.einsum('bqd,bkd->bqk', qh, kh,
                       preferred_element_type=jnp.float32)             # [B, S, S]
        s = s * scale + m3
        p = _softmax_lastdim(s)
        ctx = jnp.einsum('bqk,bkd->bqd', p.astype(jnp.bfloat16), vh,
                         preferred_element_type=jnp.float32)           # [B, S, DH]
        head_ctx.append(ctx)
    ctx = jnp.concatenate(head_ctx, axis=-1).reshape(M, H)             # [M, H]
    return _linear(ctx, o_w, o_b)


def _cross_entropy(logits, labels_i32, n_classes):
    """CrossEntropyLoss(reduction='mean', ignore_index=-100); labels [M,1] int32."""
    m, c = logits.shape
    class_ids = lax.broadcasted_iota(jnp.int32, (m, c), 1)
    if n_classes < c:                                   # mask lane padding classes
        logits = jnp.where(class_ids < n_classes, logits, NEG_INF)
    mx = jnp.max(logits, axis=-1, keepdims=True)
    lse = mx + jnp.log(jnp.sum(jnp.exp(logits - mx), axis=-1, keepdims=True))
    onehot = (class_ids == labels_i32).astype(jnp.float32)
    tgt = jnp.sum(onehot * logits, axis=-1, keepdims=True)
    valid = (labels_i32 != IGNORE_INDEX).astype(jnp.float32)
    per = (lse - tgt) * valid
    num = jnp.sum(per, keepdims=True)                   # [1, 1]
    den = jnp.maximum(jnp.sum(valid, keepdims=True), 1.0)
    return num / den


def _bce_with_logits_cls(logits_full, labels_f32):
    """BCEWithLogitsLoss over column 0 of the CLS rows (rows b*S), mean over B."""
    m, c = logits_full.shape
    row_ids = lax.broadcasted_iota(jnp.int32, (m, c), 0)
    col_ids = lax.broadcasted_iota(jnp.int32, (m, c), 1)
    w = jnp.logical_and(row_ids % S == 0, col_ids == 0).astype(jnp.float32)
    x = logits_full
    y = labels_f32                                      # [m, 1] broadcast
    per = jnp.maximum(x, 0.0) - x * y + jnp.log1p(jnp.exp(-jnp.abs(x)))
    return jnp.sum(per * w, keepdims=True) / jnp.sum(w, keepdims=True)


# ------------------------------ fused kernel ----------------------------------
def _fused_task_kernel(x0_ref, mask_ref, emb_g_ref, emb_b_ref,
                       qkv_w_ref, qkv_b_ref, ow_ref, ob_ref,
                       ln1_g_ref, ln1_b_ref,
                       ff1_w_ref, ff1_b_ref, ff2_w_ref, ff2_b_ref,
                       ln2_g_ref, ln2_b_ref,
                       *rest, task):
    loss_ref = rest[-1]

    # --- encoder (embeddings LN + N post-LN transformer layers) ---
    x = _layernorm(x0_ref[...], emb_g_ref[...], emb_b_ref[...])   # [M, H] f32
    mask_add = mask_ref[...]                                      # [B, S] f32

    for l in range(N_LAYERS):                                     # static unroll
        attn = _attention(x, qkv_w_ref[l], qkv_b_ref[l],
                          ow_ref[l], ob_ref[l], mask_add)
        x = _layernorm(x + attn, ln1_g_ref[l], ln1_b_ref[l])
        ff = jax.nn.gelu(_linear(x, ff1_w_ref[l], ff1_b_ref[l]), approximate=True)
        ff = _linear(ff, ff2_w_ref[l], ff2_b_ref[l])
        x = _layernorm(x + ff, ln2_g_ref[l], ln2_b_ref[l])

    # --- task head + loss (fused; no logits written to HBM) ---
    if task == 0:     # masked language modeling
        (dw, db, lg, lb, decw, decb, lab_ref, _o) = rest
        h = jax.nn.gelu(_linear(x, dw[...], db[...]), approximate=True)
        h = _layernorm(h, lg[...], lb[...])
        logits = _linear(h, decw[...], decb[...])                 # [M, V]
        loss = _cross_entropy(logits, lab_ref[...], V)
    elif task == 1:   # next sentence prediction (BCE on CLS logit)
        (w, bb, lab_ref, _o) = rest
        logits = _linear(x, w[...], bb[...])                      # [M, C_PAD]
        loss = _bce_with_logits_cls(logits, lab_ref[...])
    else:             # 2: document classification (CLS rows), 3: token classification
        (w, bb, lab_ref, _o) = rest
        logits = _linear(x, w[...], bb[...])                      # [M, C_PAD]
        loss = _cross_entropy(logits, lab_ref[...], NUM_LABELS_DC)

    loss_ref[...] = loss                                          # [1, 1]


# ------------------------------ parameters ------------------------------------
def init_params(key):
    def nrm(k, shape, scale=0.02, dtype=jnp.float32):
        return (scale * jax.random.normal(k, shape, dtype=jnp.float32)).astype(dtype)

    ks = iter(jax.random.split(key, 64))
    bf = jnp.bfloat16
    f32 = jnp.float32
    L = N_LAYERS
    return {
        # embeddings
        "word_emb": nrm(next(ks), (V, H)),
        "pos_emb": nrm(next(ks), (S, H)),
        "emb_ln_g": jnp.ones((1, H), f32),
        "emb_ln_b": jnp.zeros((1, H), f32),
        # encoder layer stacks (layer-major); matmul weights in bf16
        "qkv_w": nrm(next(ks), (L, 3 * H, H), dtype=bf),
        "qkv_b": jnp.zeros((L, 1, 3 * H), f32),
        "attn_o_w": nrm(next(ks), (L, H, H), dtype=bf),
        "attn_o_b": jnp.zeros((L, 1, H), f32),
        "ln1_g": jnp.ones((L, 1, H), f32),
        "ln1_b": jnp.zeros((L, 1, H), f32),
        "ff1_w": nrm(next(ks), (L, FF, H), dtype=bf),
        "ff1_b": jnp.zeros((L, 1, FF), f32),
        "ff2_w": nrm(next(ks), (L, H, FF), dtype=bf),
        "ff2_b": jnp.zeros((L, 1, H), f32),
        "ln2_g": jnp.ones((L, 1, H), f32),
        "ln2_b": jnp.zeros((L, 1, H), f32),
        # MLM head: dense -> gelu -> LN -> decoder(vocab)
        "lm_dense_w": nrm(next(ks), (H, H), dtype=bf),
        "lm_dense_b": jnp.zeros((1, H), f32),
        "lm_ln_g": jnp.ones((1, H), f32),
        "lm_ln_b": jnp.zeros((1, H), f32),
        "lm_dec_w": nrm(next(ks), (V, H), dtype=bf),
        "lm_dec_b": jnp.zeros((1, V), f32),
        # NSP / DC / TC heads, lane-padded to C_PAD output columns
        "nsp_w": nrm(next(ks), (C_PAD, H), dtype=bf),   # only row 0 is the real unit
        "nsp_b": jnp.zeros((1, C_PAD), f32),
        "dc_w": nrm(next(ks), (C_PAD, H), dtype=bf),    # rows >= 22 masked in CE
        "dc_b": jnp.zeros((1, C_PAD), f32),
        "tc_w": nrm(next(ks), (C_PAD, H), dtype=bf),
        "tc_b": jnp.zeros((1, C_PAD), f32),
    }


# ------------------------------ jitted task bodies -----------------------------
_ENC_KEYS = ("qkv_w", "qkv_b", "attn_o_w", "attn_o_b", "ln1_g", "ln1_b",
             "ff1_w", "ff1_b", "ff2_w", "ff2_b", "ln2_g", "ln2_b")

_HEAD_KEYS = {
    0: ("lm_dense_w", "lm_dense_b", "lm_ln_g", "lm_ln_b", "lm_dec_w", "lm_dec_b"),
    1: ("nsp_w", "nsp_b"),
    2: ("dc_w", "dc_b"),
    3: ("tc_w", "tc_b"),
}


@functools.partial(jax.jit, static_argnames=("task",))
def task_loss(params, input_ids, attention_mask, labels, *, task):
    # Embedding gather + positional add (glue, fused by XLA into the jit).
    x0 = jnp.take(params["word_emb"], input_ids, axis=0) + params["pos_emb"][None, :, :]
    x0 = x0.reshape(M, H).astype(jnp.float32)
    # Additive attention mask: 0 for attended positions, -1e9 for masked ones.
    mask_add = (attention_mask.astype(jnp.float32) - 1.0) * 1e9          # [B, S]

    if task == 0:        # MLM: per-token labels (with ignore_index)
        lab = labels.reshape(M, 1).astype(jnp.int32)
    elif task == 1:      # NSP: float label at CLS rows, 0 elsewhere (weighted in-kernel)
        lab = jnp.zeros((M, 1), jnp.float32).at[::S, 0].set(labels.astype(jnp.float32))
    elif task == 2:      # DC: class label at CLS rows, ignore_index elsewhere
        lab = jnp.full((M, 1), IGNORE_INDEX, jnp.int32).at[::S, 0].set(
            labels.astype(jnp.int32))
    else:                # TC: per-token labels
        lab = labels.reshape(M, 1).astype(jnp.int32)

    args = ([x0, mask_add, params["emb_ln_g"], params["emb_ln_b"]]
            + [params[k] for k in _ENC_KEYS]
            + [params[k] for k in _HEAD_KEYS[task]]
            + [lab])

    out = pl.pallas_call(
        functools.partial(_fused_task_kernel, task=task),
        out_shape=jax.ShapeDtypeStruct((1, 1), jnp.float32),
    )(*args)
    return out[0, 0]


def model_forward(params, batch):
    """Mirrors ModelForPretraining.forward: Python dispatch on task_index[0].item()."""
    task_index = int(batch["task_index"][0])     # host sync, outside jit (as in torch)
    if task_index not in (0, 1, 2, 3):
        raise ValueError("Invalid task index.")
    return task_loss(params, batch["input_ids"], batch["attention_mask"],
                     batch["labels"], task=task_index)


# ---------------------------------- main ---------------------------------------
if __name__ == "__main__":
    key = jax.random.PRNGKey(0)
    k_params, k_ids, k_mlm, k_nsp, k_dc, k_tc = jax.random.split(key, 6)

    params = init_params(k_params)

    input_ids = jax.random.randint(k_ids, (B, S), 0, V, dtype=jnp.int32)
    attention_mask = jnp.ones((B, S), dtype=jnp.int32)

    # labels per task
    mlm_labels = jax.random.randint(k_mlm, (B, S), 0, V, dtype=jnp.int32)
    mlm_labels = mlm_labels.at[:, ::2].set(IGNORE_INDEX)    # some ignored positions
    nsp_labels = jax.random.randint(k_nsp, (B,), 0, 2).astype(jnp.float32)
    dc_labels = jax.random.randint(k_dc, (B,), 0, NUM_LABELS_DC, dtype=jnp.int32)
    tc_labels = jax.random.randint(k_tc, (B, S), 0, NUM_LABELS_DC, dtype=jnp.int32)
    task_labels = [mlm_labels, nsp_labels, dc_labels, tc_labels]

    for task_index in range(4):
        batch = {
            "task_index": jnp.array([task_index], dtype=jnp.int32),
            "input_ids": input_ids,
            "attention_mask": attention_mask,
            "labels": task_labels[task_index],
        }
        loss = jax.block_until_ready(model_forward(params, batch))
        assert jnp.isfinite(loss), f"non-finite loss for task {task_index}"

    print("KERNEL_OK")
</pallas_src>

<mosaic_0001>
module attributes {stable_mosaic.version = 11 : i64} {
  func.func @_fused_task_kernel(%arg0: memref<16x128xf32, #tpu.memory_space<vmem>>, %arg1: memref<2x8xf32, #tpu.memory_space<vmem>>, %arg2: memref<1x128xf32, #tpu.memory_space<vmem>>, %arg3: memref<1x128xf32, #tpu.memory_space<vmem>>, %arg4: memref<2x384x128xbf16, #tpu.memory_space<vmem>>, %arg5: memref<2x1x384xf32, #tpu.memory_space<vmem>>, %arg6: memref<2x128x128xbf16, #tpu.memory_space<vmem>>, %arg7: memref<2x1x128xf32, #tpu.memory_space<vmem>>, %arg8: memref<2x1x128xf32, #tpu.memory_space<vmem>>, %arg9: memref<2x1x128xf32, #tpu.memory_space<vmem>>, %arg10: memref<2x256x128xbf16, #tpu.memory_space<vmem>>, %arg11: memref<2x1x256xf32, #tpu.memory_space<vmem>>, %arg12: memref<2x128x256xbf16, #tpu.memory_space<vmem>>, %arg13: memref<2x1x128xf32, #tpu.memory_space<vmem>>, %arg14: memref<2x1x128xf32, #tpu.memory_space<vmem>>, %arg15: memref<2x1x128xf32, #tpu.memory_space<vmem>>, %arg16: memref<128x128xbf16, #tpu.memory_space<vmem>>, %arg17: memref<1x128xf32, #tpu.memory_space<vmem>>, %arg18: memref<1x128xf32, #tpu.memory_space<vmem>>, %arg19: memref<1x128xf32, #tpu.memory_space<vmem>>, %arg20: memref<128x128xbf16, #tpu.memory_space<vmem>>, %arg21: memref<1x128xf32, #tpu.memory_space<vmem>>, %arg22: memref<16x1xi32, #tpu.memory_space<vmem>>, %arg23: memref<1x1xf32, #tpu.memory_space<vmem>>) attributes {dimension_semantics = [], scalar_prefetch = 0 : i64, scratch_operands = 0 : i64, tpu.core_type = #tpu.core_type<tc>} {
    %c0 = arith.constant 0 : index
    %c0_0 = arith.constant 0 : index
    %0 = vector.load %arg0[%c0, %c0_0] : memref<16x128xf32, #tpu.memory_space<vmem>>, vector<16x128xf32>
    %c0_1 = arith.constant 0 : index
    %c0_2 = arith.constant 0 : index
    %1 = vector.load %arg2[%c0_1, %c0_2] : memref<1x128xf32, #tpu.memory_space<vmem>>, vector<1x128xf32>
    %c0_3 = arith.constant 0 : index
    %c0_4 = arith.constant 0 : index
    %2 = vector.load %arg3[%c0_3, %c0_4] : memref<1x128xf32, #tpu.memory_space<vmem>>, vector<1x128xf32>
    %cst = arith.constant dense<0.000000e+00> : vector<16xf32>
    %3 = vector.multi_reduction <add>, %0, %cst [1] : vector<16x128xf32> to vector<16xf32>
    %4 = vector.shape_cast %3 : vector<16xf32> to vector<16x1xf32>
    %cst_5 = arith.constant 1.280000e+02 : f32
    %5 = vector.broadcast %cst_5 : f32 to vector<16x1xf32>
    %6 = arith.divf %4, %5 : vector<16x1xf32>
    %7 = vector.broadcast %6 : vector<16x1xf32> to vector<16x128xf32>
    %8 = arith.subf %0, %7 : vector<16x128xf32>
    %9 = arith.mulf %8, %8 : vector<16x128xf32>
    %cst_6 = arith.constant dense<0.000000e+00> : vector<16xf32>
    %10 = vector.multi_reduction <add>, %9, %cst_6 [1] : vector<16x128xf32> to vector<16xf32>
    %11 = vector.shape_cast %10 : vector<16xf32> to vector<16x1xf32>
    %cst_7 = arith.constant 1.280000e+02 : f32
    %12 = vector.broadcast %cst_7 : f32 to vector<16x1xf32>
    %13 = arith.divf %11, %12 : vector<16x1xf32>
    %cst_8 = arith.constant 9.99999996E-13 : f32
    %14 = vector.broadcast %cst_8 : f32 to vector<16x1xf32>
    %15 = arith.addf %13, %14 : vector<16x1xf32>
    %16 = math.rsqrt %15 : vector<16x1xf32>
    %17 = vector.broadcast %16 : vector<16x1xf32> to vector<16x128xf32>
    %18 = arith.mulf %8, %17 : vector<16x128xf32>
    %19 = vector.broadcast %1 : vector<1x128xf32> to vector<16x128xf32>
    %20 = arith.mulf %18, %19 : vector<16x128xf32>
    %21 = vector.broadcast %2 : vector<1x128xf32> to vector<16x128xf32>
    %22 = arith.addf %20, %21 : vector<16x128xf32>
    %c0_9 = arith.constant 0 : index
    %c0_10 = arith.constant 0 : index
    %23 = vector.load %arg1[%c0_9, %c0_10] : memref<2x8xf32, #tpu.memory_space<vmem>>, vector<2x8xf32>
    %c0_11 = arith.constant 0 : index
    %c0_12 = arith.constant 0 : index
    %c0_13 = arith.constant 0 : index
    %24 = vector.load %arg4[%c0_11, %c0_12, %c0_13] : memref<2x384x128xbf16, #tpu.memory_space<vmem>>, vector<1x384x128xbf16>
    %25 = vector.shape_cast %24 : vector<1x384x128xbf16> to vector<384x128xbf16>
    %c0_14 = arith.constant 0 : index
    %c0_15 = arith.constant 0 : index
    %c0_16 = arith.constant 0 : index
    %26 = vector.load %arg5[%c0_14, %c0_15, %c0_16] : memref<2x1x384xf32, #tpu.memory_space<vmem>>, vector<1x1x384xf32>
    %27 = vector.shape_cast %26 : vector<1x1x384xf32> to vector<1x384xf32>
    %c0_17 = arith.constant 0 : index
    %c0_18 = arith.constant 0 : index
    %c0_19 = arith.constant 0 : index
    %28 = vector.load %arg6[%c0_17, %c0_18, %c0_19] : memref<2x128x128xbf16, #tpu.memory_space<vmem>>, vector<1x128x128xbf16>
    %29 = vector.shape_cast %28 : vector<1x128x128xbf16> to vector<128x128xbf16>
    %c0_20 = arith.constant 0 : index
    %c0_21 = arith.constant 0 : index
    %c0_22 = arith.constant 0 : index
    %30 = vector.load %arg7[%c0_20, %c0_21, %c0_22] : memref<2x1x128xf32, #tpu.memory_space<vmem>>, vector<1x1x128xf32>
    %31 = vector.shape_cast %30 : vector<1x1x128xf32> to vector<1x128xf32>
    %32 = arith.truncf %22 : vector<16x128xf32> to vector<16x128xbf16>
    %cst_23 = arith.constant dense<0.000000e+00> : vector<16x384xf32>
    %33 = tpu.matmul %32, %25, %cst_23 {dimension_numbers = #tpu.dot_dimension_numbers<[1], [1], [0], [0], [0, 0, 1, 0], [], []>} : vector<16x128xbf16>, vector<384x128xbf16>, vector<16x384xf32> -> vector<16x384xf32>
    %34 = vector.broadcast %27 : vector<1x384xf32> to vector<16x384xf32>
    %35 = arith.addf %33, %34 : vector<16x384xf32>
    %36 = vector.shape_cast %35 : vector<16x384xf32> to vector<2x8x384xf32>
    %37 = vector.extract_strided_slice %36 {offsets = [0, 0, 0], sizes = [2, 8, 128], strides = [1, 1, 1]} : vector<2x8x384xf32> to vector<2x8x128xf32>
    %38 = vector.extract_strided_slice %36 {offsets = [0, 0, 128], sizes = [2, 8, 128], strides = [1, 1, 1]} : vector<2x8x384xf32> to vector<2x8x128xf32>
    %39 = vector.extract_strided_slice %36 {offsets = [0, 0, 256], sizes = [2, 8, 128], strides = [1, 1, 1]} : vector<2x8x384xf32> to vector<2x8x128xf32>
    %40 = vector.shape_cast %23 : vector<2x8xf32> to vector<2x1x8xf32>
    %41 = vector.extract_strided_slice %37 {offsets = [0, 0, 0], sizes = [2, 8, 64], strides = [1, 1, 1]} : vector<2x8x128xf32> to vector<2x8x64xf32>
    %42 = arith.truncf %41 : vector<2x8x64xf32> to vector<2x8x64xbf16>
    %43 = vector.extract_strided_slice %38 {offsets = [0, 0, 0], sizes = [2, 8, 64], strides = [1, 1, 1]} : vector<2x8x128xf32> to vector<2x8x64xf32>
    %44 = arith.truncf %43 : vector<2x8x64xf32> to vector<2x8x64xbf16>
    %45 = vector.extract_strided_slice %39 {offsets = [0, 0, 0], sizes = [2, 8, 64], strides = [1, 1, 1]} : vector<2x8x128xf32> to vector<2x8x64xf32>
    %46 = arith.truncf %45 : vector<2x8x64xf32> to vector<2x8x64xbf16>
    "tpu.trace_start"() <{level = 10 : i32, message = "bqd,bkd->bqk"}> : () -> ()
    %cst_24 = arith.constant dense<0.000000e+00> : vector<2x8x8xf32>
    %47 = tpu.matmul %42, %44, %cst_24 {dimension_numbers = #tpu.dot_dimension_numbers<[2], [2], [1], [1], [0, 0, 0, 1, 1, 1], [0], [0]>} : vector<2x8x64xbf16>, vector<2x8x64xbf16>, vector<2x8x8xf32> -> vector<2x8x8xf32>
    "tpu.trace_stop"() : () -> ()
    %cst_25 = arith.constant 1.250000e-01 : f32
    %48 = vector.broadcast %cst_25 : f32 to vector<2x8x8xf32>
    %49 = arith.mulf %47, %48 : vector<2x8x8xf32>
    %50 = vector.broadcast %40 : vector<2x1x8xf32> to vector<2x8x8xf32>
    %51 = arith.addf %49, %50 : vector<2x8x8xf32>
    %cst_26 = arith.constant dense<0xFF800000> : vector<2x8xf32>
    %52 = vector.multi_reduction <maximumf>, %51, %cst_26 [2] : vector<2x8x8xf32> to vector<2x8xf32>
    %53 = vector.shape_cast %52 : vector<2x8xf32> to vector<2x8x1xf32>
    %54 = vector.broadcast %53 : vector<2x8x1xf32> to vector<2x8x8xf32>
    %55 = arith.subf %51, %54 : vector<2x8x8xf32>
    %56 = math.exp %55 : vector<2x8x8xf32>
    %cst_27 = arith.constant dense<0.000000e+00> : vector<2x8xf32>
    %57 = vector.multi_reduction <add>, %56, %cst_27 [2] : vector<2x8x8xf32> to vector<2x8xf32>
    %58 = vector.shape_cast %57 : vector<2x8xf32> to vector<2x8x1xf32>
    %59 = tpu.reciprocal %58 {approx = true} : vector<2x8x1xf32> -> vector<2x8x1xf32>
    %60 = vector.broadcast %59 : vector<2x8x1xf32> to vector<2x8x8xf32>
    %61 = arith.mulf %56, %60 : vector<2x8x8xf32>
    %62 = arith.truncf %61 : vector<2x8x8xf32> to vector<2x8x8xbf16>
    "tpu.trace_start"() <{level = 10 : i32, message = "bqk,bkd->bqd"}> : () -> ()
    %cst_28 = arith.constant dense<0.000000e+00> : vector<2x8x64xf32>
    %63 = tpu.matmul %62, %46, %cst_28 {dimension_numbers = #tpu.dot_dimension_numbers<[2], [1], [1], [2], [0, 0, 0, 1, 1, 2], [0], [0]>} : vector<2x8x8xbf16>, vector<2x8x64xbf16>, vector<2x8x64xf32> -> vector<2x8x64xf32>
    "tpu.trace_stop"() : () -> ()
    %64 = vector.extract_strided_slice %37 {offsets = [0, 0, 64], sizes = [2, 8, 64], strides = [1, 1, 1]} : vector<2x8x128xf32> to vector<2x8x64xf32>
    %65 = arith.truncf %64 : vector<2x8x64xf32> to vector<2x8x64xbf16>
    %66 = vector.extract_strided_slice %38 {offsets = [0, 0, 64], sizes = [2, 8, 64], strides = [1, 1, 1]} : vector<2x8x128xf32> to vector<2x8x64xf32>
    %67 = arith.truncf %66 : vector<2x8x64xf32> to vector<2x8x64xbf16>
    %68 = vector.extract_strided_slice %39 {offsets = [0, 0, 64], sizes = [2, 8, 64], strides = [1, 1, 1]} : vector<2x8x128xf32> to vector<2x8x64xf32>
    %69 = arith.truncf %68 : vector<2x8x64xf32> to vector<2x8x64xbf16>
    "tpu.trace_start"() <{level = 10 : i32, message = "bqd,bkd->bqk"}> : () -> ()
    %cst_29 = arith.constant dense<0.000000e+00> : vector<2x8x8xf32>
    %70 = tpu.matmul %65, %67, %cst_29 {dimension_numbers = #tpu.dot_dimension_numbers<[2], [2], [1], [1], [0, 0, 0, 1, 1, 1], [0], [0]>} : vector<2x8x64xbf16>, vector<2x8x64xbf16>, vector<2x8x8xf32> -> vector<2x8x8xf32>
    "tpu.trace_stop"() : () -> ()
    %cst_30 = arith.constant 1.250000e-01 : f32
    %71 = vector.broadcast %cst_30 : f32 to vector<2x8x8xf32>
    %72 = arith.mulf %70, %71 : vector<2x8x8xf32>
    %73 = vector.broadcast %40 : vector<2x1x8xf32> to vector<2x8x8xf32>
    %74 = arith.addf %72, %73 : vector<2x8x8xf32>
    %cst_31 = arith.constant dense<0xFF800000> : vector<2x8xf32>
    %75 = vector.multi_reduction <maximumf>, %74, %cst_31 [2] : vector<2x8x8xf32> to vector<2x8xf32>
    %76 = vector.shape_cast %75 : vector<2x8xf32> to vector<2x8x1xf32>
    %77 = vector.broadcast %76 : vector<2x8x1xf32> to vector<2x8x8xf32>
    %78 = arith.subf %74, %77 : vector<2x8x8xf32>
    %79 = math.exp %78 : vector<2x8x8xf32>
    %cst_32 = arith.constant dense<0.000000e+00> : vector<2x8xf32>
    %80 = vector.multi_reduction <add>, %79, %cst_32 [2] : vector<2x8x8xf32> to vector<2x8xf32>
    %81 = vector.shape_cast %80 : vector<2x8xf32> to vector<2x8x1xf32>
    %82 = tpu.reciprocal %81 {approx = true} : vector<2x8x1xf32> -> vector<2x8x1xf32>
    %83 = vector.broadcast %82 : vector<2x8x1xf32> to vector<2x8x8xf32>
    %84 = arith.mulf %79, %83 : vector<2x8x8xf32>
    %85 = arith.truncf %84 : vector<2x8x8xf32> to vector<2x8x8xbf16>
    "tpu.trace_start"() <{level = 10 : i32, message = "bqk,bkd->bqd"}> : () -> ()
    %cst_33 = arith.constant dense<0.000000e+00> : vector<2x8x64xf32>
    %86 = tpu.matmul %85, %69, %cst_33 {dimension_numbers = #tpu.dot_dimension_numbers<[2], [1], [1], [2], [0, 0, 0, 1, 1, 2], [0], [0]>} : vector<2x8x8xbf16>, vector<2x8x64xbf16>, vector<2x8x64xf32> -> vector<2x8x64xf32>
    "tpu.trace_stop"() : () -> ()
    %87 = tpu.concatenate %63, %86 in 2 : vector<2x8x64xf32>, vector<2x8x64xf32> -> vector<2x8x128xf32>
    %88 = vector.shape_cast %87 : vector<2x8x128xf32> to vector<16x128xf32>
    %89 = arith.truncf %88 : vector<16x128xf32> to vector<16x128xbf16>
    %cst_34 = arith.constant dense<0.000000e+00> : vector<16x128xf32>
    %90 = tpu.matmul %89, %29, %cst_34 {dimension_numbers = #tpu.dot_dimension_numbers<[1], [1], [0], [0], [0, 0, 1, 0], [], []>} : vector<16x128xbf16>, vector<128x128xbf16>, vector<16x128xf32> -> vector<16x128xf32>
    %91 = vector.broadcast %31 : vector<1x128xf32> to vector<16x128xf32>
    %92 = arith.addf %90, %91 : vector<16x128xf32>
    %93 = arith.addf %22, %92 : vector<16x128xf32>
    %c0_35 = arith.constant 0 : index
    %c0_36 = arith.constant 0 : index
    %c0_37 = arith.constant 0 : index
    %94 = vector.load %arg8[%c0_35, %c0_36, %c0_37] : memref<2x1x128xf32, #tpu.memory_space<vmem>>, vector<1x1x128xf32>
    %95 = vector.shape_cast %94 : vector<1x1x128xf32> to vector<1x128xf32>
    %c0_38 = arith.constant 0 : index
    %c0_39 = arith.constant 0 : index
    %c0_40 = arith.constant 0 : index
    %96 = vector.load %arg9[%c0_38, %c0_39, %c0_40] : memref<2x1x128xf32, #tpu.memory_space<vmem>>, vector<1x1x128xf32>
    %97 = vector.shape_cast %96 : vector<1x1x128xf32> to vector<1x128xf32>
    %cst_41 = arith.constant dense<0.000000e+00> : vector<16xf32>
    %98 = vector.multi_reduction <add>, %93, %cst_41 [1] : vector<16x128xf32> to vector<16xf32>
    %99 = vector.shape_cast %98 : vector<16xf32> to vector<16x1xf32>
    %cst_42 = arith.constant 1.280000e+02 : f32
    %100 = vector.broadcast %cst_42 : f32 to vector<16x1xf32>
    %101 = arith.divf %99, %100 : vector<16x1xf32>
    %102 = vector.broadcast %101 : vector<16x1xf32> to vector<16x128xf32>
    %103 = arith.subf %93, %102 : vector<16x128xf32>
    %104 = arith.mulf %103, %103 : vector<16x128xf32>
    %cst_43 = arith.constant dense<0.000000e+00> : vector<16xf32>
    %105 = vector.multi_reduction <add>, %104, %cst_43 [1] : vector<16x128xf32> to vector<16xf32>
    %106 = vector.shape_cast %105 : vector<16xf32> to vector<16x1xf32>
    %cst_44 = arith.constant 1.280000e+02 : f32
    %107 = vector.broadcast %cst_44 : f32 to vector<16x1xf32>
    %108 = arith.divf %106, %107 : vector<16x1xf32>
    %cst_45 = arith.constant 9.99999996E-13 : f32
    %109 = vector.broadcast %cst_45 : f32 to vector<16x1xf32>
    %110 = arith.addf %108, %109 : vector<16x1xf32>
    %111 = math.rsqrt %110 : vector<16x1xf32>
    %112 = vector.broadcast %111 : vector<16x1xf32> to vector<16x128xf32>
    %113 = arith.mulf %103, %112 : vector<16x128xf32>
    %114 = vector.broadcast %95 : vector<1x128xf32> to vector<16x128xf32>
    %115 = arith.mulf %113, %114 : vector<16x128xf32>
    %116 = vector.broadcast %97 : vector<1x128xf32> to vector<16x128xf32>
    %117 = arith.addf %115, %116 : vector<16x128xf32>
    %c0_46 = arith.constant 0 : index
    %c0_47 = arith.constant 0 : index
    %c0_48 = arith.constant 0 : index
    %118 = vector.load %arg10[%c0_46, %c0_47, %c0_48] : memref<2x256x128xbf16, #tpu.memory_space<vmem>>, vector<1x256x128xbf16>
    %119 = vector.shape_cast %118 : vector<1x256x128xbf16> to vector<256x128xbf16>
    %c0_49 = arith.constant 0 : index
    %c0_50 = arith.constant 0 : index
    %c0_51 = arith.constant 0 : index
    %120 = vector.load %arg11[%c0_49, %c0_50, %c0_51] : memref<2x1x256xf32, #tpu.memory_space<vmem>>, vector<1x1x256xf32>
    %121 = vector.shape_cast %120 : vector<1x1x256xf32> to vector<1x256xf32>
    %122 = arith.truncf %117 : vector<16x128xf32> to vector<16x128xbf16>
    %cst_52 = arith.constant dense<0.000000e+00> : vector<16x256xf32>
    %123 = tpu.matmul %122, %119, %cst_52 {dimension_numbers = #tpu.dot_dimension_numbers<[1], [1], [0], [0], [0, 0, 1, 0], [], []>} : vector<16x128xbf16>, vector<256x128xbf16>, vector<16x256xf32> -> vector<16x256xf32>
    %124 = vector.broadcast %121 : vector<1x256xf32> to vector<16x256xf32>
    %125 = arith.addf %123, %124 : vector<16x256xf32>
    %126 = arith.mulf %125, %125 : vector<16x256xf32>
    %127 = arith.mulf %125, %126 : vector<16x256xf32>
    %cst_53 = arith.constant 4.471500e-02 : f32
    %128 = vector.broadcast %cst_53 : f32 to vector<16x256xf32>
    %129 = arith.mulf %128, %127 : vector<16x256xf32>
    %130 = arith.addf %125, %129 : vector<16x256xf32>
    %cst_54 = arith.constant 0.797884583 : f32
    %131 = vector.broadcast %cst_54 : f32 to vector<16x256xf32>
    %132 = arith.mulf %131, %130 : vector<16x256xf32>
    %133 = math.tanh %132 : vector<16x256xf32>
    %cst_55 = arith.constant 1.000000e+00 : f32
    %134 = vector.broadcast %cst_55 : f32 to vector<16x256xf32>
    %135 = arith.addf %134, %133 : vector<16x256xf32>
    %cst_56 = arith.constant 5.000000e-01 : f32
    %136 = vector.broadcast %cst_56 : f32 to vector<16x256xf32>
    %137 = arith.mulf %136, %135 : vector<16x256xf32>
    %138 = arith.mulf %125, %137 : vector<16x256xf32>
    %c0_57 = arith.constant 0 : index
    %c0_58 = arith.constant 0 : index
    %c0_59 = arith.constant 0 : index
    %139 = vector.load %arg12[%c0_57, %c0_58, %c0_59] : memref<2x128x256xbf16, #tpu.memory_space<vmem>>, vector<1x128x256xbf16>
    %140 = vector.shape_cast %139 : vector<1x128x256xbf16> to vector<128x256xbf16>
    %c0_60 = arith.constant 0 : index
    %c0_61 = arith.constant 0 : index
    %c0_62 = arith.constant 0 : index
    %141 = vector.load %arg13[%c0_60, %c0_61, %c0_62] : memref<2x1x128xf32, #tpu.memory_space<vmem>>, vector<1x1x128xf32>
    %142 = vector.shape_cast %141 : vector<1x1x128xf32> to vector<1x128xf32>
    %143 = arith.truncf %138 : vector<16x256xf32> to vector<16x256xbf16>
    %cst_63 = arith.constant dense<0.000000e+00> : vector<16x128xf32>
    %144 = tpu.matmul %143, %140, %cst_63 {dimension_numbers = #tpu.dot_dimension_numbers<[1], [1], [0], [0], [0, 0, 1, 0], [], []>} : vector<16x256xbf16>, vector<128x256xbf16>, vector<16x128xf32> -> vector<16x128xf32>
    %145 = vector.broadcast %142 : vector<1x128xf32> to vector<16x128xf32>
    %146 = arith.addf %144, %145 : vector<16x128xf32>
    %147 = arith.addf %117, %146 : vector<16x128xf32>
    %c0_64 = arith.constant 0 : index
    %c0_65 = arith.constant 0 : index
    %c0_66 = arith.constant 0 : index
    %148 = vector.load %arg14[%c0_64, %c0_65, %c0_66] : memref<2x1x128xf32, #tpu.memory_space<vmem>>, vector<1x1x128xf32>
    %149 = vector.shape_cast %148 : vector<1x1x128xf32> to vector<1x128xf32>
    %c0_67 = arith.constant 0 : index
    %c0_68 = arith.constant 0 : index
    %c0_69 = arith.constant 0 : index
    %150 = vector.load %arg15[%c0_67, %c0_68, %c0_69] : memref<2x1x128xf32, #tpu.memory_space<vmem>>, vector<1x1x128xf32>
    %151 = vector.shape_cast %150 : vector<1x1x128xf32> to vector<1x128xf32>
    %cst_70 = arith.constant dense<0.000000e+00> : vector<16xf32>
    %152 = vector.multi_reduction <add>, %147, %cst_70 [1] : vector<16x128xf32> to vector<16xf32>
    %153 = vector.shape_cast %152 : vector<16xf32> to vector<16x1xf32>
    %cst_71 = arith.constant 1.280000e+02 : f32
    %154 = vector.broadcast %cst_71 : f32 to vector<16x1xf32>
    %155 = arith.divf %153, %154 : vector<16x1xf32>
    %156 = vector.broadcast %155 : vector<16x1xf32> to vector<16x128xf32>
    %157 = arith.subf %147, %156 : vector<16x128xf32>
    %158 = arith.mulf %157, %157 : vector<16x128xf32>
    %cst_72 = arith.constant dense<0.000000e+00> : vector<16xf32>
    %159 = vector.multi_reduction <add>, %158, %cst_72 [1] : vector<16x128xf32> to vector<16xf32>
    %160 = vector.shape_cast %159 : vector<16xf32> to vector<16x1xf32>
    %cst_73 = arith.constant 1.280000e+02 : f32
    %161 = vector.broadcast %cst_73 : f32 to vector<16x1xf32>
    %162 = arith.divf %160, %161 : vector<16x1xf32>
    %cst_74 = arith.constant 9.99999996E-13 : f32
    %163 = vector.broadcast %cst_74 : f32 to vector<16x1xf32>
    %164 = arith.addf %162, %163 : vector<16x1xf32>
    %165 = math.rsqrt %164 : vector<16x1xf32>
    %166 = vector.broadcast %165 : vector<16x1xf32> to vector<16x128xf32>
    %167 = arith.mulf %157, %166 : vector<16x128xf32>
    %168 = vector.broadcast %149 : vector<1x128xf32> to vector<16x128xf32>
    %169 = arith.mulf %167, %168 : vector<16x128xf32>
    %170 = vector.broadcast %151 : vector<1x128xf32> to vector<16x128xf32>
    %171 = arith.addf %169, %170 : vector<16x128xf32>
    %c1 = arith.constant 1 : index
    %c0_75 = arith.constant 0 : index
    %c0_76 = arith.constant 0 : index
    %172 = vector.load %arg4[%c1, %c0_75, %c0_76] : memref<2x384x128xbf16, #tpu.memory_space<vmem>>, vector<1x384x128xbf16>
    %173 = vector.shape_cast %172 : vector<1x384x128xbf16> to vector<384x128xbf16>
    %c1_77 = arith.constant 1 : index
    %c0_78 = arith.constant 0 : index
    %c0_79 = arith.constant 0 : index
    %174 = vector.load %arg5[%c1_77, %c0_78, %c0_79] : memref<2x1x384xf32, #tpu.memory_space<vmem>>, vector<1x1x384xf32>
    %175 = vector.shape_cast %174 : vector<1x1x384xf32> to vector<1x384xf32>
    %c1_80 = arith.constant 1 : index
    %c0_81 = arith.constant 0 : index
    %c0_82 = arith.constant 0 : index
    %176 = vector.load %arg6[%c1_80, %c0_81, %c0_82] : memref<2x128x128xbf16, #tpu.memory_space<vmem>>, vector<1x128x128xbf16>
    %177 = vector.shape_cast %176 : vector<1x128x128xbf16> to vector<128x128xbf16>
    %c1_83 = arith.constant 1 : index
    %c0_84 = arith.constant 0 : index
    %c0_85 = arith.constant 0 : index
    %178 = vector.load %arg7[%c1_83, %c0_84, %c0_85] : memref<2x1x128xf32, #tpu.memory_space<vmem>>, vector<1x1x128xf32>
    %179 = vector.shape_cast %178 : vector<1x1x128xf32> to vector<1x128xf32>
    %180 = arith.truncf %171 : vector<16x128xf32> to vector<16x128xbf16>
    %cst_86 = arith.constant dense<0.000000e+00> : vector<16x384xf32>
    %181 = tpu.matmul %180, %173, %cst_86 {dimension_numbers = #tpu.dot_dimension_numbers<[1], [1], [0], [0], [0, 0, 1, 0], [], []>} : vector<16x128xbf16>, vector<384x128xbf16>, vector<16x384xf32> -> vector<16x384xf32>
    %182 = vector.broadcast %175 : vector<1x384xf32> to vector<16x384xf32>
    %183 = arith.addf %181, %182 : vector<16x384xf32>
    %184 = vector.shape_cast %183 : vector<16x384xf32> to vector<2x8x384xf32>
    %185 = vector.extract_strided_slice %184 {offsets = [0, 0, 0], sizes = [2, 8, 128], strides = [1, 1, 1]} : vector<2x8x384xf32> to vector<2x8x128xf32>
    %186 = vector.extract_strided_slice %184 {offsets = [0, 0, 128], sizes = [2, 8, 128], strides = [1, 1, 1]} : vector<2x8x384xf32> to vector<2x8x128xf32>
    %187 = vector.extract_strided_slice %184 {offsets = [0, 0, 256], sizes = [2, 8, 128], strides = [1, 1, 1]} : vector<2x8x384xf32> to vector<2x8x128xf32>
    %188 = vector.shape_cast %23 : vector<2x8xf32> to vector<2x1x8xf32>
    %189 = vector.extract_strided_slice %185 {offsets = [0, 0, 0], sizes = [2, 8, 64], strides = [1, 1, 1]} : vector<2x8x128xf32> to vector<2x8x64xf32>
    %190 = arith.truncf %189 : vector<2x8x64xf32> to vector<2x8x64xbf16>
    %191 = vector.extract_strided_slice %186 {offsets = [0, 0, 0], sizes = [2, 8, 64], strides = [1, 1, 1]} : vector<2x8x128xf32> to vector<2x8x64xf32>
    %192 = arith.truncf %191 : vector<2x8x64xf32> to vector<2x8x64xbf16>
    %193 = vector.extract_strided_slice %187 {offsets = [0, 0, 0], sizes = [2, 8, 64], strides = [1, 1, 1]} : vector<2x8x128xf32> to vector<2x8x64xf32>
    %194 = arith.truncf %193 : vector<2x8x64xf32> to vector<2x8x64xbf16>
    "tpu.trace_start"() <{level = 10 : i32, message = "bqd,bkd->bqk"}> : () -> ()
    %cst_87 = arith.constant dense<0.000000e+00> : vector<2x8x8xf32>
    %195 = tpu.matmul %190, %192, %cst_87 {dimension_numbers = #tpu.dot_dimension_numbers<[2], [2], [1], [1], [0, 0, 0, 1, 1, 1], [0], [0]>} : vector<2x8x64xbf16>, vector<2x8x64xbf16>, vector<2x8x8xf32> -> vector<2x8x8xf32>
    "tpu.trace_stop"() : () -> ()
    %cst_88 = arith.constant 1.250000e-01 : f32
    %196 = vector.broadcast %cst_88 : f32 to vector<2x8x8xf32>
    %197 = arith.mulf %195, %196 : vector<2x8x8xf32>
    %198 = vector.broadcast %188 : vector<2x1x8xf32> to vector<2x8x8xf32>
    %199 = arith.addf %197, %198 : vector<2x8x8xf32>
    %cst_89 = arith.constant dense<0xFF800000> : vector<2x8xf32>
    %200 = vector.multi_reduction <maximumf>, %199, %cst_89 [2] : vector<2x8x8xf32> to vector<2x8xf32>
    %201 = vector.shape_cast %200 : vector<2x8xf32> to vector<2x8x1xf32>
    %202 = vector.broadcast %201 : vector<2x8x1xf32> to vector<2x8x8xf32>
    %203 = arith.subf %199, %202 : vector<2x8x8xf32>
    %204 = math.exp %203 : vector<2x8x8xf32>
    %cst_90 = arith.constant dense<0.000000e+00> : vector<2x8xf32>
    %205 = vector.multi_reduction <add>, %204, %cst_90 [2] : vector<2x8x8xf32> to vector<2x8xf32>
    %206 = vector.shape_cast %205 : vector<2x8xf32> to vector<2x8x1xf32>
    %207 = tpu.reciprocal %206 {approx = true} : vector<2x8x1xf32> -> vector<2x8x1xf32>
    %208 = vector.broadcast %207 : vector<2x8x1xf32> to vector<2x8x8xf32>
    %209 = arith.mulf %204, %208 : vector<2x8x8xf32>
    %210 = arith.truncf %209 : vector<2x8x8xf32> to vector<2x8x8xbf16>
    "tpu.trace_start"() <{level = 10 : i32, message = "bqk,bkd->bqd"}> : () -> ()
    %cst_91 = arith.constant dense<0.000000e+00> : vector<2x8x64xf32>
    %211 = tpu.matmul %210, %194, %cst_91 {dimension_numbers = #tpu.dot_dimension_numbers<[2], [1], [1], [2], [0, 0, 0, 1, 1, 2], [0], [0]>} : vector<2x8x8xbf16>, vector<2x8x64xbf16>, vector<2x8x64xf32> -> vector<2x8x64xf32>
    "tpu.trace_stop"() : () -> ()
    %212 = vector.extract_strided_slice %185 {offsets = [0, 0, 64], sizes = [2, 8, 64], strides = [1, 1, 1]} : vector<2x8x128xf32> to vector<2x8x64xf32>
    %213 = arith.truncf %212 : vector<2x8x64xf32> to vector<2x8x64xbf16>
    %214 = vector.extract_strided_slice %186 {offsets = [0, 0, 64], sizes = [2, 8, 64], strides = [1, 1, 1]} : vector<2x8x128xf32> to vector<2x8x64xf32>
    %215 = arith.truncf %214 : vector<2x8x64xf32> to vector<2x8x64xbf16>
    %216 = vector.extract_strided_slice %187 {offsets = [0, 0, 64], sizes = [2, 8, 64], strides = [1, 1, 1]} : vector<2x8x128xf32> to vector<2x8x64xf32>
    %217 = arith.truncf %216 : vector<2x8x64xf32> to vector<2x8x64xbf16>
    "tpu.trace_start"() <{level = 10 : i32, message = "bqd,bkd->bqk"}> : () -> ()
    %cst_92 = arith.constant dense<0.000000e+00> : vector<2x8x8xf32>
    %218 = tpu.matmul %213, %215, %cst_92 {dimension_numbers = #tpu.dot_dimension_numbers<[2], [2], [1], [1], [0, 0, 0, 1, 1, 1], [0], [0]>} : vector<2x8x64xbf16>, vector<2x8x64xbf16>, vector<2x8x8xf32> -> vector<2x8x8xf32>
    "tpu.trace_stop"() : () -> ()
    %cst_93 = arith.constant 1.250000e-01 : f32
    %219 = vector.broadcast %cst_93 : f32 to vector<2x8x8xf32>
    %220 = arith.mulf %218, %219 : vector<2x8x8xf32>
    %221 = vector.broadcast %188 : vector<2x1x8xf32> to vector<2x8x8xf32>
    %222 = arith.addf %220, %221 : vector<2x8x8xf32>
    %cst_94 = arith.constant dense<0xFF800000> : vector<2x8xf32>
    %223 = vector.multi_reduction <maximumf>, %222, %cst_94 [2] : vector<2x8x8xf32> to vector<2x8xf32>
    %224 = vector.shape_cast %223 : vector<2x8xf32> to vector<2x8x1xf32>
    %225 = vector.broadcast %224 : vector<2x8x1xf32> to vector<2x8x8xf32>
    %226 = arith.subf %222, %225 : vector<2x8x8xf32>
    %227 = math.exp %226 : vector<2x8x8xf32>
    %cst_95 = arith.constant dense<0.000000e+00> : vector<2x8xf32>
    %228 = vector.multi_reduction <add>, %227, %cst_95 [2] : vector<2x8x8xf32> to vector<2x8xf32>
    %229 = vector.shape_cast %228 : vector<2x8xf32> to vector<2x8x1xf32>
    %230 = tpu.reciprocal %229 {approx = true} : vector<2x8x1xf32> -> vector<2x8x1xf32>
    %231 = vector.broadcast %230 : vector<2x8x1xf32> to vector<2x8x8xf32>
    %232 = arith.mulf %227, %231 : vector<2x8x8xf32>
    %233 = arith.truncf %232 : vector<2x8x8xf32> to vector<2x8x8xbf16>
    "tpu.trace_start"() <{level = 10 : i32, message = "bqk,bkd->bqd"}> : () -> ()
    %cst_96 = arith.constant dense<0.000000e+00> : vector<2x8x64xf32>
    %234 = tpu.matmul %233, %217, %cst_96 {dimension_numbers = #tpu.dot_dimension_numbers<[2], [1], [1], [2], [0, 0, 0, 1, 1, 2], [0], [0]>} : vector<2x8x8xbf16>, vector<2x8x64xbf16>, vector<2x8x64xf32> -> vector<2x8x64xf32>
    "tpu.trace_stop"() : () -> ()
    %235 = tpu.concatenate %211, %234 in 2 : vector<2x8x64xf32>, vector<2x8x64xf32> -> vector<2x8x128xf32>
    %236 = vector.shape_cast %235 : vector<2x8x128xf32> to vector<16x128xf32>
    %237 = arith.truncf %236 : vector<16x128xf32> to vector<16x128xbf16>
    %cst_97 = arith.constant dense<0.000000e+00> : vector<16x128xf32>
    %238 = tpu.matmul %237, %177, %cst_97 {dimension_numbers = #tpu.dot_dimension_numbers<[1], [1], [0], [0], [0, 0, 1, 0], [], []>} : vector<16x128xbf16>, vector<128x128xbf16>, vector<16x128xf32> -> vector<16x128xf32>
    %239 = vector.broadcast %179 : vector<1x128xf32> to vector<16x128xf32>
    %240 = arith.addf %238, %239 : vector<16x128xf32>
    %241 = arith.addf %171, %240 : vector<16x128xf32>
    %c1_98 = arith.constant 1 : index
    %c0_99 = arith.constant 0 : index
    %c0_100 = arith.constant 0 : index
    %242 = vector.load %arg8[%c1_98, %c0_99, %c0_100] : memref<2x1x128xf32, #tpu.memory_space<vmem>>, vector<1x1x128xf32>
    %243 = vector.shape_cast %242 : vector<1x1x128xf32> to vector<1x128xf32>
    %c1_101 = arith.constant 1 : index
    %c0_102 = arith.constant 0 : index
    %c0_103 = arith.constant 0 : index
    %244 = vector.load %arg9[%c1_101, %c0_102, %c0_103] : memref<2x1x128xf32, #tpu.memory_space<vmem>>, vector<1x1x128xf32>
    %245 = vector.shape_cast %244 : vector<1x1x128xf32> to vector<1x128xf32>
    %cst_104 = arith.constant dense<0.000000e+00> : vector<16xf32>
    %246 = vector.multi_reduction <add>, %241, %cst_104 [1] : vector<16x128xf32> to vector<16xf32>
    %247 = vector.shape_cast %246 : vector<16xf32> to vector<16x1xf32>
    %cst_105 = arith.constant 1.280000e+02 : f32
    %248 = vector.broadcast %cst_105 : f32 to vector<16x1xf32>
    %249 = arith.divf %247, %248 : vector<16x1xf32>
    %250 = vector.broadcast %249 : vector<16x1xf32> to vector<16x128xf32>
    %251 = arith.subf %241, %250 : vector<16x128xf32>
    %252 = arith.mulf %251, %251 : vector<16x128xf32>
    %cst_106 = arith.constant dense<0.000000e+00> : vector<16xf32>
    %253 = vector.multi_reduction <add>, %252, %cst_106 [1] : vector<16x128xf32> to vector<16xf32>
    %254 = vector.shape_cast %253 : vector<16xf32> to vector<16x1xf32>
    %cst_107 = arith.constant 1.280000e+02 : f32
    %255 = vector.broadcast %cst_107 : f32 to vector<16x1xf32>
    %256 = arith.divf %254, %255 : vector<16x1xf32>
    %cst_108 = arith.constant 9.99999996E-13 : f32
    %257 = vector.broadcast %cst_108 : f32 to vector<16x1xf32>
    %258 = arith.addf %256, %257 : vector<16x1xf32>
    %259 = math.rsqrt %258 : vector<16x1xf32>
    %260 = vector.broadcast %259 : vector<16x1xf32> to vector<16x128xf32>
    %261 = arith.mulf %251, %260 : vector<16x128xf32>
    %262 = vector.broadcast %243 : vector<1x128xf32> to vector<16x128xf32>
    %263 = arith.mulf %261, %262 : vector<16x128xf32>
    %264 = vector.broadcast %245 : vector<1x128xf32> to vector<16x128xf32>
    %265 = arith.addf %263, %264 : vector<16x128xf32>
    %c1_109 = arith.constant 1 : index
    %c0_110 = arith.constant 0 : index
    %c0_111 = arith.constant 0 : index
    %266 = vector.load %arg10[%c1_109, %c0_110, %c0_111] : memref<2x256x128xbf16, #tpu.memory_space<vmem>>, vector<1x256x128xbf16>
    %267 = vector.shape_cast %266 : vector<1x256x128xbf16> to vector<256x128xbf16>
    %c1_112 = arith.constant 1 : index
    %c0_113 = arith.constant 0 : index
    %c0_114 = arith.constant 0 : index
    %268 = vector.load %arg11[%c1_112, %c0_113, %c0_114] : memref<2x1x256xf32, #tpu.memory_space<vmem>>, vector<1x1x256xf32>
    %269 = vector.shape_cast %268 : vector<1x1x256xf32> to vector<1x256xf32>
    %270 = arith.truncf %265 : vector<16x128xf32> to vector<16x128xbf16>
    %cst_115 = arith.constant dense<0.000000e+00> : vector<16x256xf32>
    %271 = tpu.matmul %270, %267, %cst_115 {dimension_numbers = #tpu.dot_dimension_numbers<[1], [1], [0], [0], [0, 0, 1, 0], [], []>} : vector<16x128xbf16>, vector<256x128xbf16>, vector<16x256xf32> -> vector<16x256xf32>
    %272 = vector.broadcast %269 : vector<1x256xf32> to vector<16x256xf32>
    %273 = arith.addf %271, %272 : vector<16x256xf32>
    %274 = arith.mulf %273, %273 : vector<16x256xf32>
    %275 = arith.mulf %273, %274 : vector<16x256xf32>
    %cst_116 = arith.constant 4.471500e-02 : f32
    %276 = vector.broadcast %cst_116 : f32 to vector<16x256xf32>
    %277 = arith.mulf %276, %275 : vector<16x256xf32>
    %278 = arith.addf %273, %277 : vector<16x256xf32>
    %cst_117 = arith.constant 0.797884583 : f32
    %279 = vector.broadcast %cst_117 : f32 to vector<16x256xf32>
    %280 = arith.mulf %279, %278 : vector<16x256xf32>
    %281 = math.tanh %280 : vector<16x256xf32>
    %cst_118 = arith.constant 1.000000e+00 : f32
    %282 = vector.broadcast %cst_118 : f32 to vector<16x256xf32>
    %283 = arith.addf %282, %281 : vector<16x256xf32>
    %cst_119 = arith.constant 5.000000e-01 : f32
    %284 = vector.broadcast %cst_119 : f32 to vector<16x256xf32>
    %285 = arith.mulf %284, %283 : vector<16x256xf32>
    %286 = arith.mulf %273, %285 : vector<16x256xf32>
    %c1_120 = arith.constant 1 : index
    %c0_121 = arith.constant 0 : index
    %c0_122 = arith.constant 0 : index
    %287 = vector.load %arg12[%c1_120, %c0_121, %c0_122] : memref<2x128x256xbf16, #tpu.memory_space<vmem>>, vector<1x128x256xbf16>
    %288 = vector.shape_cast %287 : vector<1x128x256xbf16> to vector<128x256xbf16>
    %c1_123 = arith.constant 1 : index
    %c0_124 = arith.constant 0 : index
    %c0_125 = arith.constant 0 : index
    %289 = vector.load %arg13[%c1_123, %c0_124, %c0_125] : memref<2x1x128xf32, #tpu.memory_space<vmem>>, vector<1x1x128xf32>
    %290 = vector.shape_cast %289 : vector<1x1x128xf32> to vector<1x128xf32>
    %291 = arith.truncf %286 : vector<16x256xf32> to vector<16x256xbf16>
    %cst_126 = arith.constant dense<0.000000e+00> : vector<16x128xf32>
    %292 = tpu.matmul %291, %288, %cst_126 {dimension_numbers = #tpu.dot_dimension_numbers<[1], [1], [0], [0], [0, 0, 1, 0], [], []>} : vector<16x256xbf16>, vector<128x256xbf16>, vector<16x128xf32> -> vector<16x128xf32>
    %293 = vector.broadcast %290 : vector<1x128xf32> to vector<16x128xf32>
    %294 = arith.addf %292, %293 : vector<16x128xf32>
    %295 = arith.addf %265, %294 : vector<16x128xf32>
    %c1_127 = arith.constant 1 : index
    %c0_128 = arith.constant 0 : index
    %c0_129 = arith.constant 0 : index
    %296 = vector.load %arg14[%c1_127, %c0_128, %c0_129] : memref<2x1x128xf32, #tpu.memory_space<vmem>>, vector<1x1x128xf32>
    %297 = vector.shape_cast %296 : vector<1x1x128xf32> to vector<1x128xf32>
    %c1_130 = arith.constant 1 : index
    %c0_131 = arith.constant 0 : index
    %c0_132 = arith.constant 0 : index
    %298 = vector.load %arg15[%c1_130, %c0_131, %c0_132] : memref<2x1x128xf32, #tpu.memory_space<vmem>>, vector<1x1x128xf32>
    %299 = vector.shape_cast %298 : vector<1x1x128xf32> to vector<1x128xf32>
    %cst_133 = arith.constant dense<0.000000e+00> : vector<16xf32>
    %300 = vector.multi_reduction <add>, %295, %cst_133 [1] : vector<16x128xf32> to vector<16xf32>
    %301 = vector.shape_cast %300 : vector<16xf32> to vector<16x1xf32>
    %cst_134 = arith.constant 1.280000e+02 : f32
    %302 = vector.broadcast %cst_134 : f32 to vector<16x1xf32>
    %303 = arith.divf %301, %302 : vector<16x1xf32>
    %304 = vector.broadcast %303 : vector<16x1xf32> to vector<16x128xf32>
    %305 = arith.subf %295, %304 : vector<16x128xf32>
    %306 = arith.mulf %305, %305 : vector<16x128xf32>
    %cst_135 = arith.constant dense<0.000000e+00> : vector<16xf32>
    %307 = vector.multi_reduction <add>, %306, %cst_135 [1] : vector<16x128xf32> to vector<16xf32>
    %308 = vector.shape_cast %307 : vector<16xf32> to vector<16x1xf32>
    %cst_136 = arith.constant 1.280000e+02 : f32
    %309 = vector.broadcast %cst_136 : f32 to vector<16x1xf32>
    %310 = arith.divf %308, %309 : vector<16x1xf32>
    %cst_137 = arith.constant 9.99999996E-13 : f32
    %311 = vector.broadcast %cst_137 : f32 to vector<16x1xf32>
    %312 = arith.addf %310, %311 : vector<16x1xf32>
    %313 = math.rsqrt %312 : vector<16x1xf32>
    %314 = vector.broadcast %313 : vector<16x1xf32> to vector<16x128xf32>
    %315 = arith.mulf %305, %314 : vector<16x128xf32>
    %316 = vector.broadcast %297 : vector<1x128xf32> to vector<16x128xf32>
    %317 = arith.mulf %315, %316 : vector<16x128xf32>
    %318 = vector.broadcast %299 : vector<1x128xf32> to vector<16x128xf32>
    %319 = arith.addf %317, %318 : vector<16x128xf32>
    %c0_138 = arith.constant 0 : index
    %c0_139 = arith.constant 0 : index
    %320 = vector.load %arg16[%c0_138, %c0_139] : memref<128x128xbf16, #tpu.memory_space<vmem>>, vector<128x128xbf16>
    %c0_140 = arith.constant 0 : index
    %c0_141 = arith.constant 0 : index
    %321 = vector.load %arg17[%c0_140, %c0_141] : memref<1x128xf32, #tpu.memory_space<vmem>>, vector<1x128xf32>
    %322 = arith.truncf %319 : vector<16x128xf32> to vector<16x128xbf16>
    %cst_142 = arith.constant dense<0.000000e+00> : vector<16x128xf32>
    %323 = tpu.matmul %322, %320, %cst_142 {dimension_numbers = #tpu.dot_dimension_numbers<[1], [1], [0], [0], [0, 0, 1, 0], [], []>} : vector<16x128xbf16>, vector<128x128xbf16>, vector<16x128xf32> -> vector<16x128xf32>
    %324 = vector.broadcast %321 : vector<1x128xf32> to vector<16x128xf32>
    %325 = arith.addf %323, %324 : vector<16x128xf32>
    %326 = arith.mulf %325, %325 : vector<16x128xf32>
    %327 = arith.mulf %325, %326 : vector<16x128xf32>
    %cst_143 = arith.constant 4.471500e-02 : f32
    %328 = vector.broadcast %cst_143 : f32 to vector<16x128xf32>
    %329 = arith.mulf %328, %327 : vector<16x128xf32>
    %330 = arith.addf %325, %329 : vector<16x128xf32>
    %cst_144 = arith.constant 0.797884583 : f32
    %331 = vector.broadcast %cst_144 : f32 to vector<16x128xf32>
    %332 = arith.mulf %331, %330 : vector<16x128xf32>
    %333 = math.tanh %332 : vector<16x128xf32>
    %cst_145 = arith.constant 1.000000e+00 : f32
    %334 = vector.broadcast %cst_145 : f32 to vector<16x128xf32>
    %335 = arith.addf %334, %333 : vector<16x128xf32>
    %cst_146 = arith.constant 5.000000e-01 : f32
    %336 = vector.broadcast %cst_146 : f32 to vector<16x128xf32>
    %337 = arith.mulf %336, %335 : vector<16x128xf32>
    %338 = arith.mulf %325, %337 : vector<16x128xf32>
    %c0_147 = arith.constant 0 : index
    %c0_148 = arith.constant 0 : index
    %339 = vector.load %arg18[%c0_147, %c0_148] : memref<1x128xf32, #tpu.memory_space<vmem>>, vector<1x128xf32>
    %c0_149 = arith.constant 0 : index
    %c0_150 = arith.constant 0 : index
    %340 = vector.load %arg19[%c0_149, %c0_150] : memref<1x128xf32, #tpu.memory_space<vmem>>, vector<1x128xf32>
    %cst_151 = arith.constant dense<0.000000e+00> : vector<16xf32>
    %341 = vector.multi_reduction <add>, %338, %cst_151 [1] : vector<16x128xf32> to vector<16xf32>
    %342 = vector.shape_cast %341 : vector<16xf32> to vector<16x1xf32>
    %cst_152 = arith.constant 1.280000e+02 : f32
    %343 = vector.broadcast %cst_152 : f32 to vector<16x1xf32>
    %344 = arith.divf %342, %343 : vector<16x1xf32>
    %345 = vector.broadcast %344 : vector<16x1xf32> to vector<16x128xf32>
    %346 = arith.subf %338, %345 : vector<16x128xf32>
    %347 = arith.mulf %346, %346 : vector<16x128xf32>
    %cst_153 = arith.constant dense<0.000000e+00> : vector<16xf32>
    %348 = vector.multi_reduction <add>, %347, %cst_153 [1] : vector<16x128xf32> to vector<16xf32>
    %349 = vector.shape_cast %348 : vector<16xf32> to vector<16x1xf32>
    %cst_154 = arith.constant 1.280000e+02 : f32
    %350 = vector.broadcast %cst_154 : f32 to vector<16x1xf32>
    %351 = arith.divf %349, %350 : vector<16x1xf32>
    %cst_155 = arith.constant 9.99999996E-13 : f32
    %352 = vector.broadcast %cst_155 : f32 to vector<16x1xf32>
    %353 = arith.addf %351, %352 : vector<16x1xf32>
    %354 = math.rsqrt %353 : vector<16x1xf32>
    %355 = vector.broadcast %354 : vector<16x1xf32> to vector<16x128xf32>
    %356 = arith.mulf %346, %355 : vector<16x128xf32>
    %357 = vector.broadcast %339 : vector<1x128xf32> to vector<16x128xf32>
    %358 = arith.mulf %356, %357 : vector<16x128xf32>
    %359 = vector.broadcast %340 : vector<1x128xf32> to vector<16x128xf32>
    %360 = arith.addf %358, %359 : vector<16x128xf32>
    %c0_156 = arith.constant 0 : index
    %c0_157 = arith.constant 0 : index
    %361 = vector.load %arg20[%c0_156, %c0_157] : memref<128x128xbf16, #tpu.memory_space<vmem>>, vector<128x128xbf16>
    %c0_158 = arith.constant 0 : index
    %c0_159 = arith.constant 0 : index
    %362 = vector.load %arg21[%c0_158, %c0_159] : memref<1x128xf32, #tpu.memory_space<vmem>>, vector<1x128xf32>
    %363 = arith.truncf %360 : vector<16x128xf32> to vector<16x128xbf16>
    %cst_160 = arith.constant dense<0.000000e+00> : vector<16x128xf32>
    %364 = tpu.matmul %363, %361, %cst_160 {dimension_numbers = #tpu.dot_dimension_numbers<[1], [1], [0], [0], [0, 0, 1, 0], [], []>} : vector<16x128xbf16>, vector<128x128xbf16>, vector<16x128xf32> -> vector<16x128xf32>
    %365 = vector.broadcast %362 : vector<1x128xf32> to vector<16x128xf32>
    %366 = arith.addf %364, %365 : vector<16x128xf32>
    %c0_161 = arith.constant 0 : index
    %c0_162 = arith.constant 0 : index
    %367 = vector.load %arg22[%c0_161, %c0_162] : memref<16x1xi32, #tpu.memory_space<vmem>>, vector<16x1xi32>
    %368 = tpu.iota {dimensions = array<i32: 1>} : vector<16x128xi32>
    %cst_163 = arith.constant dense<0xFF800000> : vector<16xf32>
    %369 = vector.multi_reduction <maximumf>, %366, %cst_163 [1] : vector<16x128xf32> to vector<16xf32>
    %370 = vector.shape_cast %369 : vector<16xf32> to vector<16x1xf32>
    %371 = vector.broadcast %370 : vector<16x1xf32> to vector<16x128xf32>
    %372 = arith.subf %366, %371 : vector<16x128xf32>
    %373 = math.exp %372 : vector<16x128xf32>
    %cst_164 = arith.constant dense<0.000000e+00> : vector<16xf32>
    %374 = vector.multi_reduction <add>, %373, %cst_164 [1] : vector<16x128xf32> to vector<16xf32>
    %375 = vector.shape_cast %374 : vector<16xf32> to vector<16x1xf32>
    %376 = math.log %375 : vector<16x1xf32>
    %377 = arith.addf %370, %376 : vector<16x1xf32>
    %378 = vector.broadcast %367 : vector<16x1xi32> to vector<16x128xi32>
    %379 = arith.cmpi eq, %368, %378 : vector<16x128xi32>
    %380 = arith.extui %379 : vector<16x128xi1> to vector<16x128xi32>
    %381 = arith.sitofp %380 : vector<16x128xi32> to vector<16x128xf32>
    %382 = arith.mulf %381, %366 : vector<16x128xf32>
    %cst_165 = arith.constant dense<0.000000e+00> : vector<16xf32>
    %383 = vector.multi_reduction <add>, %382, %cst_165 [1] : vector<16x128xf32> to vector<16xf32>
    %384 = vector.shape_cast %383 : vector<16xf32> to vector<16x1xf32>
    %c-100_i32 = arith.constant -100 : i32
    %385 = vector.broadcast %c-100_i32 : i32 to vector<16x1xi32>
    %386 = arith.cmpi ne, %367, %385 : vector<16x1xi32>
    %387 = arith.extui %386 : vector<16x1xi1> to vector<16x1xi32>
    %388 = arith.sitofp %387 : vector<16x1xi32> to vector<16x1xf32>
    %389 = arith.subf %377, %384 : vector<16x1xf32>
    %390 = arith.mulf %389, %388 : vector<16x1xf32>
    %391 = vector.shape_cast %390 : vector<16x1xf32> to vector<1x16x1xf32>
    %cst_166 = arith.constant dense<0.000000e+00> : vector<1xf32>
    %392 = vector.multi_reduction <add>, %391, %cst_166 [1, 2] : vector<1x16x1xf32> to vector<1xf32>
    %393 = vector.shape_cast %392 : vector<1xf32> to vector<1x1x1xf32>
    %394 = vector.extract %393[0, 0, 0] : f32 from vector<1x1x1xf32>
    %395 = vector.broadcast %394 : f32 to vector<1x1xf32>
    %396 = vector.shape_cast %388 : vector<16x1xf32> to vector<1x16x1xf32>
    %cst_167 = arith.constant dense<0.000000e+00> : vector<1xf32>
    %397 = vector.multi_reduction <add>, %396, %cst_167 [1, 2] : vector<1x16x1xf32> to vector<1xf32>
    %398 = vector.shape_cast %397 : vector<1xf32> to vector<1x1x1xf32>
    %399 = vector.extract %398[0, 0, 0] : f32 from vector<1x1x1xf32>
    %400 = vector.broadcast %399 : f32 to vector<1x1xf32>
    %cst_168 = arith.constant 1.000000e+00 : f32
    %401 = vector.broadcast %cst_168 : f32 to vector<1x1xf32>
    %402 = arith.maximumf %400, %401 : vector<1x1xf32>
    %403 = arith.divf %395, %402 : vector<1x1xf32>
    %c0_169 = arith.constant 0 : index
    %c0_170 = arith.constant 0 : index
    %404 = vector.load %arg23[%c0_169, %c0_170] : memref<1x1xf32, #tpu.memory_space<vmem>>, vector<1x1xf32>
    tpu.vector_store %arg23[%c0_169, %c0_170], %403 {strides = array<i32>} : memref<1x1xf32, #tpu.memory_space<vmem>>, vector<1x1xf32>,
    return
  }
}

</mosaic_0001>

<llo_original>
// kernel: task_loss.1
$region0: #{task_loss.1}
  #allocation0 [shape = 'u32[]', space=smem, size = 0x4, offset = 0x4, fixed_abs, tag = 'smem constant byte address 0x4 - core index']
  #allocation1 [shape = 'u32[144,128]{1,0:T(1,128)}', space=vmem, size = 0x12000, scoped, tag = 'internal scratch']
  %s0 = inlined_call_operand.vmem [shape: f32[16,128], index: 0, kind: input, shape index: {}]
  %s1 = inlined_call_operand.vmem [shape: f32[2,8], index: 1, kind: input, shape index: {}]
  %s2 = inlined_call_operand.hbm [shape: f32[1,128], index: 2, kind: input, shape index: {}]
  %s3 = inlined_call_operand.hbm [shape: f32[1,128], index: 3, kind: input, shape index: {}]
  %s4 = inlined_call_operand.hbm [shape: bf16[2,384,128], index: 4, kind: input, shape index: {}]
  %s5 = inlined_call_operand.vmem [shape: f32[2,1,384], index: 5, kind: input, shape index: {}]
  %s6 = inlined_call_operand.hbm [shape: bf16[2,128,128], index: 6, kind: input, shape index: {}]
  %s7 = inlined_call_operand.hbm [shape: f32[2,1,128], index: 7, kind: input, shape index: {}]
  %s8 = inlined_call_operand.vmem [shape: f32[2,1,128], index: 8, kind: input, shape index: {}]
  %s9 = inlined_call_operand.vmem [shape: f32[2,1,128], index: 9, kind: input, shape index: {}]
  %s10 = inlined_call_operand.hbm [shape: bf16[2,256,128], index: 10, kind: input, shape index: {}]
  %s11 = inlined_call_operand.hbm [shape: f32[2,1,256], index: 11, kind: input, shape index: {}]
  %s12 = inlined_call_operand.vmem [shape: bf16[2,128,256], index: 12, kind: input, shape index: {}]
  %s13 = inlined_call_operand.hbm [shape: f32[2,1,128], index: 13, kind: input, shape index: {}]
  %s14 = inlined_call_operand.vmem [shape: f32[2,1,128], index: 14, kind: input, shape index: {}]
  %s15 = inlined_call_operand.vmem [shape: f32[2,1,128], index: 15, kind: input, shape index: {}]
  %s16 = inlined_call_operand.hbm [shape: bf16[128,128], index: 16, kind: input, shape index: {}]
  %s17 = inlined_call_operand.hbm [shape: f32[1,128], index: 17, kind: input, shape index: {}]
  %s18 = inlined_call_operand.hbm [shape: f32[1,128], index: 18, kind: input, shape index: {}]
  %s19 = inlined_call_operand.hbm [shape: f32[1,128], index: 19, kind: input, shape index: {}]
  %s20 = inlined_call_operand.hbm [shape: bf16[128,128], index: 20, kind: input, shape index: {}]
  %s21 = inlined_call_operand.hbm [shape: f32[1,128], index: 21, kind: input, shape index: {}]
  %s22 = inlined_call_operand.vmem [shape: s32[16,1], index: 22, kind: input, shape index: {}]
  %s23 = inlined_call_operand.hbm [shape: f32[1,1], index: 23, kind: output, shape index: {}]
  %s24 = sld [smem:[#allocation0]]
  $region158: #{task_loss.1} parent=0
    _
  %s26 = ssub.s32 1, %s24
  %s27 = scalar_select 0, %s26, %s24
  $region1: #{task_loss.1} parent=0
    #allocation2 [shape = 'u8[512]{0}', space=vmem, size = 0x400, scoped, tag = 'input window, operand 2, single buffered']
    #allocation3 [shape = 's32[1]{0}', space=sflag, size = 0x4, scoped, tag = 'scoped memory for task_loss.1']
    #allocation4 [shape = 's32[1]{0}', space=sflag, size = 0x4, scoped, tag = 'scoped memory for task_loss.1']
    #allocation5 [shape = 'u8[512]{0}', space=vmem, size = 0x400, scoped, tag = 'input window, operand 3, single buffered']
    #allocation6 [shape = 's32[1]{0}', space=sflag, size = 0x4, scoped, tag = 'scoped memory for task_loss.1']
    #allocation7 [shape = 'u8[196608]{0}', space=vmem, size = 0x30000, scoped, tag = 'input window, operand 4, single buffered']
    #allocation8 [shape = 'u8[65536]{0}', space=vmem, size = 0x10000, scoped, tag = 'input window, operand 6, single buffered']
    #allocation9 [shape = 's32[1]{0}', space=sflag, size = 0x4, scoped, tag = 'scoped memory for task_loss.1']
    #allocation10 [shape = 'u8[1024]{0}', space=vmem, size = 0x400, scoped, tag = 'input window, operand 7, single buffered']
    #allocation11 [shape = 'u8[131072]{0}', space=vmem, size = 0x20000, scoped, tag = 'input window, operand 10, single buffered']
    #allocation12 [shape = 's32[1]{0}', space=sflag, size = 0x4, scoped, tag = 'scoped memory for task_loss.1']
    #allocation13 [shape = 'u8[2048]{0}', space=vmem, size = 0x800, scoped, tag = 'input window, operand 11, single buffered']
    #allocation14 [shape = 'u8[1024]{0}', space=vmem, size = 0x400, scoped, tag = 'input window, operand 13, single buffered']
    #allocation15 [shape = 's32[1]{0}', space=sflag, size = 0x4, scoped, tag = 'scoped memory for task_loss.1']
    #allocation16 [shape = 'u8[32768]{0}', space=vmem, size = 0x8000, scoped, tag = 'input window, operand 16, single buffered']
    #allocation17 [shape = 'u8[512]{0}', space=vmem, size = 0x400, scoped, tag = 'input window, operand 17, single buffered']
    #allocation18 [shape = 's32[1]{0}', space=sflag, size = 0x4, scoped, tag = 'scoped memory for task_loss.1']
    #allocation19 [shape = 'u8[512]{0}', space=vmem, size = 0x400, scoped, tag = 'input window, operand 18, single buffered']
    #allocation20 [shape = 'u8[512]{0}', space=vmem, size = 0x400, scoped, tag = 'input window, operand 19, single buffered']
    #allocation21 [shape = 's32[1]{0}', space=sflag, size = 0x4, scoped, tag = 'scoped memory for task_loss.1']
    #allocation22 [shape = 'u8[32768]{0}', space=vmem, size = 0x8000, scoped, tag = 'input window, operand 20, single buffered']
    #allocation23 [shape = 'u8[512]{0}', space=vmem, size = 0x400, scoped, tag = 'input window, operand 21, single buffered']
    #allocation24 [shape = 's32[1]{0}', space=sflag, size = 0x4, scoped, tag = 'scoped memory for task_loss.1']
    #allocation25 [shape = 'u8[512]{0}', space=vmem, size = 0x400, scoped, tag = 'output window, operand 0, single buffered']
    %28 = vsyncpa [#allocation3], 0
    %29 = vsyncpa [#allocation6], 0
    %30 = vsyncpa [#allocation9], 0
    %31 = vsyncpa [#allocation12], 0
    %32 = vsyncpa [#allocation15], 0
    %33 = vsyncpa [#allocation18], 0
    %34 = vsyncpa [#allocation21], 0
    %35 = vsyncpa [#allocation24], 0
    %36 = vsyncpa [#allocation4], 0
    // Predicated region
    $region2: #{task_loss.1} parent=1 // pred_check
      _
    $region3: #{task_loss.1} parent=1 // pred_check_branch
      %38 = sbr.rel (0) target = $region5
    $region4: #{task_loss.1} parent=1 // pred_region
      _
    $region5: #{task_loss.1} parent=1 // pred_fallthru
      _
    // Predicated region
    $region6: #{task_loss.1} parent=1 // pred_check
      _
    $region7: #{task_loss.1} parent=1 // pred_check_branch
      %40 = sbr.rel (0) target = $region9
    $region8: #{task_loss.1} parent=1 // pred_region
      _
    $region9: #{task_loss.1} parent=1 // pred_fallthru
      _
    // Predicated region
    $region10: #{task_loss.1} parent=1 // pred_check
      _
    $region11: #{task_loss.1} parent=1 // pred_check_branch
      %42 = sbr.rel (0) target = $region13
    $region12: #{task_loss.1} parent=1 // pred_region
      %s44 = ssub.s32 16, 16
      %45 = vsyncadd [#allocation3], %s44
      %s47 = sshll.u32 [#allocation2], 4
      %s48 = int_to_ptr.vmem [resolvable:$true] %s47
      %50 = dma.hbm_to_vmem [thread:$0]  %s2, 16, %s48, [#allocation3]
    $region13: #{task_loss.1} parent=1 // pred_fallthru
      _
    // Predicated region
    $region14: #{task_loss.1} parent=1 // pred_check
      _
    $region15: #{task_loss.1} parent=1 // pred_check_branch
      %52 = sbr.rel (0) target = $region17
    $region16: #{task_loss.1} parent=1 // pred_region
      %s54 = ssub.s32 16, 16
      %55 = vsyncadd [#allocation6], %s54
      %s57 = sshll.u32 [#allocation5], 4
      %s58 = int_to_ptr.vmem [resolvable:$true] %s57
      %60 = dma.hbm_to_vmem [thread:$0]  %s3, 16, %s58, [#allocation6]
    $region17: #{task_loss.1} parent=1 // pred_fallthru
      _
    // Predicated region
    $region18: #{task_loss.1} parent=1 // pred_check
      _
    $region19: #{task_loss.1} parent=1 // pred_check_branch
      %62 = sbr.rel (0) target = $region21
    $region20: #{task_loss.1} parent=1 // pred_region
      %s64 = ssub.s32 6144, 6144
      %65 = vsyncadd [#allocation6], %s64
      %s66 = sshll.u32 [#allocation7], 4
      %s67 = int_to_ptr.vmem [resolvable:$true] %s66
      %72 = dma.hbm_to_vmem [thread:$0]  %s4, 6144, %s67, [#allocation6], 64, 64, 4
    $region21: #{task_loss.1} parent=1 // pred_fallthru
      _
    // Predicated region
    $region22: #{task_loss.1} parent=1 // pred_check
      _
    $region23: #{task_loss.1} parent=1 // pred_check_branch
      %74 = sbr.rel (0) target = $region25
    $region24: #{task_loss.1} parent=1 // pred_region
      _
    $region25: #{task_loss.1} parent=1 // pred_fallthru
      _
    // Predicated region
    $region26: #{task_loss.1} parent=1 // pred_check
      _
    $region27: #{task_loss.1} parent=1 // pred_check_branch
      %76 = sbr.rel (0) target = $region29
    $region28: #{task_loss.1} parent=1 // pred_region
      %s78 = ssub.s32 2048, 2048
      %79 = vsyncadd [#allocation9], %s78
      %s80 = sshll.u32 [#allocation8], 4
      %s81 = int_to_ptr.vmem [resolvable:$true] %s80
      %86 = dma.hbm_to_vmem [thread:$0]  %s6, 2048, %s81, [#allocation9], 64, 64, 4
    $region29: #{task_loss.1} parent=1 // pred_fallthru
      _
    // Predicated region
    $region30: #{task_loss.1} parent=1 // pred_check
      _
    $region31: #{task_loss.1} parent=1 // pred_check_branch
      %88 = sbr.rel (0) target = $region33
    $region32: #{task_loss.1} parent=1 // pred_region
      %s90 = ssub.s32 32, 32
      %91 = vsyncadd [#allocation9], %s90
      %s92 = sshll.u32 [#allocation10], 4
      %s93 = int_to_ptr.vmem [resolvable:$true] %s92
      %98 = dma.hbm_to_vmem [thread:$0]  %s7, 32, %s93, [#allocation9], 16, 16, 1
    $region33: #{task_loss.1} parent=1 // pred_fallthru
      _
    // Predicated region
    $region34: #{task_loss.1} parent=1 // pred_check
      _
    $region35: #{task_loss.1} parent=1 // pred_check_branch
      %100 = sbr.rel (0) target = $region37
    $region36: #{task_loss.1} parent=1 // pred_region
      _
    $region37: #{task_loss.1} parent=1 // pred_fallthru
      _
    // Predicated region
    $region38: #{task_loss.1} parent=1 // pred_check
      _
    $region39: #{task_loss.1} parent=1 // pred_check_branch
      %102 = sbr.rel (0) target = $region41
    $region40: #{task_loss.1} parent=1 // pred_region
      _
    $region41: #{task_loss.1} parent=1 // pred_fallthru
      _
    // Predicated region
    $region42: #{task_loss.1} parent=1 // pred_check
      _
    $region43: #{task_loss.1} parent=1 // pred_check_branch
      %104 = sbr.rel (0) target = $region45
    $region44: #{task_loss.1} parent=1 // pred_region
      %s106 = ssub.s32 4096, 4096
      %107 = vsyncadd [#allocation12], %s106
      %s108 = sshll.u32 [#allocation11], 4
      %s109 = int_to_ptr.vmem [resolvable:$true] %s108
      %114 = dma.hbm_to_vmem [thread:$0]  %s10, 4096, %s109, [#allocation12], 64, 64, 4
    $region45: #{task_loss.1} parent=1 // pred_fallthru
      _
    // Predicated region
    $region46: #{task_loss.1} parent=1 // pred_check
      _
    $region47: #{task_loss.1} parent=1 // pred_check_branch
      %116 = sbr.rel (0) target = $region49
    $region48: #{task_loss.1} parent=1 // pred_region
      %s118 = ssub.s32 64, 64
      %119 = vsyncadd [#allocation12], %s118
      %s120 = sshll.u32 [#allocation13], 4
      %s121 = int_to_ptr.vmem [resolvable:$true] %s120
      %126 = dma.hbm_to_vmem [thread:$0]  %s11, 64, %s121, [#allocation12], 32, 32, 2
    $region49: #{task_loss.1} parent=1 // pred_fallthru
      _
    // Predicated region
    $region50: #{task_loss.1} parent=1 // pred_check
      _
    $region51: #{task_loss.1} parent=1 // pred_check_branch
      %128 = sbr.rel (0) target = $region53
    $region52: #{task_loss.1} parent=1 // pred_region
      _
    $region53: #{task_loss.1} parent=1 // pred_fallthru
      _
    // Predicated region
    $region54: #{task_loss.1} parent=1 // pred_check
      _
    $region55: #{task_loss.1} parent=1 // pred_check_branch
      %130 = sbr.rel (0) target = $region57
    $region56: #{task_loss.1} parent=1 // pred_region
      %s132 = ssub.s32 32, 32
      %133 = vsyncadd [#allocation15], %s132
      %s134 = sshll.u32 [#allocation14], 4
      %s135 = int_to_ptr.vmem [resolvable:$true] %s134
      %140 = dma.hbm_to_vmem [thread:$0]  %s13, 32, %s135, [#allocation15], 16, 16, 1
    $region57: #{task_loss.1} parent=1 // pred_fallthru
      _
    // Predicated region
    $region58: #{task_loss.1} parent=1 // pred_check
      _
    $region59: #{task_loss.1} parent=1 // pred_check_branch
      %142 = sbr.rel (0) target = $region61
    $region60: #{task_loss.1} parent=1 // pred_region
      _
    $region61: #{task_loss.1} parent=1 // pred_fallthru
      _
    // Predicated region
    $region62: #{task_loss.1} parent=1 // pred_check
      _
    $region63: #{task_loss.1} parent=1 // pred_check_branch
      %144 = sbr.rel (0) target = $region65
    $region64: #{task_loss.1} parent=1 // pred_region
      _
    $region65: #{task_loss.1} parent=1 // pred_fallthru
      _
    // Predicated region
    $region66: #{task_loss.1} parent=1 // pred_check
      _
    $region67: #{task_loss.1} parent=1 // pred_check_branch
      %146 = sbr.rel (0) target = $region69
    $region68: #{task_loss.1} parent=1 // pred_region
      %s148 = ssub.s32 1024, 1024
      %149 = vsyncadd [#allocation15], %s148
      %s150 = sshll.u32 [#allocation16], 4
      %s151 = int_to_ptr.vmem [resolvable:$true] %s150
      %156 = dma.hbm_to_vmem [thread:$0]  %s16, 1024, %s151, [#allocation15], 64, 64, 4
    $region69: #{task_loss.1} parent=1 // pred_fallthru
      _
    // Predicated region
    $region70: #{task_loss.1} parent=1 // pred_check
      _
    $region71: #{task_loss.1} parent=1 // pred_check_branch
      %158 = sbr.rel (0) target = $region73
    $region72: #{task_loss.1} parent=1 // pred_region
      %s160 = ssub.s32 16, 16
      %161 = vsyncadd [#allocation18], %s160
      %s163 = sshll.u32 [#allocation17], 4
      %s164 = int_to_ptr.vmem [resolvable:$true] %s163
      %166 = dma.hbm_to_vmem [thread:$0]  %s17, 16, %s164, [#allocation18]
    $region73: #{task_loss.1} parent=1 // pred_fallthru
      _
    // Predicated region
    $region74: #{task_loss.1} parent=1 // pred_check
      _
    $region75: #{task_loss.1} parent=1 // pred_check_branch
      %168 = sbr.rel (0) target = $region77
    $region76: #{task_loss.1} parent=1 // pred_region
      %s170 = ssub.s32 16, 16
      %171 = vsyncadd [#allocation18], %s170
      %s173 = sshll.u32 [#allocation19], 4
      %s174 = int_to_ptr.vmem [resolvable:$true] %s173
      %176 = dma.hbm_to_vmem [thread:$0]  %s18, 16, %s174, [#allocation18]
    $region77: #{task_loss.1} parent=1 // pred_fallthru
      _
    // Predicated region
    $region78: #{task_loss.1} parent=1 // pred_check
      _
    $region79: #{task_loss.1} parent=1 // pred_check_branch
      %178 = sbr.rel (0) target = $region81
    $region80: #{task_loss.1} parent=1 // pred_region
      %s180 = ssub.s32 16, 16
      %181 = vsyncadd [#allocation21], %s180
      %s183 = sshll.u32 [#allocation20], 4
      %s184 = int_to_ptr.vmem [resolvable:$true] %s183
      %186 = dma.hbm_to_vmem [thread:$0]  %s19, 16, %s184, [#allocation21]
    $region81: #{task_loss.1} parent=1 // pred_fallthru
      _
    // Predicated region
    $region82: #{task_loss.1} parent=1 // pred_check
      _
    $region83: #{task_loss.1} parent=1 // pred_check_branch
      %188 = sbr.rel (0) target = $region85
    $region84: #{task_loss.1} parent=1 // pred_region
      %s190 = ssub.s32 1024, 1024
      %191 = vsyncadd [#allocation21], %s190
      %s192 = sshll.u32 [#allocation22], 4
      %s193 = int_to_ptr.vmem [resolvable:$true] %s192
      %198 = dma.hbm_to_vmem [thread:$0]  %s20, 1024, %s193, [#allocation21], 64, 64, 4
    $region85: #{task_loss.1} parent=1 // pred_fallthru
      _
    // Predicated region
    $region86: #{task_loss.1} parent=1 // pred_check
      _
    $region87: #{task_loss.1} parent=1 // pred_check_branch
      %200 = sbr.rel (0) target = $region89
    $region88: #{task_loss.1} parent=1 // pred_region
      %s202 = ssub.s32 16, 16
      %203 = vsyncadd [#allocation24], %s202
      %s205 = sshll.u32 [#allocation23], 4
      %s206 = int_to_ptr.vmem [resolvable:$true] %s205
      %208 = dma.hbm_to_vmem [thread:$0]  %s21, 16, %s206, [#allocation24]
    $region89: #{task_loss.1} parent=1 // pred_fallthru
      _
    // Predicated region
    $region90: #{task_loss.1} parent=1 // pred_check
      _
    $region91: #{task_loss.1} parent=1 // pred_check_branch
      %210 = sbr.rel (0) target = $region93
    $region92: #{task_loss.1} parent=1 // pred_region
      _
    $region93: #{task_loss.1} parent=1 // pred_fallthru
      _
    // Predicated region
    $region94: #{task_loss.1} parent=1 // pred_check
      _
    $region95: #{task_loss.1} parent=1 // pred_check_branch
      %212 = sbr.rel (0) target = $region97
    $region96: #{task_loss.1} parent=1 // pred_region
      %213 = dma.done [#allocation3], 16
    $region97: #{task_loss.1} parent=1 // pred_fallthru
      _
    // Predicated region
    $region98: #{task_loss.1} parent=1 // pred_check
      _
    $region99: #{task_loss.1} parent=1 // pred_check_branch
      %215 = sbr.rel (0) target = $region101
    $region100: #{task_loss.1} parent=1 // pred_region
      %216 = dma.done [#allocation6], 16
    $region101: #{task_loss.1} parent=1 // pred_fallthru
      _
    // Predicated region
    $region102: #{task_loss.1} parent=1 // pred_check
      _
    $region103: #{task_loss.1} parent=1 // pred_check_branch
      %218 = sbr.rel (0) target = $region105
    $region104: #{task_loss.1} parent=1 // pred_region
      %219 = dma.done [#allocation6], 6144
    $region105: #{task_loss.1} parent=1 // pred_fallthru
      _
    // Predicated region
    $region106: #{task_loss.1} parent=1 // pred_check
      _
    $region107: #{task_loss.1} parent=1 // pred_check_branch
      %221 = sbr.rel (0) target = $region109
    $region108: #{task_loss.1} parent=1 // pred_region
      %222 = dma.done [#allocation9], 2048
    $region109: #{task_loss.1} parent=1 // pred_fallthru
      _
    // Predicated region
    $region110: #{task_loss.1} parent=1 // pred_check
      _
    $region111: #{task_loss.1} parent=1 // pred_check_branch
      %224 = sbr.rel (0) target = $region113
    $region112: #{task_loss.1} parent=1 // pred_region
      %225 = dma.done [#allocation9], 32
    $region113: #{task_loss.1} parent=1 // pred_fallthru
      _
    // Predicated region
    $region114: #{task_loss.1} parent=1 // pred_check
      _
    $region115: #{task_loss.1} parent=1 // pred_check_branch
      %227 = sbr.rel (0) target = $region117
    $region116: #{task_loss.1} parent=1 // pred_region
      %228 = dma.done [#allocation12], 4096
    $region117: #{task_loss.1} parent=1 // pred_fallthru
      _
    // Predicated region
    $region118: #{task_loss.1} parent=1 // pred_check
      _
    $region119: #{task_loss.1} parent=1 // pred_check_branch
      %230 = sbr.rel (0) target = $region121
    $region120: #{task_loss.1} parent=1 // pred_region
      %231 = dma.done [#allocation12], 64
    $region121: #{task_loss.1} parent=1 // pred_fallthru
      _
    // Predicated region
    $region122: #{task_loss.1} parent=1 // pred_check
      _
    $region123: #{task_loss.1} parent=1 // pred_check_branch
      %233 = sbr.rel (0) target = $region125
    $region124: #{task_loss.1} parent=1 // pred_region
      %234 = dma.done [#allocation15], 32
    $region125: #{task_loss.1} parent=1 // pred_fallthru
      _
    // Predicated region
    $region126: #{task_loss.1} parent=1 // pred_check
      _
    $region127: #{task_loss.1} parent=1 // pred_check_branch
      %236 = sbr.rel (0) target = $region129
    $region128: #{task_loss.1} parent=1 // pred_region
      %237 = dma.done [#allocation15], 1024
    $region129: #{task_loss.1} parent=1 // pred_fallthru
      _
    // Predicated region
    $region130: #{task_loss.1} parent=1 // pred_check
      _
    $region131: #{task_loss.1} parent=1 // pred_check_branch
      %239 = sbr.rel (0) target = $region133
    $region132: #{task_loss.1} parent=1 // pred_region
      %240 = dma.done [#allocation18], 16
    $region133: #{task_loss.1} parent=1 // pred_fallthru
      _
    // Predicated region
    $region134: #{task_loss.1} parent=1 // pred_check
      _
    $region135: #{task_loss.1} parent=1 // pred_check_branch
      %242 = sbr.rel (0) target = $region137
    $region136: #{task_loss.1} parent=1 // pred_region
      %243 = dma.done [#allocation18], 16
    $region137: #{task_loss.1} parent=1 // pred_fallthru
      _
    // Predicated region
    $region138: #{task_loss.1} parent=1 // pred_check
      _
    $region139: #{task_loss.1} parent=1 // pred_check_branch
      %245 = sbr.rel (0) target = $region141
    $region140: #{task_loss.1} parent=1 // pred_region
      %246 = dma.done [#allocation21], 16
    $region141: #{task_loss.1} parent=1 // pred_fallthru
      _
    // Predicated region
    $region142: #{task_loss.1} parent=1 // pred_check
      _
    $region143: #{task_loss.1} parent=1 // pred_check_branch
      %248 = sbr.rel (0) target = $region145
    $region144: #{task_loss.1} parent=1 // pred_region
      %249 = dma.done [#allocation21], 1024
    $region145: #{task_loss.1} parent=1 // pred_fallthru
      _
    // Predicated region
    $region146: #{task_loss.1} parent=1 // pred_check
      _
    $region147: #{task_loss.1} parent=1 // pred_check_branch
      %251 = sbr.rel (0) target = $region149
    $region148: #{task_loss.1} parent=1 // pred_region
      %252 = dma.done [#allocation24], 16
    $region149: #{task_loss.1} parent=1 // pred_fallthru
      _
    %v254 = vld [vmem:[%s0] sm:$0xff]
    %v255 = vld [vmem:[%s0 + $0x8] sm:$0xff]
    %v256 = vld [vmem:[#allocation2] sm:$0x1]
    %v257 = vld [vmem:[#allocation5] sm:$0x1]
    %258 = vadd.xlane.f32.xlu0 %v254
    %v259 = vpop.xlane.xlu0 %258
    %260 = vadd.xlane.f32.xlu0 %v255
    %v261 = vpop.xlane.xlu0 %260
    %v262 = vrcp.pop 128.0
    %v263 = vmul.f32 %v259, %v262
    %v264 = vmul.f32 %v261, %v262
    %v265 = vsub.f32 %v254, %v263
    %v266 = vsub.f32 %v255, %v264
    %v267 = vmul.f32 %v265, %v265
    %v268 = vmul.f32 %v266, %v266
    %269 = vadd.xlane.f32.xlu0 %v267
    %v270 = vpop.xlane.xlu0 %269
    %271 = vadd.xlane.f32.xlu0 %v268
    %v272 = vpop.xlane.xlu0 %271
    %v273 = vmul.f32 %v270, %v262
    %v274 = vmul.f32 %v272, %v262
    %v275 = vadd.f32 %v273, 1e-12
    %v276 = vadd.f32 %v274, 1e-12
    %v277 = vrsqrt.pop %v275
    %v278 = vrsqrt.pop %v276
    %v279 = vmul.f32 %v265, %v277
    %v280 = vmul.f32 %v266, %v278
    %v282 = vlaneseq
    %v283 = vshrl.u32 %v282, 7
    %v284 = vsub.s32 0, %v283
    %v285 = vrot.slane %v256, %v284
    %v287 = vmul.f32 %v279, %v285
    %v288 = vmul.f32 %v280, %v285
    %v290 = vlaneseq
    %v291 = vshrl.u32 %v290, 7
    %v292 = vsub.s32 0, %v291
    %v293 = vrot.slane %v257, %v292
    %v295 = vadd.f32 %v287, %v293
    %v296 = vadd.f32 %v288, %v293
    %v297 = vld [vmem:[%s1] sm:$0x3]
    %v298 = vld [vmem:[#allocation7] sm:$0xf]
    %v299 = vld [vmem:[#allocation7 + $0x4] sm:$0xf]
    %v300 = vld [vmem:[#allocation7 + $0x8] sm:$0xf]
    %v301 = vld [vmem:[#allocation7 + $0xc] sm:$0xf]
    %v302 = vld [vmem:[#allocation7 + $0x10] sm:$0xf]
    %v303 = vld [vmem:[#allocation7 + $0x14] sm:$0xf]
    %v304 = vld [vmem:[#allocation7 + $0x18] sm:$0xf]
    %v305 = vld [vmem:[#allocation7 + $0x1c] sm:$0xf]
    %v306 = vld [vmem:[#allocation7 + $0x20] sm:$0xf]
    %v307 = vld [vmem:[#allocation7 + $0x24] sm:$0xf]
    %v308 = vld [vmem:[#allocation7 + $0x28] sm:$0xf]
    %v309 = vld [vmem:[#allocation7 + $0x2c] sm:$0xf]
    %v310 = vld [vmem:[#allocation7 + $0x30] sm:$0xf]
    %v311 = vld [vmem:[#allocation7 + $0x34] sm:$0xf]
    %v312 = vld [vmem:[#allocation7 + $0x38] sm:$0xf]
    %v313 = vld [vmem:[#allocation7 + $0x3c] sm:$0xf]
    %v314 = vld [vmem:[#allocation7 + $0x40] sm:$0xf]
    %v315 = vld [vmem:[#allocation7 + $0x44] sm:$0xf]
    %v316 = vld [vmem:[#allocation7 + $0x48] sm:$0xf]
    %v317 = vld [vmem:[#allocation7 + $0x4c] sm:$0xf]
    %v318 = vld [vmem:[#allocation7 + $0x50] sm:$0xf]
    %v319 = vld [vmem:[#allocation7 + $0x54] sm:$0xf]
    %v320 = vld [vmem:[#allocation7 + $0x58] sm:$0xf]
    %v321 = vld [vmem:[#allocation7 + $0x5c] sm:$0xf]
    %v322 = vld [vmem:[#allocation7 + $0x60] sm:$0xf]
    %v323 = vld [vmem:[#allocation7 + $0x64] sm:$0xf]
    %v324 = vld [vmem:[#allocation7 + $0x68] sm:$0xf]
    %v325 = vld [vmem:[#allocation7 + $0x6c] sm:$0xf]
    %v326 = vld [vmem:[#allocation7 + $0x70] sm:$0xf]
    %v327 = vld [vmem:[#allocation7 + $0x74] sm:$0xf]
    %v328 = vld [vmem:[#allocation7 + $0x78] sm:$0xf]
    %v329 = vld [vmem:[#allocation7 + $0x7c] sm:$0xf]
    %v330 = vld [vmem:[#allocation7 + $0x80] sm:$0xf]
    %v331 = vld [vmem:[#allocation7 + $0x84] sm:$0xf]
    %v332 = vld [vmem:[#allocation7 + $0x88] sm:$0xf]
    %v333 = vld [vmem:[#allocation7 + $0x8c] sm:$0xf]
    %v334 = vld [vmem:[#allocation7 + $0x90] sm:$0xf]
    %v335 = vld [vmem:[#allocation7 + $0x94] sm:$0xf]
    %v336 = vld [vmem:[#allocation7 + $0x98] sm:$0xf]
    %v337 = vld [vmem:[#allocation7 + $0x9c] sm:$0xf]
    %v338 = vld [vmem:[#allocation7 + $0xa0] sm:$0xf]
    %v339 = vld [vmem:[#allocation7 + $0xa4] sm:$0xf]
    %v340 = vld [vmem:[#allocation7 + $0xa8] sm:$0xf]
    %v341 = vld [vmem:[#allocation7 + $0xac] sm:$0xf]
    %v342 = vld [vmem:[#allocation7 + $0xb0] sm:$0xf]
    %v343 = vld [vmem:[#allocation7 + $0xb4] sm:$0xf]
    %v344 = vld [vmem:[#allocation7 + $0xb8] sm:$0xf]
    %v345 = vld [vmem:[#allocation7 + $0xbc] sm:$0xf]
    %v346 = vld [vmem:[%s5] sm:$0x7]
    %v347 = vld [vmem:[#allocation8] sm:$0xf]
    %v348 = vld [vmem:[#allocation8 + $0x4] sm:$0xf]
    %v349 = vld [vmem:[#allocation8 + $0x8] sm:$0xf]
    %v350 = vld [vmem:[#allocation8 + $0xc] sm:$0xf]
    %v351 = vld [vmem:[#allocation8 + $0x10] sm:$0xf]
    %v352 = vld [vmem:[#allocation8 + $0x14] sm:$0xf]
    %v353 = vld [vmem:[#allocation8 + $0x18] sm:$0xf]
    %v354 = vld [vmem:[#allocation8 + $0x1c] sm:$0xf]
    %v355 = vld [vmem:[#allocation8 + $0x20] sm:$0xf]
    %v356 = vld [vmem:[#allocation8 + $0x24] sm:$0xf]
    %v357 = vld [vmem:[#allocation8 + $0x28] sm:$0xf]
    %v358 = vld [vmem:[#allocation8 + $0x2c] sm:$0xf]
    %v359 = vld [vmem:[#allocation8 + $0x30] sm:$0xf]
    %v360 = vld [vmem:[#allocation8 + $0x34] sm:$0xf]
    %v361 = vld [vmem:[#allocation8 + $0x38] sm:$0xf]
    %v362 = vld [vmem:[#allocation8 + $0x3c] sm:$0xf]
    %v363 = vld [vmem:[#allocation10] sm:$0x1]
    %v364 = vpack.c.bf16 %v296, %v295
    %v366 = vlaneseq
    %v367 = vshrl.u32 %v366, 7
    %v368 = vsub.s32 0, %v367
    %v369 = vrot.slane %v346, %v368
    %v370 = vlaneseq
    %v371 = vshrl.u32 %v370, 7
    %v372 = vsub.s32 1, %v371
    %v373 = vrot.slane %v346, %v372
    %v374 = vlaneseq
    %v375 = vshrl.u32 %v374, 7
    %v376 = vsub.s32 2, %v375
    %v377 = vrot.slane %v346, %v376
    %v429 = vunpack.c.l.b16 %v298
    %v430 = vunpack.c.l.b16 %v299
    %v431 = vunpack.c.l.b16 %v300
    %v432 = vunpack.c.l.b16 %v301
    %v433 = vunpack.c.l.b16 %v302
    %v434 = vunpack.c.l.b16 %v303
    %v435 = vunpack.c.l.b16 %v304
    %v436 = vunpack.c.l.b16 %v305
    %v437 = vunpack.c.l.b16 %v306
    %v438 = vunpack.c.l.b16 %v307
    %v439 = vunpack.c.l.b16 %v308
    %v440 = vunpack.c.l.b16 %v309
    %v441 = vunpack.c.l.b16 %v310
    %v442 = vunpack.c.l.b16 %v311
    %v443 = vunpack.c.l.b16 %v312
    %v444 = vunpack.c.l.b16 %v313
    %v445 = vunpack.c.l.b16 %v314
    %v446 = vunpack.c.l.b16 %v315
    %v447 = vunpack.c.l.b16 %v316
    %v448 = vunpack.c.l.b16 %v317
    %v449 = vunpack.c.l.b16 %v318
    %v450 = vunpack.c.l.b16 %v319
    %v451 = vunpack.c.l.b16 %v320
    %v452 = vunpack.c.l.b16 %v321
    %v453 = vunpack.c.l.b16 %v322
    %v454 = vunpack.c.l.b16 %v323
    %v455 = vunpack.c.l.b16 %v324
    %v456 = vunpack.c.l.b16 %v325
    %v457 = vunpack.c.l.b16 %v326
    %v458 = vunpack.c.l.b16 %v327
    %v459 = vunpack.c.l.b16 %v328
    %v460 = vunpack.c.l.b16 %v329
    %v461 = vunpack.c.l.b16 %v330
    %v462 = vunpack.c.l.b16 %v331
    %v463 = vunpack.c.l.b16 %v332
    %v464 = vunpack.c.l.b16 %v333
    %v465 = vunpack.c.l.b16 %v334
    %v466 = vunpack.c.l.b16 %v335
    %v467 = vunpack.c.l.b16 %v336
    %v468 = vunpack.c.l.b16 %v337
    %v469 = vunpack.c.l.b16 %v338
    %v470 = vunpack.c.l.b16 %v339
    %v471 = vunpack.c.l.b16 %v340
    %v472 = vunpack.c.l.b16 %v341
    %v473 = vunpack.c.l.b16 %v342
    %v474 = vunpack.c.l.b16 %v343
    %v475 = vunpack.c.l.b16 %v344
    %v476 = vunpack.c.l.b16 %v345
    %v477 = vpack.c.b16 %v430, %v429
    %v478 = vpack.c.b16 %v432, %v431
    %v479 = vpack.c.b16 %v434, %v433
    %v480 = vpack.c.b16 %v436, %v435
    %v481 = vpack.c.b16 %v438, %v437
    %v482 = vpack.c.b16 %v440, %v439
    %v483 = vpack.c.b16 %v442, %v441
    %v484 = vpack.c.b16 %v444, %v443
    %v485 = vpack.c.b16 %v446, %v445
    %v486 = vpack.c.b16 %v448, %v447
    %v487 = vpack.c.b16 %v450, %v449
    %v488 = vpack.c.b16 %v452, %v451
    %v489 = vpack.c.b16 %v454, %v453
    %v490 = vpack.c.b16 %v456, %v455
    %v491 = vpack.c.b16 %v458, %v457
    %v492 = vpack.c.b16 %v460, %v459
    %v493 = vpack.c.b16 %v462, %v461
    %v494 = vpack.c.b16 %v464, %v463
    %v495 = vpack.c.b16 %v466, %v465
    %v496 = vpack.c.b16 %v468, %v467
    %v497 = vpack.c.b16 %v470, %v469
    %v498 = vpack.c.b16 %v472, %v471
    %v499 = vpack.c.b16 %v474, %v473
    %v500 = vpack.c.b16 %v476, %v475
    %525 = vmatprep.subr.bf16.mxu0 0
    %526 = vmatpush1.bf16.xpose.msra.mxu0 %v477
    %527 = vmatprep.subr.bf16.mxu0 0
    %528 = vmatpush1.bf16.xpose.msra.mxu0 %v478
    %529 = vmatprep.subr.bf16.mxu0 0
    %530 = vmatpush1.bf16.xpose.msra.mxu0 %v479
    %531 = vmatprep.subr.bf16.mxu0 0
    %532 = vmatpush1.bf16.xpose.msra.mxu0 %v480
    %533 = vmatprep.subr.bf16.mxu0 0
    %534 = vmatpush1.bf16.xpose.msra.mxu0 %v481
    %535 = vmatprep.subr.bf16.mxu0 0
    %536 = vmatpush1.bf16.xpose.msra.mxu0 %v482
    %537 = vmatprep.subr.bf16.mxu0 0
    %538 = vmatpush1.bf16.xpose.msra.mxu0 %v483
    %539 = vmatprep.subr.bf16.mxu0 0
    %540 = vmatpush1.bf16.xpose.msra.mxu0 %v484
    %541 = vmatprep.subr.bf16.mxu0 0
    %542 = vmatpush1.bf16.xpose.msra.mxu0 %v485
    %543 = vmatprep.subr.bf16.mxu0 0
    %544 = vmatpush1.bf16.xpose.msra.mxu0 %v486
    %545 = vmatprep.subr.bf16.mxu0 0
    %546 = vmatpush1.bf16.xpose.msra.mxu0 %v487
    %547 = vmatprep.subr.bf16.mxu0 0
    %548 = vmatpush1.bf16.xpose.msra.mxu0 %v488
    %549 = vmatprep.subr.bf16.mxu0 0
    %550 = vmatpush1.bf16.xpose.msra.mxu0 %v489
    %551 = vmatprep.subr.bf16.mxu0 0
    %552 = vmatpush1.bf16.xpose.msra.mxu0 %v490
    %553 = vmatprep.subr.bf16.mxu0 0
    %554 = vmatpush1.bf16.xpose.msra.mxu0 %v491
    %555 = vmatprep.subr.bf16.mxu0 0
    %556 = vmatpush1.bf16.xpose.msra.mxu0 %v492
    %557 = vmatprep.mubr.bf16.mxu0 0
    %558 = vmatmul.mubr.bf16.gmra.mrb[0].mxu0 %v364
    %v559 = vpop.f32.mrb[0].mxu0
    %v560 = vadd.f32 %v369, %v559
    %v561 = vpop.f32.mrb[0].mxu0
    %v562 = vadd.f32 %v373, %v561
    %v563 = vpop.f32.mrb[0].mxu0
    %v564 = vadd.f32 %v369, %v563
    %v565 = vpop.f32.mrb[0].mxu0
    %v566 = vadd.f32 %v373, %v565
    %567 = vdwg.mxu0
    %568 = vmatprep.subr.bf16.mxu0 0
    %569 = vmatpush1.bf16.xpose.msra.mxu0 %v493
    %570 = vmatprep.subr.bf16.mxu0 0
    %571 = vmatpush1.bf16.xpose.msra.mxu0 %v494
    %572 = vmatprep.subr.bf16.mxu0 0
    %573 = vmatpush1.bf16.xpose.msra.mxu0 %v495
    %574 = vmatprep.subr.bf16.mxu0 0
    %575 = vmatpush1.bf16.xpose.msra.mxu0 %v496
    %576 = vmatprep.subr.bf16.mxu0 0
    %577 = vmatpush1.bf16.xpose.msra.mxu0 %v497
    %578 = vmatprep.subr.bf16.mxu0 0
    %579 = vmatpush1.bf16.xpose.msra.mxu0 %v498
    %580 = vmatprep.subr.bf16.mxu0 0
    %581 = vmatpush1.bf16.xpose.msra.mxu0 %v499
    %582 = vmatprep.subr.bf16.mxu0 0
    %583 = vmatpush1.bf16.xpose.msra.mxu0 %v500
    %584 = vmatprep.subr.bf16.mxu0 0
    %585 = vmatpush1.bf16.xpose.msra.mxu0 0
    %586 = vmatprep.subr.bf16.mxu0 0
    %587 = vmatpush1.bf16.xpose.msra.mxu0 0
    %588 = vmatprep.subr.bf16.mxu0 0
    %589 = vmatpush1.bf16.xpose.msra.mxu0 0
    %590 = vmatprep.subr.bf16.mxu0 0
    %591 = vmatpush1.bf16.xpose.msra.mxu0 0
    %592 = vmatprep.subr.bf16.mxu0 0
    %593 = vmatpush1.bf16.xpose.msra.mxu0 0
    %594 = vmatprep.subr.bf16.mxu0 0
    %595 = vmatpush1.bf16.xpose.msra.mxu0 0
    %596 = vmatprep.subr.bf16.mxu0 0
    %597 = vmatpush1.bf16.xpose.msra.mxu0 0
    %598 = vmatprep.subr.bf16.mxu0 0
    %599 = vmatpush1.bf16.xpose.msra.mxu0 0
    %600 = vmatprep.mubr.bf16.mxu0 0
    %601 = vmatmul.mubr.bf16.gmra.mrb[0].mxu0 %v364
    %v602 = vpop.f32.mrb[0].mxu0
    %v603 = vadd.f32 %v377, %v602
    %v604 = vpop.f32.mrb[0].mxu0
    %v605 = vpop.f32.mrb[0].mxu0
    %v606 = vadd.f32 %v377, %v605
    %v607 = vpop.f32.mrb[0].mxu0
    %608 = vdwg.mxu0
    %v611 = vunpack.c.l.s4 1966171168
    %v612 = vunpack.c.0.s8 %v611
    %v613 = vlaneseq
    %v614 = vshrl.u32 %v613, 7
    %v615 = vsub.s32 %v612, %v614
    %v616 = vrot.slane %v297, %v615
    %v617 = vcombine.high %v616, %v616
    %v619 = vunpack.c.l.s4 1966171168
    %v620 = vunpack.c.0.s8 %v619
    %v621 = vlaneseq
    %v622 = vshrl.u32 %v621, 7
    %v623 = vsub.s32 %v620, %v622
    %v624 = vrot.slane %v616, %v623
    %v626 = vunpack.c.l.s4 1966171168
    %v627 = vunpack.c.0.s8 %v626
    %v628 = vlaneseq
    %v629 = vshrl.u32 %v628, 7
    %v630 = vsub.s32 %v627, %v629
    %v631 = vrot.slane %v617, %v630
    %v632 = vpack.c.bf16 %v560, %v560
    %v633 = vpack.c.bf16 %v564, %v564
    %v634 = vpack.c.bf16 %v562, %v562
    %v635 = vpack.c.bf16 %v566, %v566
    %v636 = vpack.c.bf16 %v603, %v603
    %v637 = vpack.c.bf16 %v606, %v606
    %vm638 = vcmask 523264
    %v640 = vsel %vm638, %v632, 0
    %v643 = vsel %vm638, %v634, 0
    %645 = vmatprep.subr.bf16.mxu0 0
    %646 = vmatpush1.bf16.xpose.msra.mxu0 %v643
    %647 = vmatprep.subr.bf16.mxu0 0
    %648 = vmatpush1.bf16.xpose.msra.mxu0 0
    %649 = vmatprep.subr.bf16.mxu0 0
    %650 = vmatpush1.bf16.xpose.msra.mxu0 0
    %651 = vmatprep.subr.bf16.mxu0 0
    %652 = vmatpush1.bf16.xpose.msra.mxu0 0
    %653 = vmatprep.subr.bf16.mxu0 0
    %654 = vmatpush1.bf16.xpose.msra.mxu0 0
    %655 = vmatprep.subr.bf16.mxu0 0
    %656 = vmatpush1.bf16.xpose.msra.mxu0 0
    %657 = vmatprep.subr.bf16.mxu0 0
    %658 = vmatpush1.bf16.xpose.msra.mxu0 0
    %659 = vmatprep.subr.bf16.mxu0 0
    %660 = vmatpush1.bf16.xpose.msra.mxu0 0
    %661 = vmatprep.subr.bf16.mxu0 0
    %662 = vmatpush1.bf16.xpose.msra.mxu0 0
    %663 = vmatprep.subr.bf16.mxu0 0
    %664 = vmatpush1.bf16.xpose.msra.mxu0 0
    %665 = vmatprep.subr.bf16.mxu0 0
    %666 = vmatpush1.bf16.xpose.msra.mxu0 0
    %667 = vmatprep.subr.bf16.mxu0 0
    %668 = vmatpush1.bf16.xpose.msra.mxu0 0
    %669 = vmatprep.subr.bf16.mxu0 0
    %670 = vmatpush1.bf16.xpose.msra.mxu0 0
    %671 = vmatprep.subr.bf16.mxu0 0
    %672 = vmatpush1.bf16.xpose.msra.mxu0 0
    %673 = vmatprep.subr.bf16.mxu0 0
    %674 = vmatpush1.bf16.xpose.msra.mxu0 0
    %675 = vmatprep.subr.bf16.mxu0 0
    %676 = vmatpush1.bf16.xpose.msra.mxu0 0
    %677 = vmatprep.mubr.bf16.mxu0 0
    %678 = vmatmul.mubr.bf16.gmra.mrb[0].mxu0 %v640
    %v679 = vpop.f32.mrb[0].mxu0
    %v680 = vadd.f32 0.0, %v679
    %v681 = vpop.f32.mrb[0].mxu0
    %v682 = vpop.f32.mrb[0].mxu0
    %v683 = vpop.f32.mrb[0].mxu0
    %684 = vdwg.mxu0
    %v686 = vsel %vm638, %v633, 0
    %v689 = vsel %vm638, %v635, 0
    %691 = vmatprep.subr.bf16.mxu0 0
    %692 = vmatpush1.bf16.xpose.msra.mxu0 %v689
    %693 = vmatprep.subr.bf16.mxu0 0
    %694 = vmatpush1.bf16.xpose.msra.mxu0 0
    %695 = vmatprep.subr.bf16.mxu0 0
    %696 = vmatpush1.bf16.xpose.msra.mxu0 0
    %697 = vmatprep.subr.bf16.mxu0 0
    %698 = vmatpush1.bf16.xpose.msra.mxu0 0
    %699 = vmatprep.subr.bf16.mxu0 0
    %700 = vmatpush1.bf16.xpose.msra.mxu0 0
    %701 = vmatprep.subr.bf16.mxu0 0
    %702 = vmatpush1.bf16.xpose.msra.mxu0 0
    %703 = vmatprep.subr.bf16.mxu0 0
    %704 = vmatpush1.bf16.xpose.msra.mxu0 0
    %705 = vmatprep.subr.bf16.mxu0 0
    %706 = vmatpush1.bf16.xpose.msra.mxu0 0
    %707 = vmatprep.subr.bf16.mxu0 0
    %708 = vmatpush1.bf16.xpose.msra.mxu0 0
    %709 = vmatprep.subr.bf16.mxu0 0
    %710 = vmatpush1.bf16.xpose.msra.mxu0 0
    %711 = vmatprep.subr.bf16.mxu0 0
    %712 = vmatpush1.bf16.xpose.msra.mxu0 0
    %713 = vmatprep.subr.bf16.mxu0 0
    %714 = vmatpush1.bf16.xpose.msra.mxu0 0
    %715 = vmatprep.subr.bf16.mxu0 0
    %716 = vmatpush1.bf16.xpose.msra.mxu0 0
    %717 = vmatprep.subr.bf16.mxu0 0
    %718 = vmatpush1.bf16.xpose.msra.mxu0 0
    %719 = vmatprep.subr.bf16.mxu0 0
    %720 = vmatpush1.bf16.xpose.msra.mxu0 0
    %721 = vmatprep.subr.bf16.mxu0 0
    %722 = vmatpush1.bf16.xpose.msra.mxu0 0
    %723 = vmatprep.mubr.bf16.mxu0 0
    %724 = vmatmul.mubr.bf16.gmra.mrb[0].mxu0 %v686
    %v725 = vpop.f32.mrb[0].mxu0
    %v726 = vadd.f32 0.0, %v725
    %v727 = vpop.f32.mrb[0].mxu0
    %v728 = vpop.f32.mrb[0].mxu0
    %v729 = vpop.f32.mrb[0].mxu0
    %730 = vdwg.mxu0
    %v731 = vmul.f32 %v680, 0.125
    %v732 = vmul.f32 %v726, 0.125
    %v733 = vlaneseq
    %v734 = vshrl.u32 %v733, 7
    %v735 = vsub.s32 0, %v734
    %v736 = vrot.slane %v624, %v735
    %v737 = vlaneseq
    %v738 = vshrl.u32 %v737, 7
    %v739 = vsub.s32 0, %v738
    %v740 = vrot.slane %v631, %v739
    %v743 = vadd.f32 %v731, %v736
    %v744 = vadd.f32 %v732, %v740
    %vm745 = vcmask 64512
    %v746 = vsel %vm745, %v743, -inf
    %747 = vmax.xlane.f32.xlu0 %v746
    %v748 = vpop.xlane.xlu0 %747
    %v749 = vsel %vm745, %v744, -inf
    %750 = vmax.xlane.f32.xlu0 %v749
    %v751 = vpop.xlane.xlu0 %750
    %v752 = vsub.f32 %v743, %v748
    %v753 = vsub.f32 %v744, %v751
    %v754 = vmul.f32 %v752, 1.442695
    %v755 = vpow.pop %v754
    %v756 = vmul.f32 %v753, 1.442695
    %v757 = vpow.pop %v756
    %v758 = vsel %vm745, %v755, 0.0
    %759 = vadd.xlane.f32.xlu0 %v758
    %v760 = vpop.xlane.xlu0 %759
    %v761 = vsel %vm745, %v757, 0.0
    %762 = vadd.xlane.f32.xlu0 %v761
    %v763 = vpop.xlane.xlu0 %762
    %v764 = vrcp.pop %v760
    %v765 = vrcp.pop %v763
    %v766 = vmul.f32 %v755, %v764
    %v767 = vmul.f32 %v757, %v765
    %v768 = vpack.c.bf16 %v766, %v766
    %v769 = vpack.c.bf16 %v767, %v767
    %v771 = vsel %vm745, %v768, 0
    %vm773 = vcmask 1043456
    %v775 = vsel %vm773, %v636, 0
    %777 = vmatprep.subr.bf16.mxu0 0
    %778 = vmatpush1.bf16.msra.mxu0 %v775
    %779 = vmatprep.subr.bf16.mxu0 0
    %780 = vmatpush1.bf16.msra.mxu0 0
    %781 = vmatprep.subr.bf16.mxu0 0
    %782 = vmatpush1.bf16.msra.mxu0 0
    %783 = vmatprep.subr.bf16.mxu0 0
    %784 = vmatpush1.bf16.msra.mxu0 0
    %785 = vmatprep.subr.bf16.mxu0 0
    %786 = vmatpush1.bf16.msra.mxu0 0
    %787 = vmatprep.subr.bf16.mxu0 0
    %788 = vmatpush1.bf16.msra.mxu0 0
    %789 = vmatprep.subr.bf16.mxu0 0
    %790 = vmatpush1.bf16.msra.mxu0 0
    %791 = vmatprep.subr.bf16.mxu0 0
    %792 = vmatpush1.bf16.msra.mxu0 0
    %793 = vmatprep.subr.bf16.mxu0 0
    %794 = vmatpush1.bf16.msra.mxu0 0
    %795 = vmatprep.subr.bf16.mxu0 0
    %796 = vmatpush1.bf16.msra.mxu0 0
    %797 = vmatprep.subr.bf16.mxu0 0
    %798 = vmatpush1.bf16.msra.mxu0 0
    %799 = vmatprep.subr.bf16.mxu0 0
    %800 = vmatpush1.bf16.msra.mxu0 0
    %801 = vmatprep.subr.bf16.mxu0 0
    %802 = vmatpush1.bf16.msra.mxu0 0
    %803 = vmatprep.subr.bf16.mxu0 0
    %804 = vmatpush1.bf16.msra.mxu0 0
    %805 = vmatprep.subr.bf16.mxu0 0
    %806 = vmatpush1.bf16.msra.mxu0 0
    %807 = vmatprep.subr.bf16.mxu0 0
    %808 = vmatpush1.bf16.msra.mxu0 0
    %809 = vmatprep.mubr.bf16.mxu0 0
    %810 = vmatmul.mubr.bf16.gmra.mrb[0].mxu0 %v771
    %v811 = vpop.f32.mrb[0].mxu0
    %v812 = vadd.f32 0.0, %v811
    %v813 = vpop.f32.mrb[0].mxu0
    %v814 = vpop.f32.mrb[0].mxu0
    %v815 = vpop.f32.mrb[0].mxu0
    %816 = vdwg.mxu0
    %v818 = vsel %vm745, %v769, 0
    %v821 = vsel %vm773, %v637, 0
    %823 = vmatprep.subr.bf16.mxu0 0
    %824 = vmatpush1.bf16.msra.mxu0 %v821
    %825 = vmatprep.subr.bf16.mxu0 0
    %826 = vmatpush1.bf16.msra.mxu0 0
    %827 = vmatprep.subr.bf16.mxu0 0
    %828 = vmatpush1.bf16.msra.mxu0 0
    %829 = vmatprep.subr.bf16.mxu0 0
    %830 = vmatpush1.bf16.msra.mxu0 0
    %831 = vmatprep.subr.bf16.mxu0 0
    %832 = vmatpush1.bf16.msra.mxu0 0
    %833 = vmatprep.subr.bf16.mxu0 0
    %834 = vmatpush1.bf16.msra.mxu0 0
    %835 = vmatprep.subr.bf16.mxu0 0
    %836 = vmatpush1.bf16.msra.mxu0 0
    %837 = vmatprep.subr.bf16.mxu0 0
    %838 = vmatpush1.bf16.msra.mxu0 0
    %839 = vmatprep.subr.bf16.mxu0 0
    %840 = vmatpush1.bf16.msra.mxu0 0
    %841 = vmatprep.subr.bf16.mxu0 0
    %842 = vmatpush1.bf16.msra.mxu0 0
    %843 = vmatprep.subr.bf16.mxu0 0
    %844 = vmatpush1.bf16.msra.mxu0 0
    %845 = vmatprep.subr.bf16.mxu0 0
    %846 = vmatpush1.bf16.msra.mxu0 0
    %847 = vmatprep.subr.bf16.mxu0 0
    %848 = vmatpush1.bf16.msra.mxu0 0
    %849 = vmatprep.subr.bf16.mxu0 0
    %850 = vmatpush1.bf16.msra.mxu0 0
    %851 = vmatprep.subr.bf16.mxu0 0
    %852 = vmatpush1.bf16.msra.mxu0 0
    %853 = vmatprep.subr.bf16.mxu0 0
    %854 = vmatpush1.bf16.msra.mxu0 0
    %855 = vmatprep.mubr.bf16.mxu0 0
    %856 = vmatmul.mubr.bf16.gmra.mrb[0].mxu0 %v818
    %v857 = vpop.f32.mrb[0].mxu0
    %v858 = vadd.f32 0.0, %v857
    %v859 = vpop.f32.mrb[0].mxu0
    %v860 = vpop.f32.mrb[0].mxu0
    %v861 = vpop.f32.mrb[0].mxu0
    %862 = vdwg.mxu0
    %864 = vrot.lane.b32.xlu0 %v632, 64
    %v865 = vpop.permute.xlu0 %864
    %867 = vrot.lane.b32.xlu0 %v634, 64
    %v868 = vpop.permute.xlu0 %867
    %v870 = vsel %vm638, %v865, 0
    %v873 = vsel %vm638, %v868, 0
    %875 = vmatprep.subr.bf16.mxu0 0
    %876 = vmatpush1.bf16.xpose.msra.mxu0 %v873
    %877 = vmatprep.subr.bf16.mxu0 0
    %878 = vmatpush1.bf16.xpose.msra.mxu0 0
    %879 = vmatprep.subr.bf16.mxu0 0
    %880 = vmatpush1.bf16.xpose.msra.mxu0 0
    %881 = vmatprep.subr.bf16.mxu0 0
    %882 = vmatpush1.bf16.xpose.msra.mxu0 0
    %883 = vmatprep.subr.bf16.mxu0 0
    %884 = vmatpush1.bf16.xpose.msra.mxu0 0
    %885 = vmatprep.subr.bf16.mxu0 0
    %886 = vmatpush1.bf16.xpose.msra.mxu0 0
    %887 = vmatprep.subr.bf16.mxu0 0
    %888 = vmatpush1.bf16.xpose.msra.mxu0 0
    %889 = vmatprep.subr.bf16.mxu0 0
    %890 = vmatpush1.bf16.xpose.msra.mxu0 0
    %891 = vmatprep.subr.bf16.mxu0 0
    %892 = vmatpush1.bf16.xpose.msra.mxu0 0
    %893 = vmatprep.subr.bf16.mxu0 0
    %894 = vmatpush1.bf16.xpose.msra.mxu0 0
    %895 = vmatprep.subr.bf16.mxu0 0
    %896 = vmatpush1.bf16.xpose.msra.mxu0 0
    %897 = vmatprep.subr.bf16.mxu0 0
    %898 = vmatpush1.bf16.xpose.msra.mxu0 0
    %899 = vmatprep.subr.bf16.mxu0 0
    %900 = vmatpush1.bf16.xpose.msra.mxu0 0
    %901 = vmatprep.subr.bf16.mxu0 0
    %902 = vmatpush1.bf16.xpose.msra.mxu0 0
    %903 = vmatprep.subr.bf16.mxu0 0
    %904 = vmatpush1.bf16.xpose.msra.mxu0 0
    %905 = vmatprep.subr.bf16.mxu0 0
    %906 = vmatpush1.bf16.xpose.msra.mxu0 0
    %907 = vmatprep.mubr.bf16.mxu0 0
    %908 = vmatmul.mubr.bf16.gmra.mrb[0].mxu0 %v870
    %v909 = vpop.f32.mrb[0].mxu0
    %v910 = vadd.f32 0.0, %v909
    %v911 = vpop.f32.mrb[0].mxu0
    %v912 = vpop.f32.mrb[0].mxu0
    %v913 = vpop.f32.mrb[0].mxu0
    %914 = vdwg.mxu0
    %916 = vrot.lane.b32.xlu0 %v633, 64
    %v917 = vpop.permute.xlu0 %916
    %919 = vrot.lane.b32.xlu0 %v635, 64
    %v920 = vpop.permute.xlu0 %919
    %v922 = vsel %vm638, %v917, 0
    %v925 = vsel %vm638, %v920, 0
    %927 = vmatprep.subr.bf16.mxu0 0
    %928 = vmatpush1.bf16.xpose.msra.mxu0 %v925
    %929 = vmatprep.subr.bf16.mxu0 0
    %930 = vmatpush1.bf16.xpose.msra.mxu0 0
    %931 = vmatprep.subr.bf16.mxu0 0
    %932 = vmatpush1.bf16.xpose.msra.mxu0 0
    %933 = vmatprep.subr.bf16.mxu0 0
    %934 = vmatpush1.bf16.xpose.msra.mxu0 0
    %935 = vmatprep.subr.bf16.mxu0 0
    %936 = vmatpush1.bf16.xpose.msra.mxu0 0
    %937 = vmatprep.subr.bf16.mxu0 0
    %938 = vmatpush1.bf16.xpose.msra.mxu0 0
    %939 = vmatprep.subr.bf16.mxu0 0
    %940 = vmatpush1.bf16.xpose.msra.mxu0 0
    %941 = vmatprep.subr.bf16.mxu0 0
    %942 = vmatpush1.bf16.xpose.msra.mxu0 0
    %943 = vmatprep.subr.bf16.mxu0 0
    %944 = vmatpush1.bf16.xpose.msra.mxu0 0
    %945 = vmatprep.subr.bf16.mxu0 0
    %946 = vmatpush1.bf16.xpose.msra.mxu0 0
    %947 = vmatprep.subr.bf16.mxu0 0
    %948 = vmatpush1.bf16.xpose.msra.mxu0 0
    %949 = vmatprep.subr.bf16.mxu0 0
    %950 = vmatpush1.bf16.xpose.msra.mxu0 0
    %951 = vmatprep.subr.bf16.mxu0 0
    %952 = vmatpush1.bf16.xpose.msra.mxu0 0
    %953 = vmatprep.subr.bf16.mxu0 0
    %954 = vmatpush1.bf16.xpose.msra.mxu0 0
    %955 = vmatprep.subr.bf16.mxu0 0
    %956 = vmatpush1.bf16.xpose.msra.mxu0 0
    %957 = vmatprep.subr.bf16.mxu0 0
    %958 = vmatpush1.bf16.xpose.msra.mxu0 0
    %959 = vmatprep.mubr.bf16.mxu0 0
    %960 = vmatmul.mubr.bf16.gmra.mrb[0].mxu0 %v922
    %v961 = vpop.f32.mrb[0].mxu0
    %v962 = vadd.f32 0.0, %v961
    %v963 = vpop.f32.mrb[0].mxu0
    %v964 = vpop.f32.mrb[0].mxu0
    %v965 = vpop.f32.mrb[0].mxu0
    %966 = vdwg.mxu0
    %v967 = vmul.f32 %v910, 0.125
    %v968 = vmul.f32 %v962, 0.125
    %v969 = vadd.f32 %v967, %v736
    %v970 = vadd.f32 %v968, %v740
    %v971 = vsel %vm745, %v969, -inf
    %972 = vmax.xlane.f32.xlu0 %v971
    %v973 = vpop.xlane.xlu0 %972
    %v974 = vsel %vm745, %v970, -inf
    %975 = vmax.xlane.f32.xlu0 %v974
    %v976 = vpop.xlane.xlu0 %975
    %v977 = vsub.f32 %v969, %v973
    %v978 = vsub.f32 %v970, %v976
    %v979 = vmul.f32 %v977, 1.442695
    %v980 = vpow.pop %v979
    %v981 = vmul.f32 %v978, 1.442695
    %v982 = vpow.pop %v981
    %v983 = vsel %vm745, %v980, 0.0
    %984 = vadd.xlane.f32.xlu0 %v983
    %v985 = vpop.xlane.xlu0 %984
    %v986 = vsel %vm745, %v982, 0.0
    %987 = vadd.xlane.f32.xlu0 %v986
    %v988 = vpop.xlane.xlu0 %987
    %v989 = vrcp.pop %v985
    %v990 = vrcp.pop %v988
    %v991 = vmul.f32 %v980, %v989
    %v992 = vmul.f32 %v982, %v990
    %v993 = vpack.c.bf16 %v991, %v991
    %v994 = vpack.c.bf16 %v992, %v992
    %996 = vrot.lane.b32.xlu0 %v636, 64
    %v997 = vpop.permute.xlu0 %996
    %v999 = vsel %vm745, %v993, 0
    %v1002 = vsel %vm773, %v997, 0
    %1004 = vmatprep.subr.bf16.mxu0 0
    %1005 = vmatpush1.bf16.msra.mxu0 %v1002
    %1006 = vmatprep.subr.bf16.mxu0 0
    %1007 = vmatpush1.bf16.msra.mxu0 0
    %1008 = vmatprep.subr.bf16.mxu0 0
    %1009 = vmatpush1.bf16.msra.mxu0 0
    %1010 = vmatprep.subr.bf16.mxu0 0
    %1011 = vmatpush1.bf16.msra.mxu0 0
    %1012 = vmatprep.subr.bf16.mxu0 0
    %1013 = vmatpush1.bf16.msra.mxu0 0
    %1014 = vmatprep.subr.bf16.mxu0 0
    %1015 = vmatpush1.bf16.msra.mxu0 0
    %1016 = vmatprep.subr.bf16.mxu0 0
    %1017 = vmatpush1.bf16.msra.mxu0 0
    %1018 = vmatprep.subr.bf16.mxu0 0
    %1019 = vmatpush1.bf16.msra.mxu0 0
    %1020 = vmatprep.subr.bf16.mxu0 0
    %1021 = vmatpush1.bf16.msra.mxu0 0
    %1022 = vmatprep.subr.bf16.mxu0 0
    %1023 = vmatpush1.bf16.msra.mxu0 0
    %1024 = vmatprep.subr.bf16.mxu0 0
    %1025 = vmatpush1.bf16.msra.mxu0 0
    %1026 = vmatprep.subr.bf16.mxu0 0
    %1027 = vmatpush1.bf16.msra.mxu0 0
    %1028 = vmatprep.subr.bf16.mxu0 0
    %1029 = vmatpush1.bf16.msra.mxu0 0
    %1030 = vmatprep.subr.bf16.mxu0 0
    %1031 = vmatpush1.bf16.msra.mxu0 0
    %1032 = vmatprep.subr.bf16.mxu0 0
    %1033 = vmatpush1.bf16.msra.mxu0 0
    %1034 = vmatprep.subr.bf16.mxu0 0
    %1035 = vmatpush1.bf16.msra.mxu0 0
    %1036 = vmatprep.mubr.bf16.mxu0 0
    %1037 = vmatmul.mubr.bf16.gmra.mrb[0].mxu0 %v999
    %v1038 = vpop.f32.mrb[0].mxu0
    %v1039 = vadd.f32 0.0, %v1038
    %v1040 = vpop.f32.mrb[0].mxu0
    %v1041 = vpop.f32.mrb[0].mxu0
    %v1042 = vpop.f32.mrb[0].mxu0
    %1043 = vdwg.mxu0
    %1045 = vrot.lane.b32.xlu0 %v637, 64
    %v1046 = vpop.permute.xlu0 %1045
    %v1048 = vsel %vm745, %v994, 0
    %v1051 = vsel %vm773, %v1046, 0
    %1053 = vmatprep.subr.bf16.mxu0 0
    %1054 = vmatpush1.bf16.msra.mxu0 %v1051
    %1055 = vmatprep.subr.bf16.mxu0 0
    %1056 = vmatpush1.bf16.msra.mxu0 0
    %1057 = vmatprep.subr.bf16.mxu0 0
    %1058 = vmatpush1.bf16.msra.mxu0 0
    %1059 = vmatprep.subr.bf16.mxu0 0
    %1060 = vmatpush1.bf16.msra.mxu0 0
    %1061 = vmatprep.subr.bf16.mxu0 0
    %1062 = vmatpush1.bf16.msra.mxu0 0
    %1063 = vmatprep.subr.bf16.mxu0 0
    %1064 = vmatpush1.bf16.msra.mxu0 0
    %1065 = vmatprep.subr.bf16.mxu0 0
    %1066 = vmatpush1.bf16.msra.mxu0 0
    %1067 = vmatprep.subr.bf16.mxu0 0
    %1068 = vmatpush1.bf16.msra.mxu0 0
    %1069 = vmatprep.subr.bf16.mxu0 0
    %1070 = vmatpush1.bf16.msra.mxu0 0
    %1071 = vmatprep.subr.bf16.mxu0 0
    %1072 = vmatpush1.bf16.msra.mxu0 0
    %1073 = vmatprep.subr.bf16.mxu0 0
    %1074 = vmatpush1.bf16.msra.mxu0 0
    %1075 = vmatprep.subr.bf16.mxu0 0
    %1076 = vmatpush1.bf16.msra.mxu0 0
    %1077 = vmatprep.subr.bf16.mxu0 0
    %1078 = vmatpush1.bf16.msra.mxu0 0
    %1079 = vmatprep.subr.bf16.mxu0 0
    %1080 = vmatpush1.bf16.msra.mxu0 0
    %1081 = vmatprep.subr.bf16.mxu0 0
    %1082 = vmatpush1.bf16.msra.mxu0 0
    %1083 = vmatprep.subr.bf16.mxu0 0
    %1084 = vmatpush1.bf16.msra.mxu0 0
    %1085 = vmatprep.mubr.bf16.mxu0 0
    %1086 = vmatmul.mubr.bf16.gmra.mrb[0].mxu0 %v1048
    %v1087 = vpop.f32.mrb[0].mxu0
    %v1088 = vadd.f32 0.0, %v1087
    %v1089 = vpop.f32.mrb[0].mxu0
    %v1090 = vpop.f32.mrb[0].mxu0
    %v1091 = vpop.f32.mrb[0].mxu0
    %1092 = vdwg.mxu0
    %1095 = vrot.lane.b32.xlu0 %v1039, 64
    %v1096 = vpop.permute.xlu0 %1095
    %1097 = vrot.lane.b32.xlu0 %v1088, 64
    %v1098 = vpop.permute.xlu0 %1097
    %v1101 = vsel %vm638, %v812, %v1096
    %v1102 = vsel %vm638, %v858, %v1098
    %v1103 = vpack.c.bf16 %v1102, %v1101
    %v1105 = vlaneseq
    %v1106 = vshrl.u32 %v1105, 7
    %v1107 = vsub.s32 0, %v1106
    %v1108 = vrot.slane %v363, %v1107
    %v1126 = vunpack.c.l.b16 %v347
    %v1127 = vunpack.c.l.b16 %v348
    %v1128 = vunpack.c.l.b16 %v349
    %v1129 = vunpack.c.l.b16 %v350
    %v1130 = vunpack.c.l.b16 %v351
    %v1131 = vunpack.c.l.b16 %v352
    %v1132 = vunpack.c.l.b16 %v353
    %v1133 = vunpack.c.l.b16 %v354
    %v1134 = vunpack.c.l.b16 %v355
    %v1135 = vunpack.c.l.b16 %v356
    %v1136 = vunpack.c.l.b16 %v357
    %v1137 = vunpack.c.l.b16 %v358
    %v1138 = vunpack.c.l.b16 %v359
    %v1139 = vunpack.c.l.b16 %v360
    %v1140 = vunpack.c.l.b16 %v361
    %v1141 = vunpack.c.l.b16 %v362
    %v1142 = vpack.c.b16 %v1127, %v1126
    %v1143 = vpack.c.b16 %v1129, %v1128
    %v1144 = vpack.c.b16 %v1131, %v1130
    %v1145 = vpack.c.b16 %v1133, %v1132
    %v1146 = vpack.c.b16 %v1135, %v1134
    %v1147 = vpack.c.b16 %v1137, %v1136
    %v1148 = vpack.c.b16 %v1139, %v1138
    %v1149 = vpack.c.b16 %v1141, %v1140
    %1158 = vmatprep.subr.bf16.mxu0 0
    %1159 = vmatpush1.bf16.xpose.msra.mxu0 %v1142
    %1160 = vmatprep.subr.bf16.mxu0 0
    %1161 = vmatpush1.bf16.xpose.msra.mxu0 %v1143
    %1162 = vmatprep.subr.bf16.mxu0 0
    %1163 = vmatpush1.bf16.xpose.msra.mxu0 %v1144
    %1164 = vmatprep.subr.bf16.mxu0 0
    %1165 = vmatpush1.bf16.xpose.msra.mxu0 %v1145
    %1166 = vmatprep.subr.bf16.mxu0 0
    %1167 = vmatpush1.bf16.xpose.msra.mxu0 %v1146
    %1168 = vmatprep.subr.bf16.mxu0 0
    %1169 = vmatpush1.bf16.xpose.msra.mxu0 %v1147
    %1170 = vmatprep.subr.bf16.mxu0 0
    %1171 = vmatpush1.bf16.xpose.msra.mxu0 %v1148
    %1172 = vmatprep.subr.bf16.mxu0 0
    %1173 = vmatpush1.bf16.xpose.msra.mxu0 %v1149
    %1174 = vmatprep.subr.bf16.mxu0 0
    %1175 = vmatpush1.bf16.xpose.msra.mxu0 0
    %1176 = vmatprep.subr.bf16.mxu0 0
    %1177 = vmatpush1.bf16.xpose.msra.mxu0 0
    %1178 = vmatprep.subr.bf16.mxu0 0
    %1179 = vmatpush1.bf16.xpose.msra.mxu0 0
    %1180 = vmatprep.subr.bf16.mxu0 0
    %1181 = vmatpush1.bf16.xpose.msra.mxu0 0
    %1182 = vmatprep.subr.bf16.mxu0 0
    %1183 = vmatpush1.bf16.xpose.msra.mxu0 0
    %1184 = vmatprep.subr.bf16.mxu0 0
    %1185 = vmatpush1.bf16.xpose.msra.mxu0 0
    %1186 = vmatprep.subr.bf16.mxu0 0
    %1187 = vmatpush1.bf16.xpose.msra.mxu0 0
    %1188 = vmatprep.subr.bf16.mxu0 0
    %1189 = vmatpush1.bf16.xpose.msra.mxu0 0
    %1190 = vmatprep.mubr.bf16.mxu0 0
    %1191 = vmatmul.mubr.bf16.gmra.mrb[0].mxu0 %v1103
    %v1192 = vpop.f32.mrb[0].mxu0
    %v1193 = vadd.f32 %v1108, %v1192
    %v1194 = vpop.f32.mrb[0].mxu0
    %v1195 = vpop.f32.mrb[0].mxu0
    %v1196 = vadd.f32 %v1108, %v1195
    %v1197 = vpop.f32.mrb[0].mxu0
    %1198 = vdwg.mxu0
    %v1199 = vadd.f32 %v295, %v1193
    %v1200 = vadd.f32 %v296, %v1196
    %v1201 = vld [vmem:[%s8] sm:$0x1]
    %v1202 = vld [vmem:[%s9] sm:$0x1]
    %1203 = vadd.xlane.f32.xlu0 %v1199
    %v1204 = vpop.xlane.xlu0 %1203
    %1205 = vadd.xlane.f32.xlu0 %v1200
    %v1206 = vpop.xlane.xlu0 %1205
    %v1207 = vmul.f32 %v1204, %v262
    %v1208 = vmul.f32 %v1206, %v262
    %v1209 = vsub.f32 %v1199, %v1207
    %v1210 = vsub.f32 %v1200, %v1208
    %v1211 = vmul.f32 %v1209, %v1209
    %v1212 = vmul.f32 %v1210, %v1210
    %1213 = vadd.xlane.f32.xlu0 %v1211
    %v1214 = vpop.xlane.xlu0 %1213
    %1215 = vadd.xlane.f32.xlu0 %v1212
    %v1216 = vpop.xlane.xlu0 %1215
    %v1217 = vmul.f32 %v1214, %v262
    %v1218 = vmul.f32 %v1216, %v262
    %v1219 = vadd.f32 %v1217, 1e-12
    %v1220 = vadd.f32 %v1218, 1e-12
    %v1221 = vrsqrt.pop %v1219
    %v1222 = vrsqrt.pop %v1220
    %v1223 = vmul.f32 %v1209, %v1221
    %v1224 = vmul.f32 %v1210, %v1222
    %v1226 = vlaneseq
    %v1227 = vshrl.u32 %v1226, 7
    %v1228 = vsub.s32 0, %v1227
    %v1229 = vrot.slane %v1201, %v1228
    %v1231 = vmul.f32 %v1223, %v1229
    %v1232 = vmul.f32 %v1224, %v1229
    %v1234 = vlaneseq
    %v1235 = vshrl.u32 %v1234, 7
    %v1236 = vsub.s32 0, %v1235
    %v1237 = vrot.slane %v1202, %v1236
    %v1239 = vadd.f32 %v1231, %v1237
    %v1240 = vadd.f32 %v1232, %v1237
    %v1241 = vld [vmem:[#allocation11] sm:$0xf]
    %v1242 = vld [vmem:[#allocation11 + $0x4] sm:$0xf]
    %v1243 = vld [vmem:[#allocation11 + $0x8] sm:$0xf]
    %v1244 = vld [vmem:[#allocation11 + $0xc] sm:$0xf]
    %v1245 = vld [vmem:[#allocation11 + $0x10] sm:$0xf]
    %v1246 = vld [vmem:[#allocation11 + $0x14] sm:$0xf]
    %v1247 = vld [vmem:[#allocation11 + $0x18] sm:$0xf]
    %v1248 = vld [vmem:[#allocation11 + $0x1c] sm:$0xf]
    %v1249 = vld [vmem:[#allocation11 + $0x20] sm:$0xf]
    %v1250 = vld [vmem:[#allocation11 + $0x24] sm:$0xf]
    %v1251 = vld [vmem:[#allocation11 + $0x28] sm:$0xf]
    %v1252 = vld [vmem:[#allocation11 + $0x2c] sm:$0xf]
    %v1253 = vld [vmem:[#allocation11 + $0x30] sm:$0xf]
    %v1254 = vld [vmem:[#allocation11 + $0x34] sm:$0xf]
    %v1255 = vld [vmem:[#allocation11 + $0x38] sm:$0xf]
    %v1256 = vld [vmem:[#allocation11 + $0x3c] sm:$0xf]
    %v1257 = vld [vmem:[#allocation11 + $0x40] sm:$0xf]
    %v1258 = vld [vmem:[#allocation11 + $0x44] sm:$0xf]
    %v1259 = vld [vmem:[#allocation11 + $0x48] sm:$0xf]
    %v1260 = vld [vmem:[#allocation11 + $0x4c] sm:$0xf]
    %v1261 = vld [vmem:[#allocation11 + $0x50] sm:$0xf]
    %v1262 = vld [vmem:[#allocation11 + $0x54] sm:$0xf]
    %v1263 = vld [vmem:[#allocation11 + $0x58] sm:$0xf]
    %v1264 = vld [vmem:[#allocation11 + $0x5c] sm:$0xf]
    %v1265 = vld [vmem:[#allocation11 + $0x60] sm:$0xf]
    %v1266 = vld [vmem:[#allocation11 + $0x64] sm:$0xf]
    %v1267 = vld [vmem:[#allocation11 + $0x68] sm:$0xf]
    %v1268 = vld [vmem:[#allocation11 + $0x6c] sm:$0xf]
    %v1269 = vld [vmem:[#allocation11 + $0x70] sm:$0xf]
    %v1270 = vld [vmem:[#allocation11 + $0x74] sm:$0xf]
    %v1271 = vld [vmem:[#allocation11 + $0x78] sm:$0xf]
    %v1272 = vld [vmem:[#allocation11 + $0x7c] sm:$0xf]
    %v1273 = vld [vmem:[#allocation13] sm:$0x3]
    %v1274 = vpack.c.bf16 %v1240, %v1239
    %v1276 = vlaneseq
    %v1277 = vshrl.u32 %v1276, 7
    %v1278 = vsub.s32 0, %v1277
    %v1279 = vrot.slane %v1273, %v1278
    %v1280 = vlaneseq
    %v1281 = vshrl.u32 %v1280, 7
    %v1282 = vsub.s32 1, %v1281
    %v1283 = vrot.slane %v1273, %v1282
    %v1318 = vunpack.c.l.b16 %v1241
    %v1319 = vunpack.c.l.b16 %v1242
    %v1320 = vunpack.c.l.b16 %v1243
    %v1321 = vunpack.c.l.b16 %v1244
    %v1322 = vunpack.c.l.b16 %v1245
    %v1323 = vunpack.c.l.b16 %v1246
    %v1324 = vunpack.c.l.b16 %v1247
    %v1325 = vunpack.c.l.b16 %v1248
    %v1326 = vunpack.c.l.b16 %v1249
    %v1327 = vunpack.c.l.b16 %v1250
    %v1328 = vunpack.c.l.b16 %v1251
    %v1329 = vunpack.c.l.b16 %v1252
    %v1330 = vunpack.c.l.b16 %v1253
    %v1331 = vunpack.c.l.b16 %v1254
    %v1332 = vunpack.c.l.b16 %v1255
    %v1333 = vunpack.c.l.b16 %v1256
    %v1334 = vunpack.c.l.b16 %v1257
    %v1335 = vunpack.c.l.b16 %v1258
    %v1336 = vunpack.c.l.b16 %v1259
    %v1337 = vunpack.c.l.b16 %v1260
    %v1338 = vunpack.c.l.b16 %v1261
    %v1339 = vunpack.c.l.b16 %v1262
    %v1340 = vunpack.c.l.b16 %v1263
    %v1341 = vunpack.c.l.b16 %v1264
    %v1342 = vunpack.c.l.b16 %v1265
    %v1343 = vunpack.c.l.b16 %v1266
    %v1344 = vunpack.c.l.b16 %v1267
    %v1345 = vunpack.c.l.b16 %v1268
    %v1346 = vunpack.c.l.b16 %v1269
    %v1347 = vunpack.c.l.b16 %v1270
    %v1348 = vunpack.c.l.b16 %v1271
    %v1349 = vunpack.c.l.b16 %v1272
    %v1350 = vpack.c.b16 %v1319, %v1318
    %v1351 = vpack.c.b16 %v1321, %v1320
    %v1352 = vpack.c.b16 %v1323, %v1322
    %v1353 = vpack.c.b16 %v1325, %v1324
    %v1354 = vpack.c.b16 %v1327, %v1326
    %v1355 = vpack.c.b16 %v1329, %v1328
    %v1356 = vpack.c.b16 %v1331, %v1330
    %v1357 = vpack.c.b16 %v1333, %v1332
    %v1358 = vpack.c.b16 %v1335, %v1334
    %v1359 = vpack.c.b16 %v1337, %v1336
    %v1360 = vpack.c.b16 %v1339, %v1338
    %v1361 = vpack.c.b16 %v1341, %v1340
    %v1362 = vpack.c.b16 %v1343, %v1342
    %v1363 = vpack.c.b16 %v1345, %v1344
    %v1364 = vpack.c.b16 %v1347, %v1346
    %v1365 = vpack.c.b16 %v1349, %v1348
    %1382 = vmatprep.subr.bf16.mxu0 0
    %1383 = vmatpush1.bf16.xpose.msra.mxu0 %v1350
    %1384 = vmatprep.subr.bf16.mxu0 0
    %1385 = vmatpush1.bf16.xpose.msra.mxu0 %v1351
    %1386 = vmatprep.subr.bf16.mxu0 0
    %1387 = vmatpush1.bf16.xpose.msra.mxu0 %v1352
    %1388 = vmatprep.subr.bf16.mxu0 0
    %1389 = vmatpush1.bf16.xpose.msra.mxu0 %v1353
    %1390 = vmatprep.subr.bf16.mxu0 0
    %1391 = vmatpush1.bf16.xpose.msra.mxu0 %v1354
    %1392 = vmatprep.subr.bf16.mxu0 0
    %1393 = vmatpush1.bf16.xpose.msra.mxu0 %v1355
    %1394 = vmatprep.subr.bf16.mxu0 0
    %1395 = vmatpush1.bf16.xpose.msra.mxu0 %v1356
    %1396 = vmatprep.subr.bf16.mxu0 0
    %1397 = vmatpush1.bf16.xpose.msra.mxu0 %v1357
    %1398 = vmatprep.subr.bf16.mxu0 0
    %1399 = vmatpush1.bf16.xpose.msra.mxu0 %v1358
    %1400 = vmatprep.subr.bf16.mxu0 0
    %1401 = vmatpush1.bf16.xpose.msra.mxu0 %v1359
    %1402 = vmatprep.subr.bf16.mxu0 0
    %1403 = vmatpush1.bf16.xpose.msra.mxu0 %v1360
    %1404 = vmatprep.subr.bf16.mxu0 0
    %1405 = vmatpush1.bf16.xpose.msra.mxu0 %v1361
    %1406 = vmatprep.subr.bf16.mxu0 0
    %1407 = vmatpush1.bf16.xpose.msra.mxu0 %v1362
    %1408 = vmatprep.subr.bf16.mxu0 0
    %1409 = vmatpush1.bf16.xpose.msra.mxu0 %v1363
    %1410 = vmatprep.subr.bf16.mxu0 0
    %1411 = vmatpush1.bf16.xpose.msra.mxu0 %v1364
    %1412 = vmatprep.subr.bf16.mxu0 0
    %1413 = vmatpush1.bf16.xpose.msra.mxu0 %v1365
    %1414 = vmatprep.mubr.bf16.mxu0 0
    %1415 = vmatmul.mubr.bf16.gmra.mrb[0].mxu0 %v1274
    %v1416 = vpop.f32.mrb[0].mxu0
    %v1417 = vadd.f32 %v1279, %v1416
    %v1418 = vpop.f32.mrb[0].mxu0
    %v1419 = vadd.f32 %v1283, %v1418
    %v1420 = vpop.f32.mrb[0].mxu0
    %v1421 = vadd.f32 %v1279, %v1420
    %v1422 = vpop.f32.mrb[0].mxu0
    %v1423 = vadd.f32 %v1283, %v1422
    %1424 = vdwg.mxu0
    %v1425 = vmul.f32 %v1417, %v1417
    %v1426 = vmul.f32 %v1419, %v1419
    %v1427 = vmul.f32 %v1421, %v1421
    %v1428 = vmul.f32 %v1423, %v1423
    %v1429 = vmul.f32 %v1417, %v1425
    %v1430 = vmul.f32 %v1419, %v1426
    %v1431 = vmul.f32 %v1421, %v1427
    %v1432 = vmul.f32 %v1423, %v1428
    %v1433 = vmul.f32 %v1429, 0.044715
    %v1434 = vmul.f32 %v1430, 0.044715
    %v1435 = vmul.f32 %v1431, 0.044715
    %v1436 = vmul.f32 %v1432, 0.044715
    %v1437 = vadd.f32 %v1417, %v1433
    %v1438 = vadd.f32 %v1419, %v1434
    %v1439 = vadd.f32 %v1421, %v1435
    %v1440 = vadd.f32 %v1423, %v1436
    %v1441 = vmul.f32 %v1437, 0.7978846
    %v1442 = vmul.f32 %v1438, 0.7978846
    %v1443 = vmul.f32 %v1439, 0.7978846
    %v1444 = vmul.f32 %v1440, 0.7978846
    %v1445 = vtanh.pop %v1441
    %v1446 = vtanh.pop %v1442
    %v1447 = vtanh.pop %v1443
    %v1448 = vtanh.pop %v1444
    %v1449 = vadd.f32 %v1445, 1.0
    %v1450 = vadd.f32 %v1446, 1.0
    %v1451 = vadd.f32 %v1447, 1.0
    %v1452 = vadd.f32 %v1448, 1.0
    %v1453 = vmul.f32 %v1449, 0.5
    %v1454 = vmul.f32 %v1450, 0.5
    %v1455 = vmul.f32 %v1451, 0.5
    %v1456 = vmul.f32 %v1452, 0.5
    %v1457 = vmul.f32 %v1417, %v1453
    %v1458 = vmul.f32 %v1419, %v1454
    %v1459 = vmul.f32 %v1421, %v1455
    %v1460 = vmul.f32 %v1423, %v1456
    %v1461 = vld [vmem:[%s12] sm:$0xff]
    %v1462 = vld [vmem:[%s12 + $0x8] sm:$0xff]
    %v1463 = vld [vmem:[%s12 + $0x10] sm:$0xff]
    %v1464 = vld [vmem:[%s12 + $0x18] sm:$0xff]
    %v1465 = vld [vmem:[%s12 + $0x20] sm:$0xff]
    %v1466 = vld [vmem:[%s12 + $0x28] sm:$0xff]
    %v1467 = vld [vmem:[%s12 + $0x30] sm:$0xff]
    %v1468 = vld [vmem:[%s12 + $0x38] sm:$0xff]
    %v1469 = vld [vmem:[%s12 + $0x40] sm:$0xff]
    %v1470 = vld [vmem:[%s12 + $0x48] sm:$0xff]
    %v1471 = vld [vmem:[%s12 + $0x50] sm:$0xff]
    %v1472 = vld [vmem:[%s12 + $0x58] sm:$0xff]
    %v1473 = vld [vmem:[%s12 + $0x60] sm:$0xff]
    %v1474 = vld [vmem:[%s12 + $0x68] sm:$0xff]
    %v1475 = vld [vmem:[%s12 + $0x70] sm:$0xff]
    %v1476 = vld [vmem:[%s12 + $0x78] sm:$0xff]
    %v1477 = vld [vmem:[#allocation14] sm:$0x1]
    %v1478 = vpack.c.bf16 %v1459, %v1457
    %v1479 = vpack.c.bf16 %v1460, %v1458
    %v1481 = vlaneseq
    %v1482 = vshrl.u32 %v1481, 7
    %v1483 = vsub.s32 0, %v1482
    %v1484 = vrot.slane %v1477, %v1483
    %v1502 = vunpack.c.l.b16 %v1461
    %v1503 = vunpack.c.h.b16 %v1461
    %v1504 = vunpack.c.l.b16 %v1462
    %v1505 = vunpack.c.h.b16 %v1462
    %v1506 = vunpack.c.l.b16 %v1463
    %v1507 = vunpack.c.h.b16 %v1463
    %v1508 = vunpack.c.l.b16 %v1464
    %v1509 = vunpack.c.h.b16 %v1464
    %v1510 = vunpack.c.l.b16 %v1465
    %v1511 = vunpack.c.h.b16 %v1465
    %v1512 = vunpack.c.l.b16 %v1466
    %v1513 = vunpack.c.h.b16 %v1466
    %v1514 = vunpack.c.l.b16 %v1467
    %v1515 = vunpack.c.h.b16 %v1467
    %v1516 = vunpack.c.l.b16 %v1468
    %v1517 = vunpack.c.h.b16 %v1468
    %v1518 = vunpack.c.l.b16 %v1469
    %v1519 = vunpack.c.h.b16 %v1469
    %v1520 = vunpack.c.l.b16 %v1470
    %v1521 = vunpack.c.h.b16 %v1470
    %v1522 = vunpack.c.l.b16 %v1471
    %v1523 = vunpack.c.h.b16 %v1471
    %v1524 = vunpack.c.l.b16 %v1472
    %v1525 = vunpack.c.h.b16 %v1472
    %v1526 = vunpack.c.l.b16 %v1473
    %v1527 = vunpack.c.h.b16 %v1473
    %v1528 = vunpack.c.l.b16 %v1474
    %v1529 = vunpack.c.h.b16 %v1474
    %v1530 = vunpack.c.l.b16 %v1475
    %v1531 = vunpack.c.h.b16 %v1475
    %v1532 = vunpack.c.l.b16 %v1476
    %v1533 = vunpack.c.h.b16 %v1476
    %v1534 = vpack.c.b16 %v1504, %v1502
    %v1535 = vpack.c.b16 %v1505, %v1503
    %v1536 = vpack.c.b16 %v1508, %v1506
    %v1537 = vpack.c.b16 %v1509, %v1507
    %v1538 = vpack.c.b16 %v1512, %v1510
    %v1539 = vpack.c.b16 %v1513, %v1511
    %v1540 = vpack.c.b16 %v1516, %v1514
    %v1541 = vpack.c.b16 %v1517, %v1515
    %v1542 = vpack.c.b16 %v1520, %v1518
    %v1543 = vpack.c.b16 %v1521, %v1519
    %v1544 = vpack.c.b16 %v1524, %v1522
    %v1545 = vpack.c.b16 %v1525, %v1523
    %v1546 = vpack.c.b16 %v1528, %v1526
    %v1547 = vpack.c.b16 %v1529, %v1527
    %v1548 = vpack.c.b16 %v1532, %v1530
    %v1549 = vpack.c.b16 %v1533, %v1531
    %1566 = vmatprep.subr.bf16.mxu0 %v1535
    %1567 = vmatpush1.bf16.xpose.msra.mxu0 %v1534
    %1568 = vmatprep.subr.bf16.mxu0 %v1537
    %1569 = vmatpush1.bf16.xpose.msra.mxu0 %v1536
    %1570 = vmatprep.subr.bf16.mxu0 %v1539
    %1571 = vmatpush1.bf16.xpose.msra.mxu0 %v1538
    %1572 = vmatprep.subr.bf16.mxu0 %v1541
    %1573 = vmatpush1.bf16.xpose.msra.mxu0 %v1540
    %1574 = vmatprep.subr.bf16.mxu0 %v1543
    %1575 = vmatpush1.bf16.xpose.msra.mxu0 %v1542
    %1576 = vmatprep.subr.bf16.mxu0 %v1545
    %1577 = vmatpush1.bf16.xpose.msra.mxu0 %v1544
    %1578 = vmatprep.subr.bf16.mxu0 %v1547
    %1579 = vmatpush1.bf16.xpose.msra.mxu0 %v1546
    %1580 = vmatprep.subr.bf16.mxu0 %v1549
    %1581 = vmatpush1.bf16.xpose.msra.mxu0 %v1548
    %1582 = vmatprep.subr.bf16.mxu0 0
    %1583 = vmatpush1.bf16.xpose.msra.mxu0 0
    %1584 = vmatprep.subr.bf16.mxu0 0
    %1585 = vmatpush1.bf16.xpose.msra.mxu0 0
    %1586 = vmatprep.subr.bf16.mxu0 0
    %1587 = vmatpush1.bf16.xpose.msra.mxu0 0
    %1588 = vmatprep.subr.bf16.mxu0 0
    %1589 = vmatpush1.bf16.xpose.msra.mxu0 0
    %1590 = vmatprep.subr.bf16.mxu0 0
    %1591 = vmatpush1.bf16.xpose.msra.mxu0 0
    %1592 = vmatprep.subr.bf16.mxu0 0
    %1593 = vmatpush1.bf16.xpose.msra.mxu0 0
    %1594 = vmatprep.subr.bf16.mxu0 0
    %1595 = vmatpush1.bf16.xpose.msra.mxu0 0
    %1596 = vmatprep.subr.bf16.mxu0 0
    %1597 = vmatpush1.bf16.xpose.msra.mxu0 0
    %1598 = vmatprep.mubr.bf16.mxu0 %v1479
    %1599 = vmatmul.mubr.bf16.gmra.mrb[0].mxu0 %v1478
    %v1600 = vpop.f32.mrb[0].mxu0
    %v1601 = vadd.f32 %v1484, %v1600
    %v1602 = vpop.f32.mrb[0].mxu0
    %v1603 = vpop.f32.mrb[0].mxu0
    %v1604 = vadd.f32 %v1484, %v1603
    %v1605 = vpop.f32.mrb[0].mxu0
    %1606 = vdwg.mxu0
    %v1607 = vadd.f32 %v1239, %v1601
    %v1608 = vadd.f32 %v1240, %v1604
    %v1609 = vld [vmem:[%s14] sm:$0x1]
    %v1610 = vld [vmem:[%s15] sm:$0x1]
    %1611 = vadd.xlane.f32.xlu0 %v1607
    %v1612 = vpop.xlane.xlu0 %1611
    %1613 = vadd.xlane.f32.xlu0 %v1608
    %v1614 = vpop.xlane.xlu0 %1613
    %v1615 = vmul.f32 %v1612, %v262
    %v1616 = vmul.f32 %v1614, %v262
    %v1617 = vsub.f32 %v1607, %v1615
    %v1618 = vsub.f32 %v1608, %v1616
    %v1619 = vmul.f32 %v1617, %v1617
    %v1620 = vmul.f32 %v1618, %v1618
    %1621 = vadd.xlane.f32.xlu0 %v1619
    %v1622 = vpop.xlane.xlu0 %1621
    %1623 = vadd.xlane.f32.xlu0 %v1620
    %v1624 = vpop.xlane.xlu0 %1623
    %v1625 = vmul.f32 %v1622, %v262
    %v1626 = vmul.f32 %v1624, %v262
    %v1627 = vadd.f32 %v1625, 1e-12
    %v1628 = vadd.f32 %v1626, 1e-12
    %v1629 = vrsqrt.pop %v1627
    %v1630 = vrsqrt.pop %v1628
    %v1631 = vmul.f32 %v1617, %v1629
    %v1632 = vmul.f32 %v1618, %v1630
    %v1634 = vlaneseq
    %v1635 = vshrl.u32 %v1634, 7
    %v1636 = vsub.s32 0, %v1635
    %v1637 = vrot.slane %v1609, %v1636
    %v1639 = vmul.f32 %v1631, %v1637
    %v1640 = vmul.f32 %v1632, %v1637
    %v1642 = vlaneseq
    %v1643 = vshrl.u32 %v1642, 7
    %v1644 = vsub.s32 0, %v1643
    %v1645 = vrot.slane %v1610, %v1644
    %v1647 = vadd.f32 %v1639, %v1645
    %v1648 = vadd.f32 %v1640, %v1645
    %s1649 = scalar_lea.vmem [#allocation7], 192
    %v1650 = vld [vmem:[%s1649] sm:$0xf]
    %v1651 = vld [vmem:[%s1649 + $0x4] sm:$0xf]
    %v1652 = vld [vmem:[%s1649 + $0x8] sm:$0xf]
    %v1653 = vld [vmem:[%s1649 + $0xc] sm:$0xf]
    %v1654 = vld [vmem:[%s1649 + $0x10] sm:$0xf]
    %v1655 = vld [vmem:[%s1649 + $0x14] sm:$0xf]
    %v1656 = vld [vmem:[%s1649 + $0x18] sm:$0xf]
    %v1657 = vld [vmem:[%s1649 + $0x1c] sm:$0xf]
    %v1658 = vld [vmem:[%s1649 + $0x20] sm:$0xf]
    %v1659 = vld [vmem:[%s1649 + $0x24] sm:$0xf]
    %v1660 = vld [vmem:[%s1649 + $0x28] sm:$0xf]
    %v1661 = vld [vmem:[%s1649 + $0x2c] sm:$0xf]
    %v1662 = vld [vmem:[%s1649 + $0x30] sm:$0xf]
    %v1663 = vld [vmem:[%s1649 + $0x34] sm:$0xf]
    %v1664 = vld [vmem:[%s1649 + $0x38] sm:$0xf]
    %v1665 = vld [vmem:[%s1649 + $0x3c] sm:$0xf]
    %v1666 = vld [vmem:[%s1649 + $0x40] sm:$0xf]
    %v1667 = vld [vmem:[%s1649 + $0x44] sm:$0xf]
    %v1668 = vld [vmem:[%s1649 + $0x48] sm:$0xf]
    %v1669 = vld [vmem:[%s1649 + $0x4c] sm:$0xf]
    %v1670 = vld [vmem:[%s1649 + $0x50] sm:$0xf]
    %v1671 = vld [vmem:[%s1649 + $0x54] sm:$0xf]
    %v1672 = vld [vmem:[%s1649 + $0x58] sm:$0xf]
    %v1673 = vld [vmem:[%s1649 + $0x5c] sm:$0xf]
    %v1674 = vld [vmem:[%s1649 + $0x60] sm:$0xf]
    %v1675 = vld [vmem:[%s1649 + $0x64] sm:$0xf]
    %v1676 = vld [vmem:[%s1649 + $0x68] sm:$0xf]
    %v1677 = vld [vmem:[%s1649 + $0x6c] sm:$0xf]
    %v1678 = vld [vmem:[%s1649 + $0x70] sm:$0xf]
    %v1679 = vld [vmem:[%s1649 + $0x74] sm:$0xf]
    %v1680 = vld [vmem:[%s1649 + $0x78] sm:$0xf]
    %v1681 = vld [vmem:[%s1649 + $0x7c] sm:$0xf]
    %v1682 = vld [vmem:[%s1649 + $0x80] sm:$0xf]
    %v1683 = vld [vmem:[%s1649 + $0x84] sm:$0xf]
    %v1684 = vld [vmem:[%s1649 + $0x88] sm:$0xf]
    %v1685 = vld [vmem:[%s1649 + $0x8c] sm:$0xf]
    %v1686 = vld [vmem:[%s1649 + $0x90] sm:$0xf]
    %v1687 = vld [vmem:[%s1649 + $0x94] sm:$0xf]
    %v1688 = vld [vmem:[%s1649 + $0x98] sm:$0xf]
    %v1689 = vld [vmem:[%s1649 + $0x9c] sm:$0xf]
    %v1690 = vld [vmem:[%s1649 + $0xa0] sm:$0xf]
    %v1691 = vld [vmem:[%s1649 + $0xa4] sm:$0xf]
    %v1692 = vld [vmem:[%s1649 + $0xa8] sm:$0xf]
    %v1693 = vld [vmem:[%s1649 + $0xac] sm:$0xf]
    %v1694 = vld [vmem:[%s1649 + $0xb0] sm:$0xf]
    %v1695 = vld [vmem:[%s1649 + $0xb4] sm:$0xf]
    %v1696 = vld [vmem:[%s1649 + $0xb8] sm:$0xf]
    %v1697 = vld [vmem:[%s1649 + $0xbc] sm:$0xf]
    %s1698 = scalar_lea.vmem %s5, 3
    %v1699 = vld [vmem:[%s1698] sm:$0x7]
    %s1700 = scalar_lea.vmem [#allocation8], 64
    %v1701 = vld [vmem:[%s1700] sm:$0xf]
    %v1702 = vld [vmem:[%s1700 + $0x4] sm:$0xf]
    %v1703 = vld [vmem:[%s1700 + $0x8] sm:$0xf]
    %v1704 = vld [vmem:[%s1700 + $0xc] sm:$0xf]
    %v1705 = vld [vmem:[%s1700 + $0x10] sm:$0xf]
    %v1706 = vld [vmem:[%s1700 + $0x14] sm:$0xf]
    %v1707 = vld [vmem:[%s1700 + $0x18] sm:$0xf]
    %v1708 = vld [vmem:[%s1700 + $0x1c] sm:$0xf]
    %v1709 = vld [vmem:[%s1700 + $0x20] sm:$0xf]
    %v1710 = vld [vmem:[%s1700 + $0x24] sm:$0xf]
    %v1711 = vld [vmem:[%s1700 + $0x28] sm:$0xf]
    %v1712 = vld [vmem:[%s1700 + $0x2c] sm:$0xf]
    %v1713 = vld [vmem:[%s1700 + $0x30] sm:$0xf]
    %v1714 = vld [vmem:[%s1700 + $0x34] sm:$0xf]
    %v1715 = vld [vmem:[%s1700 + $0x38] sm:$0xf]
    %v1716 = vld [vmem:[%s1700 + $0x3c] sm:$0xf]
    %s1717 = scalar_lea.vmem [#allocation10], 1
    %v1718 = vld [vmem:[%s1717] sm:$0x1]
    %v1719 = vpack.c.bf16 %v1648, %v1647
    %v1721 = vlaneseq
    %v1722 = vshrl.u32 %v1721, 7
    %v1723 = vsub.s32 0, %v1722
    %v1724 = vrot.slane %v1699, %v1723
    %v1725 = vlaneseq
    %v1726 = vshrl.u32 %v1725, 7
    %v1727 = vsub.s32 1, %v1726
    %v1728 = vrot.slane %v1699, %v1727
    %v1729 = vlaneseq
    %v1730 = vshrl.u32 %v1729, 7
    %v1731 = vsub.s32 2, %v1730
    %v1732 = vrot.slane %v1699, %v1731
    %v1784 = vunpack.c.l.b16 %v1650
    %v1785 = vunpack.c.l.b16 %v1651
    %v1786 = vunpack.c.l.b16 %v1652
    %v1787 = vunpack.c.l.b16 %v1653
    %v1788 = vunpack.c.l.b16 %v1654
    %v1789 = vunpack.c.l.b16 %v1655
    %v1790 = vunpack.c.l.b16 %v1656
    %v1791 = vunpack.c.l.b16 %v1657
    %v1792 = vunpack.c.l.b16 %v1658
    %v1793 = vunpack.c.l.b16 %v1659
    %v1794 = vunpack.c.l.b16 %v1660
    %v1795 = vunpack.c.l.b16 %v1661
    %v1796 = vunpack.c.l.b16 %v1662
    %v1797 = vunpack.c.l.b16 %v1663
    %v1798 = vunpack.c.l.b16 %v1664
    %v1799 = vunpack.c.l.b16 %v1665
    %v1800 = vunpack.c.l.b16 %v1666
    %v1801 = vunpack.c.l.b16 %v1667
    %v1802 = vunpack.c.l.b16 %v1668
    %v1803 = vunpack.c.l.b16 %v1669
    %v1804 = vunpack.c.l.b16 %v1670
    %v1805 = vunpack.c.l.b16 %v1671
    %v1806 = vunpack.c.l.b16 %v1672
    %v1807 = vunpack.c.l.b16 %v1673
    %v1808 = vunpack.c.l.b16 %v1674
    %v1809 = vunpack.c.l.b16 %v1675
    %v1810 = vunpack.c.l.b16 %v1676
    %v1811 = vunpack.c.l.b16 %v1677
    %v1812 = vunpack.c.l.b16 %v1678
    %v1813 = vunpack.c.l.b16 %v1679
    %v1814 = vunpack.c.l.b16 %v1680
    %v1815 = vunpack.c.l.b16 %v1681
    %v1816 = vunpack.c.l.b16 %v1682
    %v1817 = vunpack.c.l.b16 %v1683
    %v1818 = vunpack.c.l.b16 %v1684
    %v1819 = vunpack.c.l.b16 %v1685
    %v1820 = vunpack.c.l.b16 %v1686
    %v1821 = vunpack.c.l.b16 %v1687
    %v1822 = vunpack.c.l.b16 %v1688
    %v1823 = vunpack.c.l.b16 %v1689
    %v1824 = vunpack.c.l.b16 %v1690
    %v1825 = vunpack.c.l.b16 %v1691
    %v1826 = vunpack.c.l.b16 %v1692
    %v1827 = vunpack.c.l.b16 %v1693
    %v1828 = vunpack.c.l.b16 %v1694
    %v1829 = vunpack.c.l.b16 %v1695
    %v1830 = vunpack.c.l.b16 %v1696
    %v1831 = vunpack.c.l.b16 %v1697
    %v1832 = vpack.c.b16 %v1785, %v1784
    %v1833 = vpack.c.b16 %v1787, %v1786
    %v1834 = vpack.c.b16 %v1789, %v1788
    %v1835 = vpack.c.b16 %v1791, %v1790
    %v1836 = vpack.c.b16 %v1793, %v1792
    %v1837 = vpack.c.b16 %v1795, %v1794
    %v1838 = vpack.c.b16 %v1797, %v1796
    %v1839 = vpack.c.b16 %v1799, %v1798
    %v1840 = vpack.c.b16 %v1801, %v1800
    %v1841 = vpack.c.b16 %v1803, %v1802
    %v1842 = vpack.c.b16 %v1805, %v1804
    %v1843 = vpack.c.b16 %v1807, %v1806
    %v1844 = vpack.c.b16 %v1809, %v1808
    %v1845 = vpack.c.b16 %v1811, %v1810
    %v1846 = vpack.c.b16 %v1813, %v1812
    %v1847 = vpack.c.b16 %v1815, %v1814
    %v1848 = vpack.c.b16 %v1817, %v1816
    %v1849 = vpack.c.b16 %v1819, %v1818
    %v1850 = vpack.c.b16 %v1821, %v1820
    %v1851 = vpack.c.b16 %v1823, %v1822
    %v1852 = vpack.c.b16 %v1825, %v1824
    %v1853 = vpack.c.b16 %v1827, %v1826
    %v1854 = vpack.c.b16 %v1829, %v1828
    %v1855 = vpack.c.b16 %v1831, %v1830
    %1880 = vmatprep.subr.bf16.mxu0 0
    %1881 = vmatpush1.bf16.xpose.msra.mxu0 %v1832
    %1882 = vmatprep.subr.bf16.mxu0 0
    %1883 = vmatpush1.bf16.xpose.msra.mxu0 %v1833
    %1884 = vmatprep.subr.bf16.mxu0 0
    %1885 = vmatpush1.bf16.xpose.msra.mxu0 %v1834
    %1886 = vmatprep.subr.bf16.mxu0 0
    %1887 = vmatpush1.bf16.xpose.msra.mxu0 %v1835
    %1888 = vmatprep.subr.bf16.mxu0 0
    %1889 = vmatpush1.bf16.xpose.msra.mxu0 %v1836
    %1890 = vmatprep.subr.bf16.mxu0 0
    %1891 = vmatpush1.bf16.xpose.msra.mxu0 %v1837
    %1892 = vmatprep.subr.bf16.mxu0 0
    %1893 = vmatpush1.bf16.xpose.msra.mxu0 %v1838
    %1894 = vmatprep.subr.bf16.mxu0 0
    %1895 = vmatpush1.bf16.xpose.msra.mxu0 %v1839
    %1896 = vmatprep.subr.bf16.mxu0 0
    %1897 = vmatpush1.bf16.xpose.msra.mxu0 %v1840
    %1898 = vmatprep.subr.bf16.mxu0 0
    %1899 = vmatpush1.bf16.xpose.msra.mxu0 %v1841
    %1900 = vmatprep.subr.bf16.mxu0 0
    %1901 = vmatpush1.bf16.xpose.msra.mxu0 %v1842
    %1902 = vmatprep.subr.bf16.mxu0 0
    %1903 = vmatpush1.bf16.xpose.msra.mxu0 %v1843
    %1904 = vmatprep.subr.bf16.mxu0 0
    %1905 = vmatpush1.bf16.xpose.msra.mxu0 %v1844
    %1906 = vmatprep.subr.bf16.mxu0 0
    %1907 = vmatpush1.bf16.xpose.msra.mxu0 %v1845
    %1908 = vmatprep.subr.bf16.mxu0 0
    %1909 = vmatpush1.bf16.xpose.msra.mxu0 %v1846
    %1910 = vmatprep.subr.bf16.mxu0 0
    %1911 = vmatpush1.bf16.xpose.msra.mxu0 %v1847
    %1912 = vmatprep.mubr.bf16.mxu0 0
    %1913 = vmatmul.mubr.bf16.gmra.mrb[0].mxu0 %v1719
    %v1914 = vpop.f32.mrb[0].mxu0
    %v1915 = vadd.f32 %v1724, %v1914
    %v1916 = vpop.f32.mrb[0].mxu0
    %v1917 = vadd.f32 %v1728, %v1916
    %v1918 = vpop.f32.mrb[0].mxu0
    %v1919 = vadd.f32 %v1724, %v1918
    %v1920 = vpop.f32.mrb[0].mxu0
    %v1921 = vadd.f32 %v1728, %v1920
    %1922 = vdwg.mxu0
    %1923 = vmatprep.subr.bf16.mxu0 0
    %1924 = vmatpush1.bf16.xpose.msra.mxu0 %v1848
    %1925 = vmatprep.subr.bf16.mxu0 0
    %1926 = vmatpush1.bf16.xpose.msra.mxu0 %v1849
    %1927 = vmatprep.subr.bf16.mxu0 0
    %1928 = vmatpush1.bf16.xpose.msra.mxu0 %v1850
    %1929 = vmatprep.subr.bf16.mxu0 0
    %1930 = vmatpush1.bf16.xpose.msra.mxu0 %v1851
    %1931 = vmatprep.subr.bf16.mxu0 0
    %1932 = vmatpush1.bf16.xpose.msra.mxu0 %v1852
    %1933 = vmatprep.subr.bf16.mxu0 0
    %1934 = vmatpush1.bf16.xpose.msra.mxu0 %v1853
    %1935 = vmatprep.subr.bf16.mxu0 0
    %1936 = vmatpush1.bf16.xpose.msra.mxu0 %v1854
    %1937 = vmatprep.subr.bf16.mxu0 0
    %1938 = vmatpush1.bf16.xpose.msra.mxu0 %v1855
    %1939 = vmatprep.subr.bf16.mxu0 0
    %1940 = vmatpush1.bf16.xpose.msra.mxu0 0
    %1941 = vmatprep.subr.bf16.mxu0 0
    %1942 = vmatpush1.bf16.xpose.msra.mxu0 0
    %1943 = vmatprep.subr.bf16.mxu0 0
    %1944 = vmatpush1.bf16.xpose.msra.mxu0 0
    %1945 = vmatprep.subr.bf16.mxu0 0
    %1946 = vmatpush1.bf16.xpose.msra.mxu0 0
    %1947 = vmatprep.subr.bf16.mxu0 0
    %1948 = vmatpush1.bf16.xpose.msra.mxu0 0
    %1949 = vmatprep.subr.bf16.mxu0 0
    %1950 = vmatpush1.bf16.xpose.msra.mxu0 0
    %1951 = vmatprep.subr.bf16.mxu0 0
    %1952 = vmatpush1.bf16.xpose.msra.mxu0 0
    %1953 = vmatprep.subr.bf16.mxu0 0
    %1954 = vmatpush1.bf16.xpose.msra.mxu0 0
    %1955 = vmatprep.mubr.bf16.mxu0 0
    %1956 = vmatmul.mubr.bf16.gmra.mrb[0].mxu0 %v1719
    %v1957 = vpop.f32.mrb[0].mxu0
    %v1958 = vadd.f32 %v1732, %v1957
    %v1959 = vpop.f32.mrb[0].mxu0
    %v1960 = vpop.f32.mrb[0].mxu0
    %v1961 = vadd.f32 %v1732, %v1960
    %v1962 = vpop.f32.mrb[0].mxu0
    %1963 = vdwg.mxu0
    %v1964 = vpack.c.bf16 %v1915, %v1915
    %v1965 = vpack.c.bf16 %v1919, %v1919
    %v1966 = vpack.c.bf16 %v1917, %v1917
    %v1967 = vpack.c.bf16 %v1921, %v1921
    %v1968 = vpack.c.bf16 %v1958, %v1958
    %v1969 = vpack.c.bf16 %v1961, %v1961
    %v1971 = vsel %vm638, %v1964, 0
    %v1974 = vsel %vm638, %v1966, 0
    %1976 = vmatprep.subr.bf16.mxu0 0
    %1977 = vmatpush1.bf16.xpose.msra.mxu0 %v1974
    %1978 = vmatprep.subr.bf16.mxu0 0
    %1979 = vmatpush1.bf16.xpose.msra.mxu0 0
    %1980 = vmatprep.subr.bf16.mxu0 0
    %1981 = vmatpush1.bf16.xpose.msra.mxu0 0
    %1982 = vmatprep.subr.bf16.mxu0 0
    %1983 = vmatpush1.bf16.xpose.msra.mxu0 0
    %1984 = vmatprep.subr.bf16.mxu0 0
    %1985 = vmatpush1.bf16.xpose.msra.mxu0 0
    %1986 = vmatprep.subr.bf16.mxu0 0
    %1987 = vmatpush1.bf16.xpose.msra.mxu0 0
    %1988 = vmatprep.subr.bf16.mxu0 0
    %1989 = vmatpush1.bf16.xpose.msra.mxu0 0
    %1990 = vmatprep.subr.bf16.mxu0 0
    %1991 = vmatpush1.bf16.xpose.msra.mxu0 0
    %1992 = vmatprep.subr.bf16.mxu0 0
    %1993 = vmatpush1.bf16.xpose.msra.mxu0 0
    %1994 = vmatprep.subr.bf16.mxu0 0
    %1995 = vmatpush1.bf16.xpose.msra.mxu0 0
    %1996 = vmatprep.subr.bf16.mxu0 0
    %1997 = vmatpush1.bf16.xpose.msra.mxu0 0
    %1998 = vmatprep.subr.bf16.mxu0 0
    %1999 = vmatpush1.bf16.xpose.msra.mxu0 0
    %2000 = vmatprep.subr.bf16.mxu0 0
    %2001 = vmatpush1.bf16.xpose.msra.mxu0 0
    %2002 = vmatprep.subr.bf16.mxu0 0
    %2003 = vmatpush1.bf16.xpose.msra.mxu0 0
    %2004 = vmatprep.subr.bf16.mxu0 0
    %2005 = vmatpush1.bf16.xpose.msra.mxu0 0
    %2006 = vmatprep.subr.bf16.mxu0 0
    %2007 = vmatpush1.bf16.xpose.msra.mxu0 0
    %2008 = vmatprep.mubr.bf16.mxu0 0
    %2009 = vmatmul.mubr.bf16.gmra.mrb[0].mxu0 %v1971
    %v2010 = vpop.f32.mrb[0].mxu0
    %v2011 = vadd.f32 0.0, %v2010
    %v2012 = vpop.f32.mrb[0].mxu0
    %v2013 = vpop.f32.mrb[0].mxu0
    %v2014 = vpop.f32.mrb[0].mxu0
    %2015 = vdwg.mxu0
    %v2017 = vsel %vm638, %v1965, 0
    %v2020 = vsel %vm638, %v1967, 0
    %2022 = vmatprep.subr.bf16.mxu0 0
    %2023 = vmatpush1.bf16.xpose.msra.mxu0 %v2020
    %2024 = vmatprep.subr.bf16.mxu0 0
    %2025 = vmatpush1.bf16.xpose.msra.mxu0 0
    %2026 = vmatprep.subr.bf16.mxu0 0
    %2027 = vmatpush1.bf16.xpose.msra.mxu0 0
    %2028 = vmatprep.subr.bf16.mxu0 0
    %2029 = vmatpush1.bf16.xpose.msra.mxu0 0
    %2030 = vmatprep.subr.bf16.mxu0 0
    %2031 = vmatpush1.bf16.xpose.msra.mxu0 0
    %2032 = vmatprep.subr.bf16.mxu0 0
    %2033 = vmatpush1.bf16.xpose.msra.mxu0 0
    %2034 = vmatprep.subr.bf16.mxu0 0
    %2035 = vmatpush1.bf16.xpose.msra.mxu0 0
    %2036 = vmatprep.subr.bf16.mxu0 0
    %2037 = vmatpush1.bf16.xpose.msra.mxu0 0
    %2038 = vmatprep.subr.bf16.mxu0 0
    %2039 = vmatpush1.bf16.xpose.msra.mxu0 0
    %2040 = vmatprep.subr.bf16.mxu0 0
    %2041 = vmatpush1.bf16.xpose.msra.mxu0 0
    %2042 = vmatprep.subr.bf16.mxu0 0
    %2043 = vmatpush1.bf16.xpose.msra.mxu0 0
    %2044 = vmatprep.subr.bf16.mxu0 0
    %2045 = vmatpush1.bf16.xpose.msra.mxu0 0
    %2046 = vmatprep.subr.bf16.mxu0 0
    %2047 = vmatpush1.bf16.xpose.msra.mxu0 0
    %2048 = vmatprep.subr.bf16.mxu0 0
    %2049 = vmatpush1.bf16.xpose.msra.mxu0 0
    %2050 = vmatprep.subr.bf16.mxu0 0
    %2051 = vmatpush1.bf16.xpose.msra.mxu0 0
    %2052 = vmatprep.subr.bf16.mxu0 0
    %2053 = vmatpush1.bf16.xpose.msra.mxu0 0
    %2054 = vmatprep.mubr.bf16.mxu0 0
    %2055 = vmatmul.mubr.bf16.gmra.mrb[0].mxu0 %v2017
    %v2056 = vpop.f32.mrb[0].mxu0
    %v2057 = vadd.f32 0.0, %v2056
    %v2058 = vpop.f32.mrb[0].mxu0
    %v2059 = vpop.f32.mrb[0].mxu0
    %v2060 = vpop.f32.mrb[0].mxu0
    %2061 = vdwg.mxu0
    %v2062 = vmul.f32 %v2011, 0.125
    %v2063 = vmul.f32 %v2057, 0.125
    %v2064 = vadd.f32 %v2062, %v736
    %v2065 = vadd.f32 %v2063, %v740
    %v2066 = vsel %vm745, %v2064, -inf
    %2067 = vmax.xlane.f32.xlu0 %v2066
    %v2068 = vpop.xlane.xlu0 %2067
    %v2069 = vsel %vm745, %v2065, -inf
    %2070 = vmax.xlane.f32.xlu0 %v2069
    %v2071 = vpop.xlane.xlu0 %2070
    %v2072 = vsub.f32 %v2064, %v2068
    %v2073 = vsub.f32 %v2065, %v2071
    %v2074 = vmul.f32 %v2072, 1.442695
    %v2075 = vpow.pop %v2074
    %v2076 = vmul.f32 %v2073, 1.442695
    %v2077 = vpow.pop %v2076
    %v2078 = vsel %vm745, %v2075, 0.0
    %2079 = vadd.xlane.f32.xlu0 %v2078
    %v2080 = vpop.xlane.xlu0 %2079
    %v2081 = vsel %vm745, %v2077, 0.0
    %2082 = vadd.xlane.f32.xlu0 %v2081
    %v2083 = vpop.xlane.xlu0 %2082
    %v2084 = vrcp.pop %v2080
    %v2085 = vrcp.pop %v2083
    %v2086 = vmul.f32 %v2075, %v2084
    %v2087 = vmul.f32 %v2077, %v2085
    %v2088 = vpack.c.bf16 %v2086, %v2086
    %v2089 = vpack.c.bf16 %v2087, %v2087
    %v2091 = vsel %vm745, %v2088, 0
    %v2094 = vsel %vm773, %v1968, 0
    %2096 = vmatprep.subr.bf16.mxu0 0
    %2097 = vmatpush1.bf16.msra.mxu0 %v2094
    %2098 = vmatprep.subr.bf16.mxu0 0
    %2099 = vmatpush1.bf16.msra.mxu0 0
    %2100 = vmatprep.subr.bf16.mxu0 0
    %2101 = vmatpush1.bf16.msra.mxu0 0
    %2102 = vmatprep.subr.bf16.mxu0 0
    %2103 = vmatpush1.bf16.msra.mxu0 0
    %2104 = vmatprep.subr.bf16.mxu0 0
    %2105 = vmatpush1.bf16.msra.mxu0 0
    %2106 = vmatprep.subr.bf16.mxu0 0
    %2107 = vmatpush1.bf16.msra.mxu0 0
    %2108 = vmatprep.subr.bf16.mxu0 0
    %2109 = vmatpush1.bf16.msra.mxu0 0
    %2110 = vmatprep.subr.bf16.mxu0 0
    %2111 = vmatpush1.bf16.msra.mxu0 0
    %2112 = vmatprep.subr.bf16.mxu0 0
    %2113 = vmatpush1.bf16.msra.mxu0 0
    %2114 = vmatprep.subr.bf16.mxu0 0
    %2115 = vmatpush1.bf16.msra.mxu0 0
    %2116 = vmatprep.subr.bf16.mxu0 0
    %2117 = vmatpush1.bf16.msra.mxu0 0
    %2118 = vmatprep.subr.bf16.mxu0 0
    %2119 = vmatpush1.bf16.msra.mxu0 0
    %2120 = vmatprep.subr.bf16.mxu0 0
    %2121 = vmatpush1.bf16.msra.mxu0 0
    %2122 = vmatprep.subr.bf16.mxu0 0
    %2123 = vmatpush1.bf16.msra.mxu0 0
    %2124 = vmatprep.subr.bf16.mxu0 0
    %2125 = vmatpush1.bf16.msra.mxu0 0
    %2126 = vmatprep.subr.bf16.mxu0 0
    %2127 = vmatpush1.bf16.msra.mxu0 0
    %2128 = vmatprep.mubr.bf16.mxu0 0
    %2129 = vmatmul.mubr.bf16.gmra.mrb[0].mxu0 %v2091
    %v2130 = vpop.f32.mrb[0].mxu0
    %v2131 = vadd.f32 0.0, %v2130
    %v2132 = vpop.f32.mrb[0].mxu0
    %v2133 = vpop.f32.mrb[0].mxu0
    %v2134 = vpop.f32.mrb[0].mxu0
    %2135 = vdwg.mxu0
    %v2137 = vsel %vm745, %v2089, 0
    %v2140 = vsel %vm773, %v1969, 0
    %2142 = vmatprep.subr.bf16.mxu0 0
    %2143 = vmatpush1.bf16.msra.mxu0 %v2140
    %2144 = vmatprep.subr.bf16.mxu0 0
    %2145 = vmatpush1.bf16.msra.mxu0 0
    %2146 = vmatprep.subr.bf16.mxu0 0
    %2147 = vmatpush1.bf16.msra.mxu0 0
    %2148 = vmatprep.subr.bf16.mxu0 0
    %2149 = vmatpush1.bf16.msra.mxu0 0
    %2150 = vmatprep.subr.bf16.mxu0 0
    %2151 = vmatpush1.bf16.msra.mxu0 0
    %2152 = vmatprep.subr.bf16.mxu0 0
    %2153 = vmatpush1.bf16.msra.mxu0 0
    %2154 = vmatprep.subr.bf16.mxu0 0
    %2155 = vmatpush1.bf16.msra.mxu0 0
    %2156 = vmatprep.subr.bf16.mxu0 0
    %2157 = vmatpush1.bf16.msra.mxu0 0
    %2158 = vmatprep.subr.bf16.mxu0 0
    %2159 = vmatpush1.bf16.msra.mxu0 0
    %2160 = vmatprep.subr.bf16.mxu0 0
    %2161 = vmatpush1.bf16.msra.mxu0 0
    %2162 = vmatprep.subr.bf16.mxu0 0
    %2163 = vmatpush1.bf16.msra.mxu0 0
    %2164 = vmatprep.subr.bf16.mxu0 0
    %2165 = vmatpush1.bf16.msra.mxu0 0
    %2166 = vmatprep.subr.bf16.mxu0 0
    %2167 = vmatpush1.bf16.msra.mxu0 0
    %2168 = vmatprep.subr.bf16.mxu0 0
    %2169 = vmatpush1.bf16.msra.mxu0 0
    %2170 = vmatprep.subr.bf16.mxu0 0
    %2171 = vmatpush1.bf16.msra.mxu0 0
    %2172 = vmatprep.subr.bf16.mxu0 0
    %2173 = vmatpush1.bf16.msra.mxu0 0
    %2174 = vmatprep.mubr.bf16.mxu0 0
    %2175 = vmatmul.mubr.bf16.gmra.mrb[0].mxu0 %v2137
    %v2176 = vpop.f32.mrb[0].mxu0
    %v2177 = vadd.f32 0.0, %v2176
    %v2178 = vpop.f32.mrb[0].mxu0
    %v2179 = vpop.f32.mrb[0].mxu0
    %v2180 = vpop.f32.mrb[0].mxu0
    %2181 = vdwg.mxu0
    %2183 = vrot.lane.b32.xlu0 %v1964, 64
    %v2184 = vpop.permute.xlu0 %2183
    %2186 = vrot.lane.b32.xlu0 %v1966, 64
    %v2187 = vpop.permute.xlu0 %2186
    %v2189 = vsel %vm638, %v2184, 0
    %v2192 = vsel %vm638, %v2187, 0
    %2194 = vmatprep.subr.bf16.mxu0 0
    %2195 = vmatpush1.bf16.xpose.msra.mxu0 %v2192
    %2196 = vmatprep.subr.bf16.mxu0 0
    %2197 = vmatpush1.bf16.xpose.msra.mxu0 0
    %2198 = vmatprep.subr.bf16.mxu0 0
    %2199 = vmatpush1.bf16.xpose.msra.mxu0 0
    %2200 = vmatprep.subr.bf16.mxu0 0
    %2201 = vmatpush1.bf16.xpose.msra.mxu0 0
    %2202 = vmatprep.subr.bf16.mxu0 0
    %2203 = vmatpush1.bf16.xpose.msra.mxu0 0
    %2204 = vmatprep.subr.bf16.mxu0 0
    %2205 = vmatpush1.bf16.xpose.msra.mxu0 0
    %2206 = vmatprep.subr.bf16.mxu0 0
    %2207 = vmatpush1.bf16.xpose.msra.mxu0 0
    %2208 = vmatprep.subr.bf16.mxu0 0
    %2209 = vmatpush1.bf16.xpose.msra.mxu0 0
    %2210 = vmatprep.subr.bf16.mxu0 0
    %2211 = vmatpush1.bf16.xpose.msra.mxu0 0
    %2212 = vmatprep.subr.bf16.mxu0 0
    %2213 = vmatpush1.bf16.xpose.msra.mxu0 0
    %2214 = vmatprep.subr.bf16.mxu0 0
    %2215 = vmatpush1.bf16.xpose.msra.mxu0 0
    %2216 = vmatprep.subr.bf16.mxu0 0
    %2217 = vmatpush1.bf16.xpose.msra.mxu0 0
    %2218 = vmatprep.subr.bf16.mxu0 0
    %2219 = vmatpush1.bf16.xpose.msra.mxu0 0
    %2220 = vmatprep.subr.bf16.mxu0 0
    %2221 = vmatpush1.bf16.xpose.msra.mxu0 0
    %2222 = vmatprep.subr.bf16.mxu0 0
    %2223 = vmatpush1.bf16.xpose.msra.mxu0 0
    %2224 = vmatprep.subr.bf16.mxu0 0
    %2225 = vmatpush1.bf16.xpose.msra.mxu0 0
    %2226 = vmatprep.mubr.bf16.mxu0 0
    %2227 = vmatmul.mubr.bf16.gmra.mrb[0].mxu0 %v2189
    %v2228 = vpop.f32.mrb[0].mxu0
    %v2229 = vadd.f32 0.0, %v2228
    %v2230 = vpop.f32.mrb[0].mxu0
    %v2231 = vpop.f32.mrb[0].mxu0
    %v2232 = vpop.f32.mrb[0].mxu0
    %2233 = vdwg.mxu0
    %2235 = vrot.lane.b32.xlu0 %v1965, 64
    %v2236 = vpop.permute.xlu0 %2235
    %2238 = vrot.lane.b32.xlu0 %v1967, 64
    %v2239 = vpop.permute.xlu0 %2238
    %v2241 = vsel %vm638, %v2236, 0
    %v2244 = vsel %vm638, %v2239, 0
    %2246 = vmatprep.subr.bf16.mxu0 0
    %2247 = vmatpush1.bf16.xpose.msra.mxu0 %v2244
    %2248 = vmatprep.subr.bf16.mxu0 0
    %2249 = vmatpush1.bf16.xpose.msra.mxu0 0
    %2250 = vmatprep.subr.bf16.mxu0 0
    %2251 = vmatpush1.bf16.xpose.msra.mxu0 0
    %2252 = vmatprep.subr.bf16.mxu0 0
    %2253 = vmatpush1.bf16.xpose.msra.mxu0 0
    %2254 = vmatprep.subr.bf16.mxu0 0
    %2255 = vmatpush1.bf16.xpose.msra.mxu0 0
    %2256 = vmatprep.subr.bf16.mxu0 0
    %2257 = vmatpush1.bf16.xpose.msra.mxu0 0
    %2258 = vmatprep.subr.bf16.mxu0 0
    %2259 = vmatpush1.bf16.xpose.msra.mxu0 0
    %2260 = vmatprep.subr.bf16.mxu0 0
    %2261 = vmatpush1.bf16.xpose.msra.mxu0 0
    %2262 = vmatprep.subr.bf16.mxu0 0
    %2263 = vmatpush1.bf16.xpose.msra.mxu0 0
    %2264 = vmatprep.subr.bf16.mxu0 0
    %2265 = vmatpush1.bf16.xpose.msra.mxu0 0
    %2266 = vmatprep.subr.bf16.mxu0 0
    %2267 = vmatpush1.bf16.xpose.msra.mxu0 0
    %2268 = vmatprep.subr.bf16.mxu0 0
    %2269 = vmatpush1.bf16.xpose.msra.mxu0 0
    %2270 = vmatprep.subr.bf16.mxu0 0
    %2271 = vmatpush1.bf16.xpose.msra.mxu0 0
    %2272 = vmatprep.subr.bf16.mxu0 0
    %2273 = vmatpush1.bf16.xpose.msra.mxu0 0
    %2274 = vmatprep.subr.bf16.mxu0 0
    %2275 = vmatpush1.bf16.xpose.msra.mxu0 0
    %2276 = vmatprep.subr.bf16.mxu0 0
    %2277 = vmatpush1.bf16.xpose.msra.mxu0 0
    %2278 = vmatprep.mubr.bf16.mxu0 0
    %2279 = vmatmul.mubr.bf16.gmra.mrb[0].mxu0 %v2241
    %v2280 = vpop.f32.mrb[0].mxu0
    %v2281 = vadd.f32 0.0, %v2280
    %v2282 = vpop.f32.mrb[0].mxu0
    %v2283 = vpop.f32.mrb[0].mxu0
    %v2284 = vpop.f32.mrb[0].mxu0
    %2285 = vdwg.mxu0
    %v2286 = vmul.f32 %v2229, 0.125
    %v2287 = vmul.f32 %v2281, 0.125
    %v2288 = vadd.f32 %v2286, %v736
    %v2289 = vadd.f32 %v2287, %v740
    %v2290 = vsel %vm745, %v2288, -inf
    %2291 = vmax.xlane.f32.xlu0 %v2290
    %v2292 = vpop.xlane.xlu0 %2291
    %v2293 = vsel %vm745, %v2289, -inf
    %2294 = vmax.xlane.f32.xlu0 %v2293
    %v2295 = vpop.xlane.xlu0 %2294
    %v2296 = vsub.f32 %v2288, %v2292
    %v2297 = vsub.f32 %v2289, %v2295
    %v2298 = vmul.f32 %v2296, 1.442695
    %v2299 = vpow.pop %v2298
    %v2300 = vmul.f32 %v2297, 1.442695
    %v2301 = vpow.pop %v2300
    %v2302 = vsel %vm745, %v2299, 0.0
    %2303 = vadd.xlane.f32.xlu0 %v2302
    %v2304 = vpop.xlane.xlu0 %2303
    %v2305 = vsel %vm745, %v2301, 0.0
    %2306 = vadd.xlane.f32.xlu0 %v2305
    %v2307 = vpop.xlane.xlu0 %2306
    %v2308 = vrcp.pop %v2304
    %v2309 = vrcp.pop %v2307
    %v2310 = vmul.f32 %v2299, %v2308
    %v2311 = vmul.f32 %v2301, %v2309
    %v2312 = vpack.c.bf16 %v2310, %v2310
    %v2313 = vpack.c.bf16 %v2311, %v2311
    %2315 = vrot.lane.b32.xlu0 %v1968, 64
    %v2316 = vpop.permute.xlu0 %2315
    %v2318 = vsel %vm745, %v2312, 0
    %v2321 = vsel %vm773, %v2316, 0
    %2323 = vmatprep.subr.bf16.mxu0 0
    %2324 = vmatpush1.bf16.msra.mxu0 %v2321
    %2325 = vmatprep.subr.bf16.mxu0 0
    %2326 = vmatpush1.bf16.msra.mxu0 0
    %2327 = vmatprep.subr.bf16.mxu0 0
    %2328 = vmatpush1.bf16.msra.mxu0 0
    %2329 = vmatprep.subr.bf16.mxu0 0
    %2330 = vmatpush1.bf16.msra.mxu0 0
    %2331 = vmatprep.subr.bf16.mxu0 0
    %2332 = vmatpush1.bf16.msra.mxu0 0
    %2333 = vmatprep.subr.bf16.mxu0 0
    %2334 = vmatpush1.bf16.msra.mxu0 0
    %2335 = vmatprep.subr.bf16.mxu0 0
    %2336 = vmatpush1.bf16.msra.mxu0 0
    %2337 = vmatprep.subr.bf16.mxu0 0
    %2338 = vmatpush1.bf16.msra.mxu0 0
    %2339 = vmatprep.subr.bf16.mxu0 0
    %2340 = vmatpush1.bf16.msra.mxu0 0
    %2341 = vmatprep.subr.bf16.mxu0 0
    %2342 = vmatpush1.bf16.msra.mxu0 0
    %2343 = vmatprep.subr.bf16.mxu0 0
    %2344 = vmatpush1.bf16.msra.mxu0 0
    %2345 = vmatprep.subr.bf16.mxu0 0
    %2346 = vmatpush1.bf16.msra.mxu0 0
    %2347 = vmatprep.subr.bf16.mxu0 0
    %2348 = vmatpush1.bf16.msra.mxu0 0
    %2349 = vmatprep.subr.bf16.mxu0 0
    %2350 = vmatpush1.bf16.msra.mxu0 0
    %2351 = vmatprep.subr.bf16.mxu0 0
    %2352 = vmatpush1.bf16.msra.mxu0 0
    %2353 = vmatprep.subr.bf16.mxu0 0
    %2354 = vmatpush1.bf16.msra.mxu0 0
    %2355 = vmatprep.mubr.bf16.mxu0 0
    %2356 = vmatmul.mubr.bf16.gmra.mrb[0].mxu0 %v2318
    %v2357 = vpop.f32.mrb[0].mxu0
    %v2358 = vadd.f32 0.0, %v2357
    %v2359 = vpop.f32.mrb[0].mxu0
    %v2360 = vpop.f32.mrb[0].mxu0
    %v2361 = vpop.f32.mrb[0].mxu0
    %2362 = vdwg.mxu0
    %2364 = vrot.lane.b32.xlu0 %v1969, 64
    %v2365 = vpop.permute.xlu0 %2364
    %v2367 = vsel %vm745, %v2313, 0
    %v2370 = vsel %vm773, %v2365, 0
    %2372 = vmatprep.subr.bf16.mxu0 0
    %2373 = vmatpush1.bf16.msra.mxu0 %v2370
    %2374 = vmatprep.subr.bf16.mxu0 0
    %2375 = vmatpush1.bf16.msra.mxu0 0
    %2376 = vmatprep.subr.bf16.mxu0 0
    %2377 = vmatpush1.bf16.msra.mxu0 0
    %2378 = vmatprep.subr.bf16.mxu0 0
    %2379 = vmatpush1.bf16.msra.mxu0 0
    %2380 = vmatprep.subr.bf16.mxu0 0
    %2381 = vmatpush1.bf16.msra.mxu0 0
    %2382 = vmatprep.subr.bf16.mxu0 0
    %2383 = vmatpush1.bf16.msra.mxu0 0
    %2384 = vmatprep.subr.bf16.mxu0 0
    %2385 = vmatpush1.bf16.msra.mxu0 0
    %2386 = vmatprep.subr.bf16.mxu0 0
    %2387 = vmatpush1.bf16.msra.mxu0 0
    %2388 = vmatprep.subr.bf16.mxu0 0
    %2389 = vmatpush1.bf16.msra.mxu0 0
    %2390 = vmatprep.subr.bf16.mxu0 0
    %2391 = vmatpush1.bf16.msra.mxu0 0
    %2392 = vmatprep.subr.bf16.mxu0 0
    %2393 = vmatpush1.bf16.msra.mxu0 0
    %2394 = vmatprep.subr.bf16.mxu0 0
    %2395 = vmatpush1.bf16.msra.mxu0 0
    %2396 = vmatprep.subr.bf16.mxu0 0
    %2397 = vmatpush1.bf16.msra.mxu0 0
    %2398 = vmatprep.subr.bf16.mxu0 0
    %2399 = vmatpush1.bf16.msra.mxu0 0
    %2400 = vmatprep.subr.bf16.mxu0 0
    %2401 = vmatpush1.bf16.msra.mxu0 0
    %2402 = vmatprep.subr.bf16.mxu0 0
    %2403 = vmatpush1.bf16.msra.mxu0 0
    %2404 = vmatprep.mubr.bf16.mxu0 0
    %2405 = vmatmul.mubr.bf16.gmra.mrb[0].mxu0 %v2367
    %v2406 = vpop.f32.mrb[0].mxu0
    %v2407 = vadd.f32 0.0, %v2406
    %v2408 = vpop.f32.mrb[0].mxu0
    %v2409 = vpop.f32.mrb[0].mxu0
    %v2410 = vpop.f32.mrb[0].mxu0
    %2411 = vdwg.mxu0
    %2414 = vrot.lane.b32.xlu0 %v2358, 64
    %v2415 = vpop.permute.xlu0 %2414
    %2416 = vrot.lane.b32.xlu0 %v2407, 64
    %v2417 = vpop.permute.xlu0 %2416
    %v2420 = vsel %vm638, %v2131, %v2415
    %v2421 = vsel %vm638, %v2177, %v2417
    %v2422 = vpack.c.bf16 %v2421, %v2420
    %v2424 = vlaneseq
    %v2425 = vshrl.u32 %v2424, 7
    %v2426 = vsub.s32 0, %v2425
    %v2427 = vrot.slane %v1718, %v2426
    %v2445 = vunpack.c.l.b16 %v1701
    %v2446 = vunpack.c.l.b16 %v1702
    %v2447 = vunpack.c.l.b16 %v1703
    %v2448 = vunpack.c.l.b16 %v1704
    %v2449 = vunpack.c.l.b16 %v1705
    %v2450 = vunpack.c.l.b16 %v1706
    %v2451 = vunpack.c.l.b16 %v1707
    %v2452 = vunpack.c.l.b16 %v1708
    %v2453 = vunpack.c.l.b16 %v1709
    %v2454 = vunpack.c.l.b16 %v1710
    %v2455 = vunpack.c.l.b16 %v1711
    %v2456 = vunpack.c.l.b16 %v1712
    %v2457 = vunpack.c.l.b16 %v1713
    %v2458 = vunpack.c.l.b16 %v1714
    %v2459 = vunpack.c.l.b16 %v1715
    %v2460 = vunpack.c.l.b16 %v1716
    %v2461 = vpack.c.b16 %v2446, %v2445
    %v2462 = vpack.c.b16 %v2448, %v2447
    %v2463 = vpack.c.b16 %v2450, %v2449
    %v2464 = vpack.c.b16 %v2452, %v2451
    %v2465 = vpack.c.b16 %v2454, %v2453
    %v2466 = vpack.c.b16 %v2456, %v2455
    %v2467 = vpack.c.b16 %v2458, %v2457
    %v2468 = vpack.c.b16 %v2460, %v2459
    %2477 = vmatprep.subr.bf16.mxu0 0
    %2478 = vmatpush1.bf16.xpose.msra.mxu0 %v2461
    %2479 = vmatprep.subr.bf16.mxu0 0
    %2480 = vmatpush1.bf16.xpose.msra.mxu0 %v2462
    %2481 = vmatprep.subr.bf16.mxu0 0
    %2482 = vmatpush1.bf16.xpose.msra.mxu0 %v2463
    %2483 = vmatprep.subr.bf16.mxu0 0
    %2484 = vmatpush1.bf16.xpose.msra.mxu0 %v2464
    %2485 = vmatprep.subr.bf16.mxu0 0
    %2486 = vmatpush1.bf16.xpose.msra.mxu0 %v2465
    %2487 = vmatprep.subr.bf16.mxu0 0
    %2488 = vmatpush1.bf16.xpose.msra.mxu0 %v2466
    %2489 = vmatprep.subr.bf16.mxu0 0
    %2490 = vmatpush1.bf16.xpose.msra.mxu0 %v2467
    %2491 = vmatprep.subr.bf16.mxu0 0
    %2492 = vmatpush1.bf16.xpose.msra.mxu0 %v2468
    %2493 = vmatprep.subr.bf16.mxu0 0
    %2494 = vmatpush1.bf16.xpose.msra.mxu0 0
    %2495 = vmatprep.subr.bf16.mxu0 0
    %2496 = vmatpush1.bf16.xpose.msra.mxu0 0
    %2497 = vmatprep.subr.bf16.mxu0 0
    %2498 = vmatpush1.bf16.xpose.msra.mxu0 0
    %2499 = vmatprep.subr.bf16.mxu0 0
    %2500 = vmatpush1.bf16.xpose.msra.mxu0 0
    %2501 = vmatprep.subr.bf16.mxu0 0
    %2502 = vmatpush1.bf16.xpose.msra.mxu0 0
    %2503 = vmatprep.subr.bf16.mxu0 0
    %2504 = vmatpush1.bf16.xpose.msra.mxu0 0
    %2505 = vmatprep.subr.bf16.mxu0 0
    %2506 = vmatpush1.bf16.xpose.msra.mxu0 0
    %2507 = vmatprep.subr.bf16.mxu0 0
    %2508 = vmatpush1.bf16.xpose.msra.mxu0 0
    %2509 = vmatprep.mubr.bf16.mxu0 0
    %2510 = vmatmul.mubr.bf16.gmra.mrb[0].mxu0 %v2422
    %v2511 = vpop.f32.mrb[0].mxu0
    %v2512 = vadd.f32 %v2427, %v2511
    %v2513 = vpop.f32.mrb[0].mxu0
    %v2514 = vpop.f32.mrb[0].mxu0
    %v2515 = vadd.f32 %v2427, %v2514
    %v2516 = vpop.f32.mrb[0].mxu0
    %2517 = vdwg.mxu0
    %v2518 = vadd.f32 %v1647, %v2512
    %v2519 = vadd.f32 %v1648, %v2515
    %s2520 = scalar_lea.vmem %s8, 1
    %v2521 = vld [vmem:[%s2520] sm:$0x1]
    %s2522 = scalar_lea.vmem %s9, 1
    %v2523 = vld [vmem:[%s2522] sm:$0x1]
    %2524 = vadd.xlane.f32.xlu0 %v2518
    %v2525 = vpop.xlane.xlu0 %2524
    %2526 = vadd.xlane.f32.xlu0 %v2519
    %v2527 = vpop.xlane.xlu0 %2526
    %v2528 = vmul.f32 %v2525, %v262
    %v2529 = vmul.f32 %v2527, %v262
    %v2530 = vsub.f32 %v2518, %v2528
    %v2531 = vsub.f32 %v2519, %v2529
    %v2532 = vmul.f32 %v2530, %v2530
    %v2533 = vmul.f32 %v2531, %v2531
    %2534 = vadd.xlane.f32.xlu0 %v2532
    %v2535 = vpop.xlane.xlu0 %2534
    %2536 = vadd.xlane.f32.xlu0 %v2533
    %v2537 = vpop.xlane.xlu0 %2536
    %v2538 = vmul.f32 %v2535, %v262
    %v2539 = vmul.f32 %v2537, %v262
    %v2540 = vadd.f32 %v2538, 1e-12
    %v2541 = vadd.f32 %v2539, 1e-12
    %v2542 = vrsqrt.pop %v2540
    %v2543 = vrsqrt.pop %v2541
    %v2544 = vmul.f32 %v2530, %v2542
    %v2545 = vmul.f32 %v2531, %v2543
    %v2547 = vlaneseq
    %v2548 = vshrl.u32 %v2547, 7
    %v2549 = vsub.s32 0, %v2548
    %v2550 = vrot.slane %v2521, %v2549
    %v2552 = vmul.f32 %v2544, %v2550
    %v2553 = vmul.f32 %v2545, %v2550
    %v2555 = vlaneseq
    %v2556 = vshrl.u32 %v2555, 7
    %v2557 = vsub.s32 0, %v2556
    %v2558 = vrot.slane %v2523, %v2557
    %v2560 = vadd.f32 %v2552, %v2558
    %v2561 = vadd.f32 %v2553, %v2558
    %s2562 = scalar_lea.vmem [#allocation11], 128
    %v2563 = vld [vmem:[%s2562] sm:$0xf]
    %v2564 = vld [vmem:[%s2562 + $0x4] sm:$0xf]
    %v2565 = vld [vmem:[%s2562 + $0x8] sm:$0xf]
    %v2566 = vld [vmem:[%s2562 + $0xc] sm:$0xf]
    %v2567 = vld [vmem:[%s2562 + $0x10] sm:$0xf]
    %v2568 = vld [vmem:[%s2562 + $0x14] sm:$0xf]
    %v2569 = vld [vmem:[%s2562 + $0x18] sm:$0xf]
    %v2570 = vld [vmem:[%s2562 + $0x1c] sm:$0xf]
    %v2571 = vld [vmem:[%s2562 + $0x20] sm:$0xf]
    %v2572 = vld [vmem:[%s2562 + $0x24] sm:$0xf]
    %v2573 = vld [vmem:[%s2562 + $0x28] sm:$0xf]
    %v2574 = vld [vmem:[%s2562 + $0x2c] sm:$0xf]
    %v2575 = vld [vmem:[%s2562 + $0x30] sm:$0xf]
    %v2576 = vld [vmem:[%s2562 + $0x34] sm:$0xf]
    %v2577 = vld [vmem:[%s2562 + $0x38] sm:$0xf]
    %v2578 = vld [vmem:[%s2562 + $0x3c] sm:$0xf]
    %v2579 = vld [vmem:[%s2562 + $0x40] sm:$0xf]
    %v2580 = vld [vmem:[%s2562 + $0x44] sm:$0xf]
    %v2581 = vld [vmem:[%s2562 + $0x48] sm:$0xf]
    %v2582 = vld [vmem:[%s2562 + $0x4c] sm:$0xf]
    %v2583 = vld [vmem:[%s2562 + $0x50] sm:$0xf]
    %v2584 = vld [vmem:[%s2562 + $0x54] sm:$0xf]
    %v2585 = vld [vmem:[%s2562 + $0x58] sm:$0xf]
    %v2586 = vld [vmem:[%s2562 + $0x5c] sm:$0xf]
    %v2587 = vld [vmem:[%s2562 + $0x60] sm:$0xf]
    %v2588 = vld [vmem:[%s2562 + $0x64] sm:$0xf]
    %v2589 = vld [vmem:[%s2562 + $0x68] sm:$0xf]
    %v2590 = vld [vmem:[%s2562 + $0x6c] sm:$0xf]
    %v2591 = vld [vmem:[%s2562 + $0x70] sm:$0xf]
    %v2592 = vld [vmem:[%s2562 + $0x74] sm:$0xf]
    %v2593 = vld [vmem:[%s2562 + $0x78] sm:$0xf]
    %v2594 = vld [vmem:[%s2562 + $0x7c] sm:$0xf]
    %s2595 = scalar_lea.vmem [#allocation13], 2
    %v2596 = vld [vmem:[%s2595] sm:$0x3]
    %v2597 = vpack.c.bf16 %v2561, %v2560
    %v2599 = vlaneseq
    %v2600 = vshrl.u32 %v2599, 7
    %v2601 = vsub.s32 0, %v2600
    %v2602 = vrot.slane %v2596, %v2601
    %v2603 = vlaneseq
    %v2604 = vshrl.u32 %v2603, 7
    %v2605 = vsub.s32 1, %v2604
    %v2606 = vrot.slane %v2596, %v2605
    %v2641 = vunpack.c.l.b16 %v2563
    %v2642 = vunpack.c.l.b16 %v2564
    %v2643 = vunpack.c.l.b16 %v2565
    %v2644 = vunpack.c.l.b16 %v2566
    %v2645 = vunpack.c.l.b16 %v2567
    %v2646 = vunpack.c.l.b16 %v2568
    %v2647 = vunpack.c.l.b16 %v2569
    %v2648 = vunpack.c.l.b16 %v2570
    %v2649 = vunpack.c.l.b16 %v2571
    %v2650 = vunpack.c.l.b16 %v2572
    %v2651 = vunpack.c.l.b16 %v2573
    %v2652 = vunpack.c.l.b16 %v2574
    %v2653 = vunpack.c.l.b16 %v2575
    %v2654 = vunpack.c.l.b16 %v2576
    %v2655 = vunpack.c.l.b16 %v2577
    %v2656 = vunpack.c.l.b16 %v2578
    %v2657 = vunpack.c.l.b16 %v2579
    %v2658 = vunpack.c.l.b16 %v2580
    %v2659 = vunpack.c.l.b16 %v2581
    %v2660 = vunpack.c.l.b16 %v2582
    %v2661 = vunpack.c.l.b16 %v2583
    %v2662 = vunpack.c.l.b16 %v2584
    %v2663 = vunpack.c.l.b16 %v2585
    %v2664 = vunpack.c.l.b16 %v2586
    %v2665 = vunpack.c.l.b16 %v2587
    %v2666 = vunpack.c.l.b16 %v2588
    %v2667 = vunpack.c.l.b16 %v2589
    %v2668 = vunpack.c.l.b16 %v2590
    %v2669 = vunpack.c.l.b16 %v2591
    %v2670 = vunpack.c.l.b16 %v2592
    %v2671 = vunpack.c.l.b16 %v2593
    %v2672 = vunpack.c.l.b16 %v2594
    %v2673 = vpack.c.b16 %v2642, %v2641
    %v2674 = vpack.c.b16 %v2644, %v2643
    %v2675 = vpack.c.b16 %v2646, %v2645
    %v2676 = vpack.c.b16 %v2648, %v2647
    %v2677 = vpack.c.b16 %v2650, %v2649
    %v2678 = vpack.c.b16 %v2652, %v2651
    %v2679 = vpack.c.b16 %v2654, %v2653
    %v2680 = vpack.c.b16 %v2656, %v2655
    %v2681 = vpack.c.b16 %v2658, %v2657
    %v2682 = vpack.c.b16 %v2660, %v2659
    %v2683 = vpack.c.b16 %v2662, %v2661
    %v2684 = vpack.c.b16 %v2664, %v2663
    %v2685 = vpack.c.b16 %v2666, %v2665
    %v2686 = vpack.c.b16 %v2668, %v2667
    %v2687 = vpack.c.b16 %v2670, %v2669
    %v2688 = vpack.c.b16 %v2672, %v2671
    %2705 = vmatprep.subr.bf16.mxu0 0
    %2706 = vmatpush1.bf16.xpose.msra.mxu0 %v2673
    %2707 = vmatprep.subr.bf16.mxu0 0
    %2708 = vmatpush1.bf16.xpose.msra.mxu0 %v2674
    %2709 = vmatprep.subr.bf16.mxu0 0
    %2710 = vmatpush1.bf16.xpose.msra.mxu0 %v2675
    %2711 = vmatprep.subr.bf16.mxu0 0
    %2712 = vmatpush1.bf16.xpose.msra.mxu0 %v2676
    %2713 = vmatprep.subr.bf16.mxu0 0
    %2714 = vmatpush1.bf16.xpose.msra.mxu0 %v2677
    %2715 = vmatprep.subr.bf16.mxu0 0
    %2716 = vmatpush1.bf16.xpose.msra.mxu0 %v2678
    %2717 = vmatprep.subr.bf16.mxu0 0
    %2718 = vmatpush1.bf16.xpose.msra.mxu0 %v2679
    %2719 = vmatprep.subr.bf16.mxu0 0
    %2720 = vmatpush1.bf16.xpose.msra.mxu0 %v2680
    %2721 = vmatprep.subr.bf16.mxu0 0
    %2722 = vmatpush1.bf16.xpose.msra.mxu0 %v2681
    %2723 = vmatprep.subr.bf16.mxu0 0
    %2724 = vmatpush1.bf16.xpose.msra.mxu0 %v2682
    %2725 = vmatprep.subr.bf16.mxu0 0
    %2726 = vmatpush1.bf16.xpose.msra.mxu0 %v2683
    %2727 = vmatprep.subr.bf16.mxu0 0
    %2728 = vmatpush1.bf16.xpose.msra.mxu0 %v2684
    %2729 = vmatprep.subr.bf16.mxu0 0
    %2730 = vmatpush1.bf16.xpose.msra.mxu0 %v2685
    %2731 = vmatprep.subr.bf16.mxu0 0
    %2732 = vmatpush1.bf16.xpose.msra.mxu0 %v2686
    %2733 = vmatprep.subr.bf16.mxu0 0
    %2734 = vmatpush1.bf16.xpose.msra.mxu0 %v2687
    %2735 = vmatprep.subr.bf16.mxu0 0
    %2736 = vmatpush1.bf16.xpose.msra.mxu0 %v2688
    %2737 = vmatprep.mubr.bf16.mxu0 0
    %2738 = vmatmul.mubr.bf16.gmra.mrb[0].mxu0 %v2597
    %v2739 = vpop.f32.mrb[0].mxu0
    %v2740 = vadd.f32 %v2602, %v2739
    %v2741 = vpop.f32.mrb[0].mxu0
    %v2742 = vadd.f32 %v2606, %v2741
    %v2743 = vpop.f32.mrb[0].mxu0
    %v2744 = vadd.f32 %v2602, %v2743
    %v2745 = vpop.f32.mrb[0].mxu0
    %v2746 = vadd.f32 %v2606, %v2745
    %2747 = vdwg.mxu0
    %v2748 = vmul.f32 %v2740, %v2740
    %v2749 = vmul.f32 %v2742, %v2742
    %v2750 = vmul.f32 %v2744, %v2744
    %v2751 = vmul.f32 %v2746, %v2746
    %v2752 = vmul.f32 %v2740, %v2748
    %v2753 = vmul.f32 %v2742, %v2749
    %v2754 = vmul.f32 %v2744, %v2750
    %v2755 = vmul.f32 %v2746, %v2751
    %v2756 = vmul.f32 %v2752, 0.044715
    %v2757 = vmul.f32 %v2753, 0.044715
    %v2758 = vmul.f32 %v2754, 0.044715
    %v2759 = vmul.f32 %v2755, 0.044715
    %v2760 = vadd.f32 %v2740, %v2756
    %v2761 = vadd.f32 %v2742, %v2757
    %v2762 = vadd.f32 %v2744, %v2758
    %v2763 = vadd.f32 %v2746, %v2759
    %v2764 = vmul.f32 %v2760, 0.7978846
    %v2765 = vmul.f32 %v2761, 0.7978846
    %v2766 = vmul.f32 %v2762, 0.7978846
    %v2767 = vmul.f32 %v2763, 0.7978846
    %v2768 = vtanh.pop %v2764
    %v2769 = vtanh.pop %v2765
    %v2770 = vtanh.pop %v2766
    %v2771 = vtanh.pop %v2767
    %v2772 = vadd.f32 %v2768, 1.0
    %v2773 = vadd.f32 %v2769, 1.0
    %v2774 = vadd.f32 %v2770, 1.0
    %v2775 = vadd.f32 %v2771, 1.0
    %v2776 = vmul.f32 %v2772, 0.5
    %v2777 = vmul.f32 %v2773, 0.5
    %v2778 = vmul.f32 %v2774, 0.5
    %v2779 = vmul.f32 %v2775, 0.5
    %v2780 = vmul.f32 %v2740, %v2776
    %v2781 = vmul.f32 %v2742, %v2777
    %v2782 = vmul.f32 %v2744, %v2778
    %v2783 = vmul.f32 %v2746, %v2779
    %s2784 = scalar_lea.vmem %s12, 128
    %v2785 = vld [vmem:[%s2784] sm:$0xff]
    %v2786 = vld [vmem:[%s2784 + $0x8] sm:$0xff]
    %v2787 = vld [vmem:[%s2784 + $0x10] sm:$0xff]
    %v2788 = vld [vmem:[%s2784 + $0x18] sm:$0xff]
    %v2789 = vld [vmem:[%s2784 + $0x20] sm:$0xff]
    %v2790 = vld [vmem:[%s2784 + $0x28] sm:$0xff]
    %v2791 = vld [vmem:[%s2784 + $0x30] sm:$0xff]
    %v2792 = vld [vmem:[%s2784 + $0x38] sm:$0xff]
    %v2793 = vld [vmem:[%s2784 + $0x40] sm:$0xff]
    %v2794 = vld [vmem:[%s2784 + $0x48] sm:$0xff]
    %v2795 = vld [vmem:[%s2784 + $0x50] sm:$0xff]
    %v2796 = vld [vmem:[%s2784 + $0x58] sm:$0xff]
    %v2797 = vld [vmem:[%s2784 + $0x60] sm:$0xff]
    %v2798 = vld [vmem:[%s2784 + $0x68] sm:$0xff]
    %v2799 = vld [vmem:[%s2784 + $0x70] sm:$0xff]
    %v2800 = vld [vmem:[%s2784 + $0x78] sm:$0xff]
    %s2801 = scalar_lea.vmem [#allocation14], 1
    %v2802 = vld [vmem:[%s2801] sm:$0x1]
    %v2803 = vpack.c.bf16 %v2782, %v2780
    %v2804 = vpack.c.bf16 %v2783, %v2781
    %v2806 = vlaneseq
    %v2807 = vshrl.u32 %v2806, 7
    %v2808 = vsub.s32 0, %v2807
    %v2809 = vrot.slane %v2802, %v2808
    %v2827 = vunpack.c.l.b16 %v2785
    %v2828 = vunpack.c.h.b16 %v2785
    %v2829 = vunpack.c.l.b16 %v2786
    %v2830 = vunpack.c.h.b16 %v2786
    %v2831 = vunpack.c.l.b16 %v2787
    %v2832 = vunpack.c.h.b16 %v2787
    %v2833 = vunpack.c.l.b16 %v2788
    %v2834 = vunpack.c.h.b16 %v2788
    %v2835 = vunpack.c.l.b16 %v2789
    %v2836 = vunpack.c.h.b16 %v2789
    %v2837 = vunpack.c.l.b16 %v2790
    %v2838 = vunpack.c.h.b16 %v2790
    %v2839 = vunpack.c.l.b16 %v2791
    %v2840 = vunpack.c.h.b16 %v2791
    %v2841 = vunpack.c.l.b16 %v2792
    %v2842 = vunpack.c.h.b16 %v2792
    %v2843 = vunpack.c.l.b16 %v2793
    %v2844 = vunpack.c.h.b16 %v2793
    %v2845 = vunpack.c.l.b16 %v2794
    %v2846 = vunpack.c.h.b16 %v2794
    %v2847 = vunpack.c.l.b16 %v2795
    %v2848 = vunpack.c.h.b16 %v2795
    %v2849 = vunpack.c.l.b16 %v2796
    %v2850 = vunpack.c.h.b16 %v2796
    %v2851 = vunpack.c.l.b16 %v2797
    %v2852 = vunpack.c.h.b16 %v2797
    %v2853 = vunpack.c.l.b16 %v2798
    %v2854 = vunpack.c.h.b16 %v2798
    %v2855 = vunpack.c.l.b16 %v2799
    %v2856 = vunpack.c.h.b16 %v2799
    %v2857 = vunpack.c.l.b16 %v2800
    %v2858 = vunpack.c.h.b16 %v2800
    %v2859 = vpack.c.b16 %v2829, %v2827
    %v2860 = vpack.c.b16 %v2830, %v2828
    %v2861 = vpack.c.b16 %v2833, %v2831
    %v2862 = vpack.c.b16 %v2834, %v2832
    %v2863 = vpack.c.b16 %v2837, %v2835
    %v2864 = vpack.c.b16 %v2838, %v2836
    %v2865 = vpack.c.b16 %v2841, %v2839
    %v2866 = vpack.c.b16 %v2842, %v2840
    %v2867 = vpack.c.b16 %v2845, %v2843
    %v2868 = vpack.c.b16 %v2846, %v2844
    %v2869 = vpack.c.b16 %v2849, %v2847
    %v2870 = vpack.c.b16 %v2850, %v2848
    %v2871 = vpack.c.b16 %v2853, %v2851
    %v2872 = vpack.c.b16 %v2854, %v2852
    %v2873 = vpack.c.b16 %v2857, %v2855
    %v2874 = vpack.c.b16 %v2858, %v2856
    %2891 = vmatprep.subr.bf16.mxu0 %v2860
    %2892 = vmatpush1.bf16.xpose.msra.mxu0 %v2859
    %2893 = vmatprep.subr.bf16.mxu0 %v2862
    %2894 = vmatpush1.bf16.xpose.msra.mxu0 %v2861
    %2895 = vmatprep.subr.bf16.mxu0 %v2864
    %2896 = vmatpush1.bf16.xpose.msra.mxu0 %v2863
    %2897 = vmatprep.subr.bf16.mxu0 %v2866
    %2898 = vmatpush1.bf16.xpose.msra.mxu0 %v2865
    %2899 = vmatprep.subr.bf16.mxu0 %v2868
    %2900 = vmatpush1.bf16.xpose.msra.mxu0 %v2867
    %2901 = vmatprep.subr.bf16.mxu0 %v2870
    %2902 = vmatpush1.bf16.xpose.msra.mxu0 %v2869
    %2903 = vmatprep.subr.bf16.mxu0 %v2872
    %2904 = vmatpush1.bf16.xpose.msra.mxu0 %v2871
    %2905 = vmatprep.subr.bf16.mxu0 %v2874
    %2906 = vmatpush1.bf16.xpose.msra.mxu0 %v2873
    %2907 = vmatprep.subr.bf16.mxu0 0
    %2908 = vmatpush1.bf16.xpose.msra.mxu0 0
    %2909 = vmatprep.subr.bf16.mxu0 0
    %2910 = vmatpush1.bf16.xpose.msra.mxu0 0
    %2911 = vmatprep.subr.bf16.mxu0 0
    %2912 = vmatpush1.bf16.xpose.msra.mxu0 0
    %2913 = vmatprep.subr.bf16.mxu0 0
    %2914 = vmatpush1.bf16.xpose.msra.mxu0 0
    %2915 = vmatprep.subr.bf16.mxu0 0
    %2916 = vmatpush1.bf16.xpose.msra.mxu0 0
    %2917 = vmatprep.subr.bf16.mxu0 0
    %2918 = vmatpush1.bf16.xpose.msra.mxu0 0
    %2919 = vmatprep.subr.bf16.mxu0 0
    %2920 = vmatpush1.bf16.xpose.msra.mxu0 0
    %2921 = vmatprep.subr.bf16.mxu0 0
    %2922 = vmatpush1.bf16.xpose.msra.mxu0 0
    %2923 = vmatprep.mubr.bf16.mxu0 %v2804
    %2924 = vmatmul.mubr.bf16.gmra.mrb[0].mxu0 %v2803
    %v2925 = vpop.f32.mrb[0].mxu0
    %v2926 = vadd.f32 %v2809, %v2925
    %v2927 = vpop.f32.mrb[0].mxu0
    %v2928 = vpop.f32.mrb[0].mxu0
    %v2929 = vadd.f32 %v2809, %v2928
    %v2930 = vpop.f32.mrb[0].mxu0
    %2931 = vdwg.mxu0
    %v2932 = vadd.f32 %v2560, %v2926
    %v2933 = vadd.f32 %v2561, %v2929
    %s2934 = scalar_lea.vmem %s14, 1
    %v2935 = vld [vmem:[%s2934] sm:$0x1]
    %s2936 = scalar_lea.vmem %s15, 1
    %v2937 = vld [vmem:[%s2936] sm:$0x1]
    %2938 = vadd.xlane.f32.xlu0 %v2932
    %v2939 = vpop.xlane.xlu0 %2938
    %2940 = vadd.xlane.f32.xlu0 %v2933
    %v2941 = vpop.xlane.xlu0 %2940
    %v2942 = vmul.f32 %v2939, %v262
    %v2943 = vmul.f32 %v2941, %v262
    %v2944 = vsub.f32 %v2932, %v2942
    %v2945 = vsub.f32 %v2933, %v2943
    %v2946 = vmul.f32 %v2944, %v2944
    %v2947 = vmul.f32 %v2945, %v2945
    %2948 = vadd.xlane.f32.xlu0 %v2946
    %v2949 = vpop.xlane.xlu0 %2948
    %2950 = vadd.xlane.f32.xlu0 %v2947
    %v2951 = vpop.xlane.xlu0 %2950
    %v2952 = vmul.f32 %v2949, %v262
    %v2953 = vmul.f32 %v2951, %v262
    %v2954 = vadd.f32 %v2952, 1e-12
    %v2955 = vadd.f32 %v2953, 1e-12
    %v2956 = vrsqrt.pop %v2954
    %v2957 = vrsqrt.pop %v2955
    %v2958 = vmul.f32 %v2944, %v2956
    %v2959 = vmul.f32 %v2945, %v2957
    %v2961 = vlaneseq
    %v2962 = vshrl.u32 %v2961, 7
    %v2963 = vsub.s32 0, %v2962
    %v2964 = vrot.slane %v2935, %v2963
    %v2966 = vmul.f32 %v2958, %v2964
    %v2967 = vmul.f32 %v2959, %v2964
    %v2969 = vlaneseq
    %v2970 = vshrl.u32 %v2969, 7
    %v2971 = vsub.s32 0, %v2970
    %v2972 = vrot.slane %v2937, %v2971
    %v2974 = vadd.f32 %v2966, %v2972
    %v2975 = vadd.f32 %v2967, %v2972
    %v2976 = vld [vmem:[#allocation16] sm:$0xf]
    %v2977 = vld [vmem:[#allocation16 + $0x4] sm:$0xf]
    %v2978 = vld [vmem:[#allocation16 + $0x8] sm:$0xf]
    %v2979 = vld [vmem:[#allocation16 + $0xc] sm:$0xf]
    %v2980 = vld [vmem:[#allocation16 + $0x10] sm:$0xf]
    %v2981 = vld [vmem:[#allocation16 + $0x14] sm:$0xf]
    %v2982 = vld [vmem:[#allocation16 + $0x18] sm:$0xf]
    %v2983 = vld [vmem:[#allocation16 + $0x1c] sm:$0xf]
    %v2984 = vld [vmem:[#allocation16 + $0x20] sm:$0xf]
    %v2985 = vld [vmem:[#allocation16 + $0x24] sm:$0xf]
    %v2986 = vld [vmem:[#allocation16 + $0x28] sm:$0xf]
    %v2987 = vld [vmem:[#allocation16 + $0x2c] sm:$0xf]
    %v2988 = vld [vmem:[#allocation16 + $0x30] sm:$0xf]
    %v2989 = vld [vmem:[#allocation16 + $0x34] sm:$0xf]
    %v2990 = vld [vmem:[#allocation16 + $0x38] sm:$0xf]
    %v2991 = vld [vmem:[#allocation16 + $0x3c] sm:$0xf]
    %v2992 = vld [vmem:[#allocation17] sm:$0x1]
    %v2993 = vpack.c.bf16 %v2975, %v2974
    %v2995 = vlaneseq
    %v2996 = vshrl.u32 %v2995, 7
    %v2997 = vsub.s32 0, %v2996
    %v2998 = vrot.slane %v2992, %v2997
    %v3016 = vunpack.c.l.b16 %v2976
    %v3017 = vunpack.c.l.b16 %v2977
    %v3018 = vunpack.c.l.b16 %v2978
    %v3019 = vunpack.c.l.b16 %v2979
    %v3020 = vunpack.c.l.b16 %v2980
    %v3021 = vunpack.c.l.b16 %v2981
    %v3022 = vunpack.c.l.b16 %v2982
    %v3023 = vunpack.c.l.b16 %v2983
    %v3024 = vunpack.c.l.b16 %v2984
    %v3025 = vunpack.c.l.b16 %v2985
    %v3026 = vunpack.c.l.b16 %v2986
    %v3027 = vunpack.c.l.b16 %v2987
    %v3028 = vunpack.c.l.b16 %v2988
    %v3029 = vunpack.c.l.b16 %v2989
    %v3030 = vunpack.c.l.b16 %v2990
    %v3031 = vunpack.c.l.b16 %v2991
    %v3032 = vpack.c.b16 %v3017, %v3016
    %v3033 = vpack.c.b16 %v3019, %v3018
    %v3034 = vpack.c.b16 %v3021, %v3020
    %v3035 = vpack.c.b16 %v3023, %v3022
    %v3036 = vpack.c.b16 %v3025, %v3024
    %v3037 = vpack.c.b16 %v3027, %v3026
    %v3038 = vpack.c.b16 %v3029, %v3028
    %v3039 = vpack.c.b16 %v3031, %v3030
    %3048 = vmatprep.subr.bf16.mxu0 0
    %3049 = vmatpush1.bf16.xpose.msra.mxu0 %v3032
    %3050 = vmatprep.subr.bf16.mxu0 0
    %3051 = vmatpush1.bf16.xpose.msra.mxu0 %v3033
    %3052 = vmatprep.subr.bf16.mxu0 0
    %3053 = vmatpush1.bf16.xpose.msra.mxu0 %v3034
    %3054 = vmatprep.subr.bf16.mxu0 0
    %3055 = vmatpush1.bf16.xpose.msra.mxu0 %v3035
    %3056 = vmatprep.subr.bf16.mxu0 0
    %3057 = vmatpush1.bf16.xpose.msra.mxu0 %v3036
    %3058 = vmatprep.subr.bf16.mxu0 0
    %3059 = vmatpush1.bf16.xpose.msra.mxu0 %v3037
    %3060 = vmatprep.subr.bf16.mxu0 0
    %3061 = vmatpush1.bf16.xpose.msra.mxu0 %v3038
    %3062 = vmatprep.subr.bf16.mxu0 0
    %3063 = vmatpush1.bf16.xpose.msra.mxu0 %v3039
    %3064 = vmatprep.subr.bf16.mxu0 0
    %3065 = vmatpush1.bf16.xpose.msra.mxu0 0
    %3066 = vmatprep.subr.bf16.mxu0 0
    %3067 = vmatpush1.bf16.xpose.msra.mxu0 0
    %3068 = vmatprep.subr.bf16.mxu0 0
    %3069 = vmatpush1.bf16.xpose.msra.mxu0 0
    %3070 = vmatprep.subr.bf16.mxu0 0
    %3071 = vmatpush1.bf16.xpose.msra.mxu0 0
    %3072 = vmatprep.subr.bf16.mxu0 0
    %3073 = vmatpush1.bf16.xpose.msra.mxu0 0
    %3074 = vmatprep.subr.bf16.mxu0 0
    %3075 = vmatpush1.bf16.xpose.msra.mxu0 0
    %3076 = vmatprep.subr.bf16.mxu0 0
    %3077 = vmatpush1.bf16.xpose.msra.mxu0 0
    %3078 = vmatprep.subr.bf16.mxu0 0
    %3079 = vmatpush1.bf16.xpose.msra.mxu0 0
    %3080 = vmatprep.mubr.bf16.mxu0 0
    %3081 = vmatmul.mubr.bf16.gmra.mrb[0].mxu0 %v2993
    %v3082 = vpop.f32.mrb[0].mxu0
    %v3083 = vadd.f32 %v2998, %v3082
    %v3084 = vpop.f32.mrb[0].mxu0
    %v3085 = vpop.f32.mrb[0].mxu0
    %v3086 = vadd.f32 %v2998, %v3085
    %v3087 = vpop.f32.mrb[0].mxu0
    %3088 = vdwg.mxu0
    %v3089 = vmul.f32 %v3083, %v3083
    %v3090 = vmul.f32 %v3086, %v3086
    %v3091 = vmul.f32 %v3083, %v3089
    %v3092 = vmul.f32 %v3086, %v3090
    %v3093 = vmul.f32 %v3091, 0.044715
    %v3094 = vmul.f32 %v3092, 0.044715
    %v3095 = vadd.f32 %v3083, %v3093
    %v3096 = vadd.f32 %v3086, %v3094
    %v3097 = vmul.f32 %v3095, 0.7978846
    %v3098 = vmul.f32 %v3096, 0.7978846
    %v3099 = vtanh.pop %v3097
    %v3100 = vtanh.pop %v3098
    %v3101 = vadd.f32 %v3099, 1.0
    %v3102 = vadd.f32 %v3100, 1.0
    %v3103 = vmul.f32 %v3101, 0.5
    %v3104 = vmul.f32 %v3102, 0.5
    %v3105 = vmul.f32 %v3083, %v3103
    %v3106 = vmul.f32 %v3086, %v3104
    %v3107 = vld [vmem:[#allocation19] sm:$0x1]
    %v3108 = vld [vmem:[#allocation20] sm:$0x1]
    %3109 = vadd.xlane.f32.xlu0 %v3105
    %v3110 = vpop.xlane.xlu0 %3109
    %3111 = vadd.xlane.f32.xlu0 %v3106
    %v3112 = vpop.xlane.xlu0 %3111
    %v3113 = vmul.f32 %v3110, %v262
    %v3114 = vmul.f32 %v3112, %v262
    %v3115 = vsub.f32 %v3105, %v3113
    %v3116 = vsub.f32 %v3106, %v3114
    %v3117 = vmul.f32 %v3115, %v3115
    %v3118 = vmul.f32 %v3116, %v3116
    %3119 = vadd.xlane.f32.xlu0 %v3117
    %v3120 = vpop.xlane.xlu0 %3119
    %3121 = vadd.xlane.f32.xlu0 %v3118
    %v3122 = vpop.xlane.xlu0 %3121
    %v3123 = vmul.f32 %v3120, %v262
    %v3124 = vmul.f32 %v3122, %v262
    %v3125 = vadd.f32 %v3123, 1e-12
    %v3126 = vadd.f32 %v3124, 1e-12
    %v3127 = vrsqrt.pop %v3125
    %v3128 = vrsqrt.pop %v3126
    %v3129 = vmul.f32 %v3115, %v3127
    %v3130 = vmul.f32 %v3116, %v3128
    %v3132 = vlaneseq
    %v3133 = vshrl.u32 %v3132, 7
    %v3134 = vsub.s32 0, %v3133
    %v3135 = vrot.slane %v3107, %v3134
    %v3137 = vmul.f32 %v3129, %v3135
    %v3138 = vmul.f32 %v3130, %v3135
    %v3140 = vlaneseq
    %v3141 = vshrl.u32 %v3140, 7
    %v3142 = vsub.s32 0, %v3141
    %v3143 = vrot.slane %v3108, %v3142
    %v3145 = vadd.f32 %v3137, %v3143
    %v3146 = vadd.f32 %v3138, %v3143
    %v3147 = vld [vmem:[#allocation22] sm:$0xf]
    %v3148 = vld [vmem:[#allocation22 + $0x4] sm:$0xf]
    %v3149 = vld [vmem:[#allocation22 + $0x8] sm:$0xf]
    %v3150 = vld [vmem:[#allocation22 + $0xc] sm:$0xf]
    %v3151 = vld [vmem:[#allocation22 + $0x10] sm:$0xf]
    %v3152 = vld [vmem:[#allocation22 + $0x14] sm:$0xf]
    %v3153 = vld [vmem:[#allocation22 + $0x18] sm:$0xf]
    %v3154 = vld [vmem:[#allocation22 + $0x1c] sm:$0xf]
    %v3155 = vld [vmem:[#allocation22 + $0x20] sm:$0xf]
    %v3156 = vld [vmem:[#allocation22 + $0x24] sm:$0xf]
    %v3157 = vld [vmem:[#allocation22 + $0x28] sm:$0xf]
    %v3158 = vld [vmem:[#allocation22 + $0x2c] sm:$0xf]
    %v3159 = vld [vmem:[#allocation22 + $0x30] sm:$0xf]
    %v3160 = vld [vmem:[#allocation22 + $0x34] sm:$0xf]
    %v3161 = vld [vmem:[#allocation22 + $0x38] sm:$0xf]
    %v3162 = vld [vmem:[#allocation22 + $0x3c] sm:$0xf]
    %v3163 = vld [vmem:[#allocation23] sm:$0x1]
    %v3164 = vpack.c.bf16 %v3146, %v3145
    %v3166 = vlaneseq
    %v3167 = vshrl.u32 %v3166, 7
    %v3168 = vsub.s32 0, %v3167
    %v3169 = vrot.slane %v3163, %v3168
    %v3187 = vunpack.c.l.b16 %v3147
    %v3188 = vunpack.c.l.b16 %v3148
    %v3189 = vunpack.c.l.b16 %v3149
    %v3190 = vunpack.c.l.b16 %v3150
    %v3191 = vunpack.c.l.b16 %v3151
    %v3192 = vunpack.c.l.b16 %v3152
    %v3193 = vunpack.c.l.b16 %v3153
    %v3194 = vunpack.c.l.b16 %v3154
    %v3195 = vunpack.c.l.b16 %v3155
    %v3196 = vunpack.c.l.b16 %v3156
    %v3197 = vunpack.c.l.b16 %v3157
    %v3198 = vunpack.c.l.b16 %v3158
    %v3199 = vunpack.c.l.b16 %v3159
    %v3200 = vunpack.c.l.b16 %v3160
    %v3201 = vunpack.c.l.b16 %v3161
    %v3202 = vunpack.c.l.b16 %v3162
    %v3203 = vpack.c.b16 %v3188, %v3187
    %v3204 = vpack.c.b16 %v3190, %v3189
    %v3205 = vpack.c.b16 %v3192, %v3191
    %v3206 = vpack.c.b16 %v3194, %v3193
    %v3207 = vpack.c.b16 %v3196, %v3195
    %v3208 = vpack.c.b16 %v3198, %v3197
    %v3209 = vpack.c.b16 %v3200, %v3199
    %v3210 = vpack.c.b16 %v3202, %v3201
    %3219 = vmatprep.subr.bf16.mxu0 0
    %3220 = vmatpush1.bf16.xpose.msra.mxu0 %v3203
    %3221 = vmatprep.subr.bf16.mxu0 0
    %3222 = vmatpush1.bf16.xpose.msra.mxu0 %v3204
    %3223 = vmatprep.subr.bf16.mxu0 0
    %3224 = vmatpush1.bf16.xpose.msra.mxu0 %v3205
    %3225 = vmatprep.subr.bf16.mxu0 0
    %3226 = vmatpush1.bf16.xpose.msra.mxu0 %v3206
    %3227 = vmatprep.subr.bf16.mxu0 0
    %3228 = vmatpush1.bf16.xpose.msra.mxu0 %v3207
    %3229 = vmatprep.subr.bf16.mxu0 0
    %3230 = vmatpush1.bf16.xpose.msra.mxu0 %v3208
    %3231 = vmatprep.subr.bf16.mxu0 0
    %3232 = vmatpush1.bf16.xpose.msra.mxu0 %v3209
    %3233 = vmatprep.subr.bf16.mxu0 0
    %3234 = vmatpush1.bf16.xpose.msra.mxu0 %v3210
    %3235 = vmatprep.subr.bf16.mxu0 0
    %3236 = vmatpush1.bf16.xpose.msra.mxu0 0
    %3237 = vmatprep.subr.bf16.mxu0 0
    %3238 = vmatpush1.bf16.xpose.msra.mxu0 0
    %3239 = vmatprep.subr.bf16.mxu0 0
    %3240 = vmatpush1.bf16.xpose.msra.mxu0 0
    %3241 = vmatprep.subr.bf16.mxu0 0
    %3242 = vmatpush1.bf16.xpose.msra.mxu0 0
    %3243 = vmatprep.subr.bf16.mxu0 0
    %3244 = vmatpush1.bf16.xpose.msra.mxu0 0
    %3245 = vmatprep.subr.bf16.mxu0 0
    %3246 = vmatpush1.bf16.xpose.msra.mxu0 0
    %3247 = vmatprep.subr.bf16.mxu0 0
    %3248 = vmatpush1.bf16.xpose.msra.mxu0 0
    %3249 = vmatprep.subr.bf16.mxu0 0
    %3250 = vmatpush1.bf16.xpose.msra.mxu0 0
    %3251 = vmatprep.mubr.bf16.mxu0 0
    %3252 = vmatmul.mubr.bf16.gmra.mrb[0].mxu0 %v3164
    %v3253 = vpop.f32.mrb[0].mxu0
    %v3254 = vadd.f32 %v3169, %v3253
    %v3255 = vpop.f32.mrb[0].mxu0
    %v3256 = vpop.f32.mrb[0].mxu0
    %v3257 = vadd.f32 %v3169, %v3256
    %v3258 = vpop.f32.mrb[0].mxu0
    %3259 = vdwg.mxu0
    %v3260 = vld [vmem:[%s22] sm:$0xff]
    %v3261 = vld [vmem:[%s22 + $0x8] sm:$0xff]
    %v3262 = vlaneseq
    %v3263 = vand.u32 %v3262, 127
    %3264 = vmax.xlane.f32.xlu0 %v3254
    %v3265 = vpop.xlane.xlu0 %3264
    %3266 = vmax.xlane.f32.xlu0 %v3257
    %v3267 = vpop.xlane.xlu0 %3266
    %v3268 = vsub.f32 %v3254, %v3265
    %v3269 = vsub.f32 %v3257, %v3267
    %v3270 = vmul.f32 %v3268, 1.442695
    %v3271 = vpow.pop %v3270
    %v3272 = vmul.f32 %v3269, 1.442695
    %v3273 = vpow.pop %v3272
    %3274 = vadd.xlane.f32.xlu0 %v3271
    %v3275 = vpop.xlane.xlu0 %3274
    %3276 = vadd.xlane.f32.xlu0 %v3273
    %v3277 = vpop.xlane.xlu0 %3276
    %v3278 = vlog2.pop %v3275
    %v3279 = vmul.f32 %v3278, 0.6931472
    %v3280 = vlog2.pop %v3277
    %v3281 = vmul.f32 %v3280, 0.6931472
    %v3282 = vadd.f32 %v3265, %v3279
    %v3283 = vadd.f32 %v3267, %v3281
    %3284 = vset.pattern.permute.xlu0 0
    %3285 = vperm.xlu0 %3284, %v3260
    %v3286 = vpop.permute.xlu0 %3285
    %3287 = vset.pattern.permute.xlu0 0
    %3288 = vperm.xlu0 %3287, %v3261
    %v3289 = vpop.permute.xlu0 %3288
    %vm3290 = vcmp.eq.s32.totalorder %v3263, %v3286
    %vm3291 = vcmp.eq.s32.totalorder %v3263, %v3289
    %v3292 = vsel %vm3290, 1, 0
    %v3293 = vsel %vm3291, 1, 0
    %v3294 = vcvt.s32.f32 %v3292
    %v3295 = vcvt.s32.f32 %v3293
    %v3296 = vmul.f32 %v3294, %v3254
    %v3297 = vmul.f32 %v3295, %v3257
    %3298 = vadd.xlane.f32.xlu0 %v3296
    %v3299 = vpop.xlane.xlu0 %3298
    %3300 = vadd.xlane.f32.xlu0 %v3297
    %v3301 = vpop.xlane.xlu0 %3300
    %vm3302 = vcmp.ne.s32.totalorder %v3260, 4294967196
    %vm3303 = vcmp.ne.s32.totalorder %v3261, 4294967196
    %v3304 = vsel %vm3302, 1, 0
    %v3305 = vsel %vm3303, 1, 0
    %v3306 = vcvt.s32.f32 %v3304
    %v3307 = vcvt.s32.f32 %v3305
    %v3308 = vsub.f32 %v3282, %v3299
    %v3309 = vsub.f32 %v3283, %v3301
    %v3310 = vmul.f32 %v3308, %v3306
    %v3311 = vmul.f32 %v3309, %v3307
    %vm3312 = vcmask 7168
    %v3313 = vsel %vm3312, %v3310, 0.0
    %v3314 = vsel %vm3312, %v3311, 0.0
    %v3315 = vadd.f32 %v3313, %v3314
    %3316 = vadd.xlane.f32.xlu0 %v3315
    %v3317 = vpop.xlane.xlu0 %3316
    %v3318 = vrot.slane %v3317, 4
    %v3319 = vadd.f32 %v3317, %v3318
    %v3320 = vrot.slane %v3319, 2
    %v3321 = vadd.f32 %v3319, %v3320
    %v3322 = vrot.slane %v3321, 1
    %v3323 = vadd.f32 %v3321, %v3322
    %s3324 = vtos %v3323
    %v3325 = vstv %s3324
    %v3326 = vsel %vm3312, %v3306, 0.0
    %v3327 = vsel %vm3312, %v3307, 0.0
    %v3328 = vadd.f32 %v3326, %v3327
    %3329 = vadd.xlane.f32.xlu0 %v3328
    %v3330 = vpop.xlane.xlu0 %3329
    %v3331 = vrot.slane %v3330, 4
    %v3332 = vadd.f32 %v3330, %v3331
    %v3333 = vrot.slane %v3332, 2
    %v3334 = vadd.f32 %v3332, %v3333
    %v3335 = vrot.slane %v3334, 1
    %v3336 = vadd.f32 %v3334, %v3335
    %s3337 = vtos %v3336
    %v3338 = vstv %s3337
    %v3339 = vmax.f32 %v3338, 1.0
    %v3340 = vrcp.pop %v3339
    %v3341 = vmul.f32 %v3325, %v3340
    %vm3342 = vcmask 0
    %3343 = vst.msk [vmem:[#allocation25] sm:$0x1] %vm3342, %v3341
    // Predicated region
    $region150: #{task_loss.1} parent=1 // pred_check
      _
    $region151: #{task_loss.1} parent=1 // pred_check_branch
      %3345 = sbr.rel (0) target = $region153
    $region152: #{task_loss.1} parent=1 // pred_region
      %s3347 = ssub.s32 16, 16
      %3348 = vsyncadd [#allocation4], %s3347
      %s3350 = sshll.u32 [#allocation25], 4
      %s3351 = int_to_ptr.vmem [resolvable:$true] %s3350
      %3353 = dma.vmem_to_hbm [thread:$0]  %s3351, 16, %s23, [#allocation4]
    $region153: #{task_loss.1} parent=1 // pred_fallthru
      _
    // Predicated region
    $region154: #{task_loss.1} parent=1 // pred_check
      _
    $region155: #{task_loss.1} parent=1 // pred_check_branch
      %3355 = sbr.rel (0) target = $region157
    $region156: #{task_loss.1} parent=1 // pred_region
      %3356 = dma.done [#allocation4], 16
    $region157: #{task_loss.1} parent=1 // pred_fallthru
      _
    %3357 = vsyncpa [#allocation3], 1
    %3358 = vsyncpa [#allocation6], 1
    %3359 = vsyncpa [#allocation9], 1
    %3360 = vsyncpa [#allocation12], 1
    %3361 = vsyncpa [#allocation15], 1
    %3362 = vsyncpa [#allocation18], 1
    %3363 = vsyncpa [#allocation21], 1
    %3364 = vsyncpa [#allocation24], 1
    %3365 = vsyncpa [#allocation4], 1

</llo_original>
